<compile_context>
chip_gen: v7x
topology: tpu7x:2x2x1
jax: 0.10.0
libtpu: 0.0.40
codegen_flags: <defaults>
</compile_context>

<pallas_src>
import math
from functools import partial

import jax
import jax.numpy as jnp
import numpy as np
from jax import lax
from jax.experimental import pallas as pl
from jax.experimental.pallas import tpu as pltpu

NUM_HEADS = 4
EPS = 1e-5


# ----------------------------------------------------------------------------
# Pallas kernel: one (batch item, layer) step over a resident (2, N, D) block.
# ----------------------------------------------------------------------------
def _gnn_kernel(flags_ref,                          # scalar prefetch: (L,) int32
                x_ref,                              # (1, 2, N, D) initial descriptors
                wq_ref, bq_ref, wkv_ref, bkv_ref,   # per-layer weight blocks
                w1a_ref, wmf_ref, bf_ref, w2_ref, b2_ref,
                out_ref,                            # (1, 2, N, D) resident across layers
                *, num_heads):
    layer = pl.program_id(1)

    # First layer for this batch item: seed the resident state from the input.
    @pl.when(layer == 0)
    def _():
        out_ref[...] = x_ref[...]

    state = out_ref[0]                               # (2, N, D) current descriptors
    x0, x1 = state[0], state[1]
    N, D = x0.shape
    dh = D // num_heads
    scale = 1.0 / math.sqrt(dh)

    # self: src_i = x_i ; cross: src_i = x_{1-i}.  Arithmetic select on the
    # scalar-prefetched flag (c is exactly 0.0 or 1.0, so the blend is exact).
    c = flags_ref[layer].astype(jnp.float32)
    src0 = x0 * (1.0 - c) + x1 * c
    src1 = x1 * (1.0 - c) + x0 * c

    wq, bq = wq_ref[0], bq_ref[0]
    wkv, bkv = wkv_ref[0], bkv_ref[0]
    w1a, wmf, bf = w1a_ref[0], wmf_ref[0], bf_ref[0]
    w2, b2 = w2_ref[0], b2_ref[0]

    def propagate(x, src):
        # Fused projections: q = x @ Wq ; [k|v] = src @ [Wk|Wv].
        q = jnp.dot(x, wq, preferred_element_type=jnp.float32) + bq
        kv = jnp.dot(src, wkv, preferred_element_type=jnp.float32) + bkv
        k, v = kv[:, :D], kv[:, D:]

        # MLP layer-1 accumulator: x-path plus the fused (merge-conv + conv1)
        # bias.  Each head's attention output is folded straight into it via
        # its slice of the (Wm @ W1b) weight — no (N, D) message scratch, no
        # narrow masked stores, no separate heads @ Wmf matmul.
        h1 = jnp.dot(x, w1a, preferred_element_type=jnp.float32) + bf   # (N, 2D)
        for h in range(num_heads):
            sl = slice(h * dh, (h + 1) * dh)
            qh, kh, vh = q[:, sl], k[:, sl], v[:, sl]
            s = lax.dot_general(qh, kh, (((1,), (1,)), ((), ())),
                                preferred_element_type=jnp.float32) * scale  # (N, N)
            s = s - jnp.max(s, axis=-1, keepdims=True)
            e = jnp.exp(s)
            o = (jnp.dot(e, vh, preferred_element_type=jnp.float32)
                 / jnp.sum(e, axis=-1, keepdims=True))                       # (N, dh)
            h1 = h1 + jnp.dot(o, wmf[sl, :], preferred_element_type=jnp.float32)
        # TODO(synk): for production sizes (D=256, N~2048) switch to a
        # query-blocked online-softmax loop sized for v7x's 64 MiB VMEM, and
        # consider bf16 operands on the prob@v matmul (values bounded in [0,1]).

        # InstanceNorm1d over N (biased variance, no affine, eps=1e-5), then ReLU.
        mean = jnp.mean(h1, axis=0, keepdims=True)
        var = jnp.mean((h1 - mean) ** 2, axis=0, keepdims=True)
        h1n = jnp.maximum((h1 - mean) * (1.0 / jnp.sqrt(var + EPS)), 0.0)

        delta = jnp.dot(h1n, w2, preferred_element_type=jnp.float32) + b2
        return x + delta

    # Both deltas use the pre-update descriptors (matches the PyTorch loop).
    new0 = propagate(x0, src0)
    new1 = propagate(x1, src1)
    out_ref[0, 0] = new0
    out_ref[0, 1] = new1
    # TODO(synk): at toy D=32 (<128 lanes) these stores are masked; production
    # D=256 is lane-dense.  If the toy config ever matters, flatten (N, D) to
    # N*D on the pallas boundary for unmasked full-lane stores.


# ----------------------------------------------------------------------------
# Wrapper: one pallas_call for the whole GNN layer stack.
# ----------------------------------------------------------------------------
def attentional_gnn(desc0, desc1, kernel_params, layer_names, *, num_heads=NUM_HEADS):
    """desc0, desc1: (B, D, N) in PyTorch NCW layout. Returns the same layout."""
    B, D, N = desc0.shape
    L = len(layer_names)
    assert L == len(kernel_params) and L >= 1

    # (B, D, N) x2  ->  (B, 2, N, D): one stack/transpose for the whole stack
    # of layers; the kernel keeps this layout resident in VMEM across layers.
    x = jnp.stack([jnp.transpose(desc0, (0, 2, 1)),
                   jnp.transpose(desc1, (0, 2, 1))], axis=1)

    # Per-layer weights stacked along a leading layer axis, streamed per step.
    wnames = ("wq", "bq", "wkv", "bkv", "w1a", "wmf", "bf", "w2", "b2")
    weights = [jnp.stack([kp[k] for kp in kernel_params], axis=0) for k in wnames]
    flags = jnp.asarray([1 if n == "cross" else 0 for n in layer_names], jnp.int32)

    def wspec(arr):
        nd = arr.ndim
        return pl.BlockSpec((1,) + arr.shape[1:],
                            lambda b, l, flags_ref: (l,) + (0,) * (nd - 1))

    io_spec = pl.BlockSpec((1, 2, N, D), lambda b, l, flags_ref: (b, 0, 0, 0))

    # Advisory cost estimate for XLA scheduling around the custom call.
    dh = D // num_heads
    per_item_flops = (2 * N * D * D                       # q projection
                      + 2 * N * D * 2 * D                 # fused k|v projection
                      + num_heads * (4 * N * N * dh       # scores + prob@v
                                     + 2 * N * dh * 2 * D)  # o @ wmf slice
                      + 2 * N * D * 2 * D                 # x @ w1a
                      + 2 * N * 2 * D * D)                # h1 @ w2
    flops = 2 * B * L * per_item_flops
    transcendentals = 2 * B * L * (num_heads * N * N + 2 * D)
    bytes_accessed = 2 * 4 * int(x.size) + B * 4 * sum(int(w.size) for w in weights)

    out = pl.pallas_call(
        partial(_gnn_kernel, num_heads=num_heads),
        out_shape=jax.ShapeDtypeStruct((B, 2, N, D), jnp.float32),
        grid_spec=pltpu.PrefetchScalarGridSpec(
            num_scalar_prefetch=1,
            grid=(B, L),
            in_specs=[io_spec] + [wspec(w) for w in weights],
            out_specs=io_spec,
        ),
        compiler_params=pltpu.CompilerParams(
            dimension_semantics=("parallel", "arbitrary"),
            vmem_limit_bytes=32 * 1024 * 1024,
        ),
        # flattened inputs are (flags, x, *weights): donate x to the output.
        input_output_aliases={1: 0},
        cost_estimate=pl.CostEstimate(flops=int(flops),
                                      transcendentals=int(transcendentals),
                                      bytes_accessed=int(bytes_accessed)),
    )(flags, x, *weights)

    return (jnp.transpose(out[:, 0], (0, 2, 1)),
            jnp.transpose(out[:, 1], (0, 2, 1)))


# ----------------------------------------------------------------------------
# Parameter construction (deterministic, synthetic) + kernel-layout conversion
# ----------------------------------------------------------------------------
def init_layer_params(key, D):
    """PyTorch-shaped params for one AttentionalPropagation layer."""
    ks = jax.random.split(key, 12)
    s = 1.0 / math.sqrt(D)
    s2 = 1.0 / math.sqrt(2 * D)
    return {
        "Wq": jax.random.uniform(ks[0], (D, D), jnp.float32, -s, s),
        "bq": jax.random.uniform(ks[1], (D,), jnp.float32, -s, s),
        "Wk": jax.random.uniform(ks[2], (D, D), jnp.float32, -s, s),
        "bk": jax.random.uniform(ks[3], (D,), jnp.float32, -s, s),
        "Wv": jax.random.uniform(ks[4], (D, D), jnp.float32, -s, s),
        "bv": jax.random.uniform(ks[5], (D,), jnp.float32, -s, s),
        "Wm": jax.random.uniform(ks[6], (D, D), jnp.float32, -s, s),
        "bm": jax.random.uniform(ks[7], (D,), jnp.float32, -s, s),
        "W1": jax.random.uniform(ks[8], (2 * D, 2 * D), jnp.float32, -s2, s2),
        "b1": jax.random.uniform(ks[9], (2 * D,), jnp.float32, -s2, s2),
        "W2": jax.random.uniform(ks[10], (D, 2 * D), jnp.float32, -s2, s2),
        "b2": jnp.zeros((D,), jnp.float32),  # nn.init.constant_(mlp[-1].bias, 0.0)
    }


def to_kernel_params(p, D, num_heads=NUM_HEADS):
    """Host-side weight preprocessing:
      - transpose weights for x@W form,
      - permute q/k/v output channels so head channels are lane-contiguous
        (PyTorch splits channels as c = d*heads + h),
      - fuse K and V weights into a single (D, 2D) matrix,
      - fold the merge conv into the message half of the MLP's first layer
        (mathematically exact: the message only feeds the MLP)."""
    dh = D // num_heads
    perm = np.array([d * num_heads + h for h in range(num_heads) for d in range(dh)])

    wq = p["Wq"].T[:, perm]
    bq = p["bq"][perm].reshape(1, D)
    wkv = jnp.concatenate([p["Wk"].T[:, perm], p["Wv"].T[:, perm]], axis=1)  # (D, 2D)
    bkv = jnp.concatenate([p["bk"][perm], p["bv"][perm]]).reshape(1, 2 * D)

    w1t = p["W1"].T                      # (2D_in, 2D_out)
    w1a = w1t[:D, :]                     # acts on x
    w1b = w1t[D:, :]                     # acts on message
    wm_tp = p["Wm"].T[perm, :]           # (D, D), rows in head-major order
    wmf = wm_tp @ w1b                    # merge conv folded into MLP layer 1
    bf = p["bm"].reshape(1, D) @ w1b + p["b1"].reshape(1, 2 * D)

    return {"wq": wq, "bq": bq, "wkv": wkv, "bkv": bkv,
            "w1a": w1a, "wmf": wmf, "bf": bf,
            "w2": p["W2"].T, "b2": p["b2"].reshape(1, D)}


# ----------------------------------------------------------------------------
# Pure-JAX reference (mirrors PyTorch semantics exactly) for validation
# ----------------------------------------------------------------------------
_P = lax.Precision.HIGHEST


def _ref_conv1d(x, w, b):  # x: (B, C, N), w: (O, C), b: (O,)
    return jnp.einsum("oc,bcn->bon", w, x, precision=_P) + b[None, :, None]


def _ref_layer(x, src, p, heads=NUM_HEADS):
    B, D, N = x.shape
    dh = D // heads
    q = _ref_conv1d(x, p["Wq"], p["bq"]).reshape(B, dh, heads, N)
    k = _ref_conv1d(src, p["Wk"], p["bk"]).reshape(B, dh, heads, N)
    v = _ref_conv1d(src, p["Wv"], p["bv"]).reshape(B, dh, heads, N)
    scores = jnp.einsum("bdhn,bdhm->bhnm", q, k, precision=_P) / math.sqrt(dh)
    prob = jax.nn.softmax(scores, axis=-1)
    o = jnp.einsum("bhnm,bdhm->bdhn", prob, v, precision=_P).reshape(B, D, N)
    message = _ref_conv1d(o, p["Wm"], p["bm"])
    inp = jnp.concatenate([x, message], axis=1)
    h1 = _ref_conv1d(inp, p["W1"], p["b1"])
    mean = jnp.mean(h1, axis=2, keepdims=True)
    var = jnp.mean((h1 - mean) ** 2, axis=2, keepdims=True)
    h1 = jnp.maximum((h1 - mean) / jnp.sqrt(var + EPS), 0.0)
    delta = _ref_conv1d(h1, p["W2"], p["b2"])
    return x + delta


def _ref_gnn(desc0, desc1, torch_params, layer_names):
    for p, name in zip(torch_params, layer_names):
        if name == "cross":
            s0, s1 = desc1, desc0
        else:
            s0, s1 = desc0, desc1
        nd0, nd1 = _ref_layer(desc0, s0, p), _ref_layer(desc1, s1, p)
        desc0, desc1 = nd0, nd1
    return desc0, desc1


# ----------------------------------------------------------------------------
if __name__ == "__main__":
    B, D, N = 2, 32, 16                      # feature_dim=32, 4 heads, 16 keypoints
    layer_names = ["self", "cross"]

    key = jax.random.PRNGKey(0)
    k0, k1, kparams = jax.random.split(key, 3)
    desc0 = jax.random.normal(k0, (B, D, N), jnp.float32)
    desc1 = jax.random.normal(k1, (B, D, N), jnp.float32)

    layer_keys = jax.random.split(kparams, len(layer_names))
    torch_params = [init_layer_params(lk, D) for lk in layer_keys]
    kernel_params = [to_kernel_params(p, D) for p in torch_params]

    gnn = jax.jit(lambda a, b: attentional_gnn(a, b, kernel_params, layer_names))
    out0, out1 = gnn(desc0, desc1)
    out0, out1 = jax.block_until_ready(out0), jax.block_until_ready(out1)

    ref0, ref1 = _ref_gnn(desc0, desc1, torch_params, layer_names)
    np.testing.assert_allclose(np.asarray(out0), np.asarray(ref0), rtol=1e-4, atol=1e-4)
    np.testing.assert_allclose(np.asarray(out1), np.asarray(ref1), rtol=1e-4, atol=1e-4)

    print("KERNEL_OK")
</pallas_src>

<mosaic_0001>
module attributes {stable_mosaic.version = 11 : i64} {
  func.func @_gnn_kernel(%arg0: i32, %arg1: i32, %arg2: memref<2xi32, #tpu.memory_space<smem>>, %arg3: memref<1x2x16x32xf32, #tpu.memory_space<vmem>>, %arg4: memref<1x32x32xf32, #tpu.memory_space<vmem>>, %arg5: memref<1x1x32xf32, #tpu.memory_space<vmem>>, %arg6: memref<1x32x64xf32, #tpu.memory_space<vmem>>, %arg7: memref<1x1x64xf32, #tpu.memory_space<vmem>>, %arg8: memref<1x32x64xf32, #tpu.memory_space<vmem>>, %arg9: memref<1x32x64xf32, #tpu.memory_space<vmem>>, %arg10: memref<1x1x64xf32, #tpu.memory_space<vmem>>, %arg11: memref<1x64x32xf32, #tpu.memory_space<vmem>>, %arg12: memref<1x1x32xf32, #tpu.memory_space<vmem>>, %arg13: memref<1x2x16x32xf32, #tpu.memory_space<vmem>>) attributes {dimension_semantics = [#tpu.dimension_semantics<parallel>, #tpu.dimension_semantics<arbitrary>], iteration_bounds = array<i64: 2, 2>, scalar_prefetch = 1 : i64, scratch_operands = 0 : i64, tpu.core_type = #tpu.core_type<tc>, window_params = [{transform_indices = @transform_0, window_bounds = array<i64: 1, 2, 16, 32>}, {transform_indices = @transform_1, window_bounds = array<i64: 1, 32, 32>}, {transform_indices = @transform_2, window_bounds = array<i64: 1, 1, 32>}, {transform_indices = @transform_3, window_bounds = array<i64: 1, 32, 64>}, {transform_indices = @transform_4, window_bounds = array<i64: 1, 1, 64>}, {transform_indices = @transform_5, window_bounds = array<i64: 1, 32, 64>}, {transform_indices = @transform_6, window_bounds = array<i64: 1, 32, 64>}, {transform_indices = @transform_7, window_bounds = array<i64: 1, 1, 64>}, {transform_indices = @transform_8, window_bounds = array<i64: 1, 64, 32>}, {transform_indices = @transform_9, window_bounds = array<i64: 1, 1, 32>}, {transform_indices = @transform_10, window_bounds = array<i64: 1, 2, 16, 32>}]} {
    %c0_i32 = arith.constant 0 : i32
    %0 = arith.cmpi eq, %arg1, %c0_i32 : i32
    %1 = arith.extui %0 : i1 to i32
    %c0_i32_0 = arith.constant 0 : i32
    %2 = arith.cmpi ne, %1, %c0_i32_0 : i32
    scf.if %2 {
      %c0_109 = arith.constant 0 : index
      %c0_110 = arith.constant 0 : index
      %c0_111 = arith.constant 0 : index
      %c0_112 = arith.constant 0 : index
      %274 = vector.load %arg3[%c0_109, %c0_110, %c0_111, %c0_112] : memref<1x2x16x32xf32, #tpu.memory_space<vmem>>, vector<1x2x16x32xf32>
      %c0_113 = arith.constant 0 : index
      %c0_114 = arith.constant 0 : index
      %c0_115 = arith.constant 0 : index
      %c0_116 = arith.constant 0 : index
      %275 = vector.load %arg13[%c0_113, %c0_114, %c0_115, %c0_116] : memref<1x2x16x32xf32, #tpu.memory_space<vmem>>, vector<1x2x16x32xf32>
      tpu.vector_store %arg13[%c0_113, %c0_114, %c0_115, %c0_116], %274 {strides = array<i32>} : memref<1x2x16x32xf32, #tpu.memory_space<vmem>>, vector<1x2x16x32xf32>,
    } else {
    }
    %c0 = arith.constant 0 : index
    %c0_1 = arith.constant 0 : index
    %c0_2 = arith.constant 0 : index
    %c0_3 = arith.constant 0 : index
    %3 = vector.load %arg13[%c0, %c0_1, %c0_2, %c0_3] : memref<1x2x16x32xf32, #tpu.memory_space<vmem>>, vector<1x2x16x32xf32>
    %4 = vector.shape_cast %3 : vector<1x2x16x32xf32> to vector<2x16x32xf32>
    %5 = vector.extract_strided_slice %4 {offsets = [0, 0, 0], sizes = [1, 16, 32], strides = [1, 1, 1]} : vector<2x16x32xf32> to vector<1x16x32xf32>
    %6 = vector.shape_cast %5 : vector<1x16x32xf32> to vector<16x32xf32>
    %7 = vector.extract_strided_slice %4 {offsets = [1, 0, 0], sizes = [1, 16, 32], strides = [1, 1, 1]} : vector<2x16x32xf32> to vector<1x16x32xf32>
    %8 = vector.shape_cast %7 : vector<1x16x32xf32> to vector<16x32xf32>
    %9 = arith.index_cast %arg1 : i32 to index
    %10 = memref.load %arg2[%9] : memref<2xi32, #tpu.memory_space<smem>>
    %11 = arith.sitofp %10 : i32 to f32
    %cst = arith.constant 1.000000e+00 : f32
    %12 = arith.subf %cst, %11 : f32
    %13 = vector.broadcast %12 : f32 to vector<16x32xf32>
    %14 = arith.mulf %6, %13 : vector<16x32xf32>
    %15 = vector.broadcast %11 : f32 to vector<16x32xf32>
    %16 = arith.mulf %8, %15 : vector<16x32xf32>
    %17 = arith.addf %14, %16 : vector<16x32xf32>
    %cst_4 = arith.constant 1.000000e+00 : f32
    %18 = arith.subf %cst_4, %11 : f32
    %19 = vector.broadcast %18 : f32 to vector<16x32xf32>
    %20 = arith.mulf %8, %19 : vector<16x32xf32>
    %21 = vector.broadcast %11 : f32 to vector<16x32xf32>
    %22 = arith.mulf %6, %21 : vector<16x32xf32>
    %23 = arith.addf %20, %22 : vector<16x32xf32>
    %c0_5 = arith.constant 0 : index
    %c0_6 = arith.constant 0 : index
    %c0_7 = arith.constant 0 : index
    %24 = vector.load %arg4[%c0_5, %c0_6, %c0_7] : memref<1x32x32xf32, #tpu.memory_space<vmem>>, vector<1x32x32xf32>
    %25 = vector.shape_cast %24 : vector<1x32x32xf32> to vector<32x32xf32>
    %c0_8 = arith.constant 0 : index
    %c0_9 = arith.constant 0 : index
    %c0_10 = arith.constant 0 : index
    %26 = vector.load %arg5[%c0_8, %c0_9, %c0_10] : memref<1x1x32xf32, #tpu.memory_space<vmem>>, vector<1x1x32xf32>
    %27 = vector.shape_cast %26 : vector<1x1x32xf32> to vector<1x32xf32>
    %c0_11 = arith.constant 0 : index
    %c0_12 = arith.constant 0 : index
    %c0_13 = arith.constant 0 : index
    %28 = vector.load %arg6[%c0_11, %c0_12, %c0_13] : memref<1x32x64xf32, #tpu.memory_space<vmem>>, vector<1x32x64xf32>
    %29 = vector.shape_cast %28 : vector<1x32x64xf32> to vector<32x64xf32>
    %c0_14 = arith.constant 0 : index
    %c0_15 = arith.constant 0 : index
    %c0_16 = arith.constant 0 : index
    %30 = vector.load %arg7[%c0_14, %c0_15, %c0_16] : memref<1x1x64xf32, #tpu.memory_space<vmem>>, vector<1x1x64xf32>
    %31 = vector.shape_cast %30 : vector<1x1x64xf32> to vector<1x64xf32>
    %c0_17 = arith.constant 0 : index
    %c0_18 = arith.constant 0 : index
    %c0_19 = arith.constant 0 : index
    %32 = vector.load %arg8[%c0_17, %c0_18, %c0_19] : memref<1x32x64xf32, #tpu.memory_space<vmem>>, vector<1x32x64xf32>
    %33 = vector.shape_cast %32 : vector<1x32x64xf32> to vector<32x64xf32>
    %c0_20 = arith.constant 0 : index
    %c0_21 = arith.constant 0 : index
    %c0_22 = arith.constant 0 : index
    %34 = vector.load %arg9[%c0_20, %c0_21, %c0_22] : memref<1x32x64xf32, #tpu.memory_space<vmem>>, vector<1x32x64xf32>
    %35 = vector.shape_cast %34 : vector<1x32x64xf32> to vector<32x64xf32>
    %c0_23 = arith.constant 0 : index
    %c0_24 = arith.constant 0 : index
    %c0_25 = arith.constant 0 : index
    %36 = vector.load %arg10[%c0_23, %c0_24, %c0_25] : memref<1x1x64xf32, #tpu.memory_space<vmem>>, vector<1x1x64xf32>
    %37 = vector.shape_cast %36 : vector<1x1x64xf32> to vector<1x64xf32>
    %c0_26 = arith.constant 0 : index
    %c0_27 = arith.constant 0 : index
    %c0_28 = arith.constant 0 : index
    %38 = vector.load %arg11[%c0_26, %c0_27, %c0_28] : memref<1x64x32xf32, #tpu.memory_space<vmem>>, vector<1x64x32xf32>
    %39 = vector.shape_cast %38 : vector<1x64x32xf32> to vector<64x32xf32>
    %c0_29 = arith.constant 0 : index
    %c0_30 = arith.constant 0 : index
    %c0_31 = arith.constant 0 : index
    %40 = vector.load %arg12[%c0_29, %c0_30, %c0_31] : memref<1x1x32xf32, #tpu.memory_space<vmem>>, vector<1x1x32xf32>
    %41 = vector.shape_cast %40 : vector<1x1x32xf32> to vector<1x32xf32>
    %cst_32 = arith.constant dense<0.000000e+00> : vector<16x32xf32>
    %42 = tpu.matmul %6, %25, %cst_32 {dimension_numbers = #tpu.dot_dimension_numbers<[1], [0], [0], [1], [0, 0, 1, 1], [], []>} : vector<16x32xf32>, vector<32x32xf32>, vector<16x32xf32> -> vector<16x32xf32>
    %43 = vector.broadcast %27 : vector<1x32xf32> to vector<16x32xf32>
    %44 = arith.addf %42, %43 : vector<16x32xf32>
    %cst_33 = arith.constant dense<0.000000e+00> : vector<16x64xf32>
    %45 = tpu.matmul %17, %29, %cst_33 {dimension_numbers = #tpu.dot_dimension_numbers<[1], [0], [0], [1], [0, 0, 1, 1], [], []>} : vector<16x32xf32>, vector<32x64xf32>, vector<16x64xf32> -> vector<16x64xf32>
    %46 = vector.broadcast %31 : vector<1x64xf32> to vector<16x64xf32>
    %47 = arith.addf %45, %46 : vector<16x64xf32>
    %48 = vector.extract_strided_slice %47 {offsets = [0, 0], sizes = [16, 32], strides = [1, 1]} : vector<16x64xf32> to vector<16x32xf32>
    %49 = vector.extract_strided_slice %47 {offsets = [0, 32], sizes = [16, 32], strides = [1, 1]} : vector<16x64xf32> to vector<16x32xf32>
    %cst_34 = arith.constant dense<0.000000e+00> : vector<16x64xf32>
    %50 = tpu.matmul %6, %33, %cst_34 {dimension_numbers = #tpu.dot_dimension_numbers<[1], [0], [0], [1], [0, 0, 1, 1], [], []>} : vector<16x32xf32>, vector<32x64xf32>, vector<16x64xf32> -> vector<16x64xf32>
    %51 = vector.broadcast %37 : vector<1x64xf32> to vector<16x64xf32>
    %52 = arith.addf %50, %51 : vector<16x64xf32>
    %53 = vector.extract_strided_slice %44 {offsets = [0, 0], sizes = [16, 8], strides = [1, 1]} : vector<16x32xf32> to vector<16x8xf32>
    %54 = vector.extract_strided_slice %48 {offsets = [0, 0], sizes = [16, 8], strides = [1, 1]} : vector<16x32xf32> to vector<16x8xf32>
    %55 = vector.extract_strided_slice %49 {offsets = [0, 0], sizes = [16, 8], strides = [1, 1]} : vector<16x32xf32> to vector<16x8xf32>
    %cst_35 = arith.constant dense<0.000000e+00> : vector<16x16xf32>
    %56 = tpu.matmul %53, %54, %cst_35 {dimension_numbers = #tpu.dot_dimension_numbers<[1], [1], [0], [0], [0, 0, 1, 0], [], []>} : vector<16x8xf32>, vector<16x8xf32>, vector<16x16xf32> -> vector<16x16xf32>
    %cst_36 = arith.constant 0.353553385 : f32
    %57 = vector.broadcast %cst_36 : f32 to vector<16x16xf32>
    %58 = arith.mulf %56, %57 : vector<16x16xf32>
    %cst_37 = arith.constant dense<0xFF800000> : vector<16xf32>
    %59 = vector.multi_reduction <maximumf>, %58, %cst_37 [1] : vector<16x16xf32> to vector<16xf32>
    %60 = vector.shape_cast %59 : vector<16xf32> to vector<16x1xf32>
    %61 = vector.broadcast %60 : vector<16x1xf32> to vector<16x16xf32>
    %62 = arith.subf %58, %61 : vector<16x16xf32>
    %63 = math.exp %62 : vector<16x16xf32>
    %cst_38 = arith.constant dense<0.000000e+00> : vector<16x8xf32>
    %64 = tpu.matmul %63, %55, %cst_38 {dimension_numbers = #tpu.dot_dimension_numbers<[1], [0], [0], [1], [0, 0, 1, 1], [], []>} : vector<16x16xf32>, vector<16x8xf32>, vector<16x8xf32> -> vector<16x8xf32>
    %cst_39 = arith.constant dense<0.000000e+00> : vector<16xf32>
    %65 = vector.multi_reduction <add>, %63, %cst_39 [1] : vector<16x16xf32> to vector<16xf32>
    %66 = vector.shape_cast %65 : vector<16xf32> to vector<16x1xf32>
    %67 = vector.broadcast %66 : vector<16x1xf32> to vector<16x8xf32>
    %68 = arith.divf %64, %67 : vector<16x8xf32>
    %69 = vector.extract_strided_slice %35 {offsets = [0, 0], sizes = [8, 64], strides = [1, 1]} : vector<32x64xf32> to vector<8x64xf32>
    %cst_40 = arith.constant dense<0.000000e+00> : vector<16x64xf32>
    %70 = tpu.matmul %68, %69, %cst_40 {dimension_numbers = #tpu.dot_dimension_numbers<[1], [0], [0], [1], [0, 0, 1, 1], [], []>} : vector<16x8xf32>, vector<8x64xf32>, vector<16x64xf32> -> vector<16x64xf32>
    %71 = arith.addf %52, %70 : vector<16x64xf32>
    %72 = vector.extract_strided_slice %44 {offsets = [0, 8], sizes = [16, 8], strides = [1, 1]} : vector<16x32xf32> to vector<16x8xf32>
    %73 = vector.extract_strided_slice %48 {offsets = [0, 8], sizes = [16, 8], strides = [1, 1]} : vector<16x32xf32> to vector<16x8xf32>
    %74 = vector.extract_strided_slice %49 {offsets = [0, 8], sizes = [16, 8], strides = [1, 1]} : vector<16x32xf32> to vector<16x8xf32>
    %cst_41 = arith.constant dense<0.000000e+00> : vector<16x16xf32>
    %75 = tpu.matmul %72, %73, %cst_41 {dimension_numbers = #tpu.dot_dimension_numbers<[1], [1], [0], [0], [0, 0, 1, 0], [], []>} : vector<16x8xf32>, vector<16x8xf32>, vector<16x16xf32> -> vector<16x16xf32>
    %cst_42 = arith.constant 0.353553385 : f32
    %76 = vector.broadcast %cst_42 : f32 to vector<16x16xf32>
    %77 = arith.mulf %75, %76 : vector<16x16xf32>
    %cst_43 = arith.constant dense<0xFF800000> : vector<16xf32>
    %78 = vector.multi_reduction <maximumf>, %77, %cst_43 [1] : vector<16x16xf32> to vector<16xf32>
    %79 = vector.shape_cast %78 : vector<16xf32> to vector<16x1xf32>
    %80 = vector.broadcast %79 : vector<16x1xf32> to vector<16x16xf32>
    %81 = arith.subf %77, %80 : vector<16x16xf32>
    %82 = math.exp %81 : vector<16x16xf32>
    %cst_44 = arith.constant dense<0.000000e+00> : vector<16x8xf32>
    %83 = tpu.matmul %82, %74, %cst_44 {dimension_numbers = #tpu.dot_dimension_numbers<[1], [0], [0], [1], [0, 0, 1, 1], [], []>} : vector<16x16xf32>, vector<16x8xf32>, vector<16x8xf32> -> vector<16x8xf32>
    %cst_45 = arith.constant dense<0.000000e+00> : vector<16xf32>
    %84 = vector.multi_reduction <add>, %82, %cst_45 [1] : vector<16x16xf32> to vector<16xf32>
    %85 = vector.shape_cast %84 : vector<16xf32> to vector<16x1xf32>
    %86 = vector.broadcast %85 : vector<16x1xf32> to vector<16x8xf32>
    %87 = arith.divf %83, %86 : vector<16x8xf32>
    %88 = vector.extract_strided_slice %35 {offsets = [8, 0], sizes = [8, 64], strides = [1, 1]} : vector<32x64xf32> to vector<8x64xf32>
    %cst_46 = arith.constant dense<0.000000e+00> : vector<16x64xf32>
    %89 = tpu.matmul %87, %88, %cst_46 {dimension_numbers = #tpu.dot_dimension_numbers<[1], [0], [0], [1], [0, 0, 1, 1], [], []>} : vector<16x8xf32>, vector<8x64xf32>, vector<16x64xf32> -> vector<16x64xf32>
    %90 = arith.addf %71, %89 : vector<16x64xf32>
    %91 = vector.extract_strided_slice %44 {offsets = [0, 16], sizes = [16, 8], strides = [1, 1]} : vector<16x32xf32> to vector<16x8xf32>
    %92 = vector.extract_strided_slice %48 {offsets = [0, 16], sizes = [16, 8], strides = [1, 1]} : vector<16x32xf32> to vector<16x8xf32>
    %93 = vector.extract_strided_slice %49 {offsets = [0, 16], sizes = [16, 8], strides = [1, 1]} : vector<16x32xf32> to vector<16x8xf32>
    %cst_47 = arith.constant dense<0.000000e+00> : vector<16x16xf32>
    %94 = tpu.matmul %91, %92, %cst_47 {dimension_numbers = #tpu.dot_dimension_numbers<[1], [1], [0], [0], [0, 0, 1, 0], [], []>} : vector<16x8xf32>, vector<16x8xf32>, vector<16x16xf32> -> vector<16x16xf32>
    %cst_48 = arith.constant 0.353553385 : f32
    %95 = vector.broadcast %cst_48 : f32 to vector<16x16xf32>
    %96 = arith.mulf %94, %95 : vector<16x16xf32>
    %cst_49 = arith.constant dense<0xFF800000> : vector<16xf32>
    %97 = vector.multi_reduction <maximumf>, %96, %cst_49 [1] : vector<16x16xf32> to vector<16xf32>
    %98 = vector.shape_cast %97 : vector<16xf32> to vector<16x1xf32>
    %99 = vector.broadcast %98 : vector<16x1xf32> to vector<16x16xf32>
    %100 = arith.subf %96, %99 : vector<16x16xf32>
    %101 = math.exp %100 : vector<16x16xf32>
    %cst_50 = arith.constant dense<0.000000e+00> : vector<16x8xf32>
    %102 = tpu.matmul %101, %93, %cst_50 {dimension_numbers = #tpu.dot_dimension_numbers<[1], [0], [0], [1], [0, 0, 1, 1], [], []>} : vector<16x16xf32>, vector<16x8xf32>, vector<16x8xf32> -> vector<16x8xf32>
    %cst_51 = arith.constant dense<0.000000e+00> : vector<16xf32>
    %103 = vector.multi_reduction <add>, %101, %cst_51 [1] : vector<16x16xf32> to vector<16xf32>
    %104 = vector.shape_cast %103 : vector<16xf32> to vector<16x1xf32>
    %105 = vector.broadcast %104 : vector<16x1xf32> to vector<16x8xf32>
    %106 = arith.divf %102, %105 : vector<16x8xf32>
    %107 = vector.extract_strided_slice %35 {offsets = [16, 0], sizes = [8, 64], strides = [1, 1]} : vector<32x64xf32> to vector<8x64xf32>
    %cst_52 = arith.constant dense<0.000000e+00> : vector<16x64xf32>
    %108 = tpu.matmul %106, %107, %cst_52 {dimension_numbers = #tpu.dot_dimension_numbers<[1], [0], [0], [1], [0, 0, 1, 1], [], []>} : vector<16x8xf32>, vector<8x64xf32>, vector<16x64xf32> -> vector<16x64xf32>
    %109 = arith.addf %90, %108 : vector<16x64xf32>
    %110 = vector.extract_strided_slice %44 {offsets = [0, 24], sizes = [16, 8], strides = [1, 1]} : vector<16x32xf32> to vector<16x8xf32>
    %111 = vector.extract_strided_slice %48 {offsets = [0, 24], sizes = [16, 8], strides = [1, 1]} : vector<16x32xf32> to vector<16x8xf32>
    %112 = vector.extract_strided_slice %49 {offsets = [0, 24], sizes = [16, 8], strides = [1, 1]} : vector<16x32xf32> to vector<16x8xf32>
    %cst_53 = arith.constant dense<0.000000e+00> : vector<16x16xf32>
    %113 = tpu.matmul %110, %111, %cst_53 {dimension_numbers = #tpu.dot_dimension_numbers<[1], [1], [0], [0], [0, 0, 1, 0], [], []>} : vector<16x8xf32>, vector<16x8xf32>, vector<16x16xf32> -> vector<16x16xf32>
    %cst_54 = arith.constant 0.353553385 : f32
    %114 = vector.broadcast %cst_54 : f32 to vector<16x16xf32>
    %115 = arith.mulf %113, %114 : vector<16x16xf32>
    %cst_55 = arith.constant dense<0xFF800000> : vector<16xf32>
    %116 = vector.multi_reduction <maximumf>, %115, %cst_55 [1] : vector<16x16xf32> to vector<16xf32>
    %117 = vector.shape_cast %116 : vector<16xf32> to vector<16x1xf32>
    %118 = vector.broadcast %117 : vector<16x1xf32> to vector<16x16xf32>
    %119 = arith.subf %115, %118 : vector<16x16xf32>
    %120 = math.exp %119 : vector<16x16xf32>
    %cst_56 = arith.constant dense<0.000000e+00> : vector<16x8xf32>
    %121 = tpu.matmul %120, %112, %cst_56 {dimension_numbers = #tpu.dot_dimension_numbers<[1], [0], [0], [1], [0, 0, 1, 1], [], []>} : vector<16x16xf32>, vector<16x8xf32>, vector<16x8xf32> -> vector<16x8xf32>
    %cst_57 = arith.constant dense<0.000000e+00> : vector<16xf32>
    %122 = vector.multi_reduction <add>, %120, %cst_57 [1] : vector<16x16xf32> to vector<16xf32>
    %123 = vector.shape_cast %122 : vector<16xf32> to vector<16x1xf32>
    %124 = vector.broadcast %123 : vector<16x1xf32> to vector<16x8xf32>
    %125 = arith.divf %121, %124 : vector<16x8xf32>
    %126 = vector.extract_strided_slice %35 {offsets = [24, 0], sizes = [8, 64], strides = [1, 1]} : vector<32x64xf32> to vector<8x64xf32>
    %cst_58 = arith.constant dense<0.000000e+00> : vector<16x64xf32>
    %127 = tpu.matmul %125, %126, %cst_58 {dimension_numbers = #tpu.dot_dimension_numbers<[1], [0], [0], [1], [0, 0, 1, 1], [], []>} : vector<16x8xf32>, vector<8x64xf32>, vector<16x64xf32> -> vector<16x64xf32>
    %128 = arith.addf %109, %127 : vector<16x64xf32>
    %cst_59 = arith.constant dense<0.000000e+00> : vector<64xf32>
    %129 = vector.multi_reduction <add>, %128, %cst_59 [0] : vector<16x64xf32> to vector<64xf32>
    %130 = vector.shape_cast %129 : vector<64xf32> to vector<1x64xf32>
    %cst_60 = arith.constant 1.600000e+01 : f32
    %131 = vector.broadcast %cst_60 : f32 to vector<1x64xf32>
    %132 = arith.divf %130, %131 : vector<1x64xf32>
    %133 = vector.broadcast %132 : vector<1x64xf32> to vector<16x64xf32>
    %134 = arith.subf %128, %133 : vector<16x64xf32>
    %135 = arith.mulf %134, %134 : vector<16x64xf32>
    %cst_61 = arith.constant dense<0.000000e+00> : vector<64xf32>
    %136 = vector.multi_reduction <add>, %135, %cst_61 [0] : vector<16x64xf32> to vector<64xf32>
    %137 = vector.shape_cast %136 : vector<64xf32> to vector<1x64xf32>
    %cst_62 = arith.constant 1.600000e+01 : f32
    %138 = vector.broadcast %cst_62 : f32 to vector<1x64xf32>
    %139 = arith.divf %137, %138 : vector<1x64xf32>
    %140 = vector.broadcast %132 : vector<1x64xf32> to vector<16x64xf32>
    %141 = arith.subf %128, %140 : vector<16x64xf32>
    %cst_63 = arith.constant 9.99999974E-6 : f32
    %142 = vector.broadcast %cst_63 : f32 to vector<1x64xf32>
    %143 = arith.addf %139, %142 : vector<1x64xf32>
    %144 = math.sqrt %143 : vector<1x64xf32>
    %cst_64 = arith.constant 1.000000e+00 : f32
    %145 = vector.broadcast %cst_64 : f32 to vector<1x64xf32>
    %146 = arith.divf %145, %144 : vector<1x64xf32>
    %147 = vector.broadcast %146 : vector<1x64xf32> to vector<16x64xf32>
    %148 = arith.mulf %141, %147 : vector<16x64xf32>
    %cst_65 = arith.constant 0.000000e+00 : f32
    %149 = vector.broadcast %cst_65 : f32 to vector<16x64xf32>
    %150 = arith.maximumf %148, %149 : vector<16x64xf32>
    %cst_66 = arith.constant dense<0.000000e+00> : vector<16x32xf32>
    %151 = tpu.matmul %150, %39, %cst_66 {dimension_numbers = #tpu.dot_dimension_numbers<[1], [0], [0], [1], [0, 0, 1, 1], [], []>} : vector<16x64xf32>, vector<64x32xf32>, vector<16x32xf32> -> vector<16x32xf32>
    %152 = vector.broadcast %41 : vector<1x32xf32> to vector<16x32xf32>
    %153 = arith.addf %151, %152 : vector<16x32xf32>
    %154 = arith.addf %6, %153 : vector<16x32xf32>
    %cst_67 = arith.constant dense<0.000000e+00> : vector<16x32xf32>
    %155 = tpu.matmul %8, %25, %cst_67 {dimension_numbers = #tpu.dot_dimension_numbers<[1], [0], [0], [1], [0, 0, 1, 1], [], []>} : vector<16x32xf32>, vector<32x32xf32>, vector<16x32xf32> -> vector<16x32xf32>
    %156 = vector.broadcast %27 : vector<1x32xf32> to vector<16x32xf32>
    %157 = arith.addf %155, %156 : vector<16x32xf32>
    %cst_68 = arith.constant dense<0.000000e+00> : vector<16x64xf32>
    %158 = tpu.matmul %23, %29, %cst_68 {dimension_numbers = #tpu.dot_dimension_numbers<[1], [0], [0], [1], [0, 0, 1, 1], [], []>} : vector<16x32xf32>, vector<32x64xf32>, vector<16x64xf32> -> vector<16x64xf32>
    %159 = vector.broadcast %31 : vector<1x64xf32> to vector<16x64xf32>
    %160 = arith.addf %158, %159 : vector<16x64xf32>
    %161 = vector.extract_strided_slice %160 {offsets = [0, 0], sizes = [16, 32], strides = [1, 1]} : vector<16x64xf32> to vector<16x32xf32>
    %162 = vector.extract_strided_slice %160 {offsets = [0, 32], sizes = [16, 32], strides = [1, 1]} : vector<16x64xf32> to vector<16x32xf32>
    %cst_69 = arith.constant dense<0.000000e+00> : vector<16x64xf32>
    %163 = tpu.matmul %8, %33, %cst_69 {dimension_numbers = #tpu.dot_dimension_numbers<[1], [0], [0], [1], [0, 0, 1, 1], [], []>} : vector<16x32xf32>, vector<32x64xf32>, vector<16x64xf32> -> vector<16x64xf32>
    %164 = vector.broadcast %37 : vector<1x64xf32> to vector<16x64xf32>
    %165 = arith.addf %163, %164 : vector<16x64xf32>
    %166 = vector.extract_strided_slice %157 {offsets = [0, 0], sizes = [16, 8], strides = [1, 1]} : vector<16x32xf32> to vector<16x8xf32>
    %167 = vector.extract_strided_slice %161 {offsets = [0, 0], sizes = [16, 8], strides = [1, 1]} : vector<16x32xf32> to vector<16x8xf32>
    %168 = vector.extract_strided_slice %162 {offsets = [0, 0], sizes = [16, 8], strides = [1, 1]} : vector<16x32xf32> to vector<16x8xf32>
    %cst_70 = arith.constant dense<0.000000e+00> : vector<16x16xf32>
    %169 = tpu.matmul %166, %167, %cst_70 {dimension_numbers = #tpu.dot_dimension_numbers<[1], [1], [0], [0], [0, 0, 1, 0], [], []>} : vector<16x8xf32>, vector<16x8xf32>, vector<16x16xf32> -> vector<16x16xf32>
    %cst_71 = arith.constant 0.353553385 : f32
    %170 = vector.broadcast %cst_71 : f32 to vector<16x16xf32>
    %171 = arith.mulf %169, %170 : vector<16x16xf32>
    %cst_72 = arith.constant dense<0xFF800000> : vector<16xf32>
    %172 = vector.multi_reduction <maximumf>, %171, %cst_72 [1] : vector<16x16xf32> to vector<16xf32>
    %173 = vector.shape_cast %172 : vector<16xf32> to vector<16x1xf32>
    %174 = vector.broadcast %173 : vector<16x1xf32> to vector<16x16xf32>
    %175 = arith.subf %171, %174 : vector<16x16xf32>
    %176 = math.exp %175 : vector<16x16xf32>
    %cst_73 = arith.constant dense<0.000000e+00> : vector<16x8xf32>
    %177 = tpu.matmul %176, %168, %cst_73 {dimension_numbers = #tpu.dot_dimension_numbers<[1], [0], [0], [1], [0, 0, 1, 1], [], []>} : vector<16x16xf32>, vector<16x8xf32>, vector<16x8xf32> -> vector<16x8xf32>
    %cst_74 = arith.constant dense<0.000000e+00> : vector<16xf32>
    %178 = vector.multi_reduction <add>, %176, %cst_74 [1] : vector<16x16xf32> to vector<16xf32>
    %179 = vector.shape_cast %178 : vector<16xf32> to vector<16x1xf32>
    %180 = vector.broadcast %179 : vector<16x1xf32> to vector<16x8xf32>
    %181 = arith.divf %177, %180 : vector<16x8xf32>
    %182 = vector.extract_strided_slice %35 {offsets = [0, 0], sizes = [8, 64], strides = [1, 1]} : vector<32x64xf32> to vector<8x64xf32>
    %cst_75 = arith.constant dense<0.000000e+00> : vector<16x64xf32>
    %183 = tpu.matmul %181, %182, %cst_75 {dimension_numbers = #tpu.dot_dimension_numbers<[1], [0], [0], [1], [0, 0, 1, 1], [], []>} : vector<16x8xf32>, vector<8x64xf32>, vector<16x64xf32> -> vector<16x64xf32>
    %184 = arith.addf %165, %183 : vector<16x64xf32>
    %185 = vector.extract_strided_slice %157 {offsets = [0, 8], sizes = [16, 8], strides = [1, 1]} : vector<16x32xf32> to vector<16x8xf32>
    %186 = vector.extract_strided_slice %161 {offsets = [0, 8], sizes = [16, 8], strides = [1, 1]} : vector<16x32xf32> to vector<16x8xf32>
    %187 = vector.extract_strided_slice %162 {offsets = [0, 8], sizes = [16, 8], strides = [1, 1]} : vector<16x32xf32> to vector<16x8xf32>
    %cst_76 = arith.constant dense<0.000000e+00> : vector<16x16xf32>
    %188 = tpu.matmul %185, %186, %cst_76 {dimension_numbers = #tpu.dot_dimension_numbers<[1], [1], [0], [0], [0, 0, 1, 0], [], []>} : vector<16x8xf32>, vector<16x8xf32>, vector<16x16xf32> -> vector<16x16xf32>
    %cst_77 = arith.constant 0.353553385 : f32
    %189 = vector.broadcast %cst_77 : f32 to vector<16x16xf32>
    %190 = arith.mulf %188, %189 : vector<16x16xf32>
    %cst_78 = arith.constant dense<0xFF800000> : vector<16xf32>
    %191 = vector.multi_reduction <maximumf>, %190, %cst_78 [1] : vector<16x16xf32> to vector<16xf32>
    %192 = vector.shape_cast %191 : vector<16xf32> to vector<16x1xf32>
    %193 = vector.broadcast %192 : vector<16x1xf32> to vector<16x16xf32>
    %194 = arith.subf %190, %193 : vector<16x16xf32>
    %195 = math.exp %194 : vector<16x16xf32>
    %cst_79 = arith.constant dense<0.000000e+00> : vector<16x8xf32>
    %196 = tpu.matmul %195, %187, %cst_79 {dimension_numbers = #tpu.dot_dimension_numbers<[1], [0], [0], [1], [0, 0, 1, 1], [], []>} : vector<16x16xf32>, vector<16x8xf32>, vector<16x8xf32> -> vector<16x8xf32>
    %cst_80 = arith.constant dense<0.000000e+00> : vector<16xf32>
    %197 = vector.multi_reduction <add>, %195, %cst_80 [1] : vector<16x16xf32> to vector<16xf32>
    %198 = vector.shape_cast %197 : vector<16xf32> to vector<16x1xf32>
    %199 = vector.broadcast %198 : vector<16x1xf32> to vector<16x8xf32>
    %200 = arith.divf %196, %199 : vector<16x8xf32>
    %201 = vector.extract_strided_slice %35 {offsets = [8, 0], sizes = [8, 64], strides = [1, 1]} : vector<32x64xf32> to vector<8x64xf32>
    %cst_81 = arith.constant dense<0.000000e+00> : vector<16x64xf32>
    %202 = tpu.matmul %200, %201, %cst_81 {dimension_numbers = #tpu.dot_dimension_numbers<[1], [0], [0], [1], [0, 0, 1, 1], [], []>} : vector<16x8xf32>, vector<8x64xf32>, vector<16x64xf32> -> vector<16x64xf32>
    %203 = arith.addf %184, %202 : vector<16x64xf32>
    %204 = vector.extract_strided_slice %157 {offsets = [0, 16], sizes = [16, 8], strides = [1, 1]} : vector<16x32xf32> to vector<16x8xf32>
    %205 = vector.extract_strided_slice %161 {offsets = [0, 16], sizes = [16, 8], strides = [1, 1]} : vector<16x32xf32> to vector<16x8xf32>
    %206 = vector.extract_strided_slice %162 {offsets = [0, 16], sizes = [16, 8], strides = [1, 1]} : vector<16x32xf32> to vector<16x8xf32>
    %cst_82 = arith.constant dense<0.000000e+00> : vector<16x16xf32>
    %207 = tpu.matmul %204, %205, %cst_82 {dimension_numbers = #tpu.dot_dimension_numbers<[1], [1], [0], [0], [0, 0, 1, 0], [], []>} : vector<16x8xf32>, vector<16x8xf32>, vector<16x16xf32> -> vector<16x16xf32>
    %cst_83 = arith.constant 0.353553385 : f32
    %208 = vector.broadcast %cst_83 : f32 to vector<16x16xf32>
    %209 = arith.mulf %207, %208 : vector<16x16xf32>
    %cst_84 = arith.constant dense<0xFF800000> : vector<16xf32>
    %210 = vector.multi_reduction <maximumf>, %209, %cst_84 [1] : vector<16x16xf32> to vector<16xf32>
    %211 = vector.shape_cast %210 : vector<16xf32> to vector<16x1xf32>
    %212 = vector.broadcast %211 : vector<16x1xf32> to vector<16x16xf32>
    %213 = arith.subf %209, %212 : vector<16x16xf32>
    %214 = math.exp %213 : vector<16x16xf32>
    %cst_85 = arith.constant dense<0.000000e+00> : vector<16x8xf32>
    %215 = tpu.matmul %214, %206, %cst_85 {dimension_numbers = #tpu.dot_dimension_numbers<[1], [0], [0], [1], [0, 0, 1, 1], [], []>} : vector<16x16xf32>, vector<16x8xf32>, vector<16x8xf32> -> vector<16x8xf32>
    %cst_86 = arith.constant dense<0.000000e+00> : vector<16xf32>
    %216 = vector.multi_reduction <add>, %214, %cst_86 [1] : vector<16x16xf32> to vector<16xf32>
    %217 = vector.shape_cast %216 : vector<16xf32> to vector<16x1xf32>
    %218 = vector.broadcast %217 : vector<16x1xf32> to vector<16x8xf32>
    %219 = arith.divf %215, %218 : vector<16x8xf32>
    %220 = vector.extract_strided_slice %35 {offsets = [16, 0], sizes = [8, 64], strides = [1, 1]} : vector<32x64xf32> to vector<8x64xf32>
    %cst_87 = arith.constant dense<0.000000e+00> : vector<16x64xf32>
    %221 = tpu.matmul %219, %220, %cst_87 {dimension_numbers = #tpu.dot_dimension_numbers<[1], [0], [0], [1], [0, 0, 1, 1], [], []>} : vector<16x8xf32>, vector<8x64xf32>, vector<16x64xf32> -> vector<16x64xf32>
    %222 = arith.addf %203, %221 : vector<16x64xf32>
    %223 = vector.extract_strided_slice %157 {offsets = [0, 24], sizes = [16, 8], strides = [1, 1]} : vector<16x32xf32> to vector<16x8xf32>
    %224 = vector.extract_strided_slice %161 {offsets = [0, 24], sizes = [16, 8], strides = [1, 1]} : vector<16x32xf32> to vector<16x8xf32>
    %225 = vector.extract_strided_slice %162 {offsets = [0, 24], sizes = [16, 8], strides = [1, 1]} : vector<16x32xf32> to vector<16x8xf32>
    %cst_88 = arith.constant dense<0.000000e+00> : vector<16x16xf32>
    %226 = tpu.matmul %223, %224, %cst_88 {dimension_numbers = #tpu.dot_dimension_numbers<[1], [1], [0], [0], [0, 0, 1, 0], [], []>} : vector<16x8xf32>, vector<16x8xf32>, vector<16x16xf32> -> vector<16x16xf32>
    %cst_89 = arith.constant 0.353553385 : f32
    %227 = vector.broadcast %cst_89 : f32 to vector<16x16xf32>
    %228 = arith.mulf %226, %227 : vector<16x16xf32>
    %cst_90 = arith.constant dense<0xFF800000> : vector<16xf32>
    %229 = vector.multi_reduction <maximumf>, %228, %cst_90 [1] : vector<16x16xf32> to vector<16xf32>
    %230 = vector.shape_cast %229 : vector<16xf32> to vector<16x1xf32>
    %231 = vector.broadcast %230 : vector<16x1xf32> to vector<16x16xf32>
    %232 = arith.subf %228, %231 : vector<16x16xf32>
    %233 = math.exp %232 : vector<16x16xf32>
    %cst_91 = arith.constant dense<0.000000e+00> : vector<16x8xf32>
    %234 = tpu.matmul %233, %225, %cst_91 {dimension_numbers = #tpu.dot_dimension_numbers<[1], [0], [0], [1], [0, 0, 1, 1], [], []>} : vector<16x16xf32>, vector<16x8xf32>, vector<16x8xf32> -> vector<16x8xf32>
    %cst_92 = arith.constant dense<0.000000e+00> : vector<16xf32>
    %235 = vector.multi_reduction <add>, %233, %cst_92 [1] : vector<16x16xf32> to vector<16xf32>
    %236 = vector.shape_cast %235 : vector<16xf32> to vector<16x1xf32>
    %237 = vector.broadcast %236 : vector<16x1xf32> to vector<16x8xf32>
    %238 = arith.divf %234, %237 : vector<16x8xf32>
    %239 = vector.extract_strided_slice %35 {offsets = [24, 0], sizes = [8, 64], strides = [1, 1]} : vector<32x64xf32> to vector<8x64xf32>
    %cst_93 = arith.constant dense<0.000000e+00> : vector<16x64xf32>
    %240 = tpu.matmul %238, %239, %cst_93 {dimension_numbers = #tpu.dot_dimension_numbers<[1], [0], [0], [1], [0, 0, 1, 1], [], []>} : vector<16x8xf32>, vector<8x64xf32>, vector<16x64xf32> -> vector<16x64xf32>
    %241 = arith.addf %222, %240 : vector<16x64xf32>
    %cst_94 = arith.constant dense<0.000000e+00> : vector<64xf32>
    %242 = vector.multi_reduction <add>, %241, %cst_94 [0] : vector<16x64xf32> to vector<64xf32>
    %243 = vector.shape_cast %242 : vector<64xf32> to vector<1x64xf32>
    %cst_95 = arith.constant 1.600000e+01 : f32
    %244 = vector.broadcast %cst_95 : f32 to vector<1x64xf32>
    %245 = arith.divf %243, %244 : vector<1x64xf32>
    %246 = vector.broadcast %245 : vector<1x64xf32> to vector<16x64xf32>
    %247 = arith.subf %241, %246 : vector<16x64xf32>
    %248 = arith.mulf %247, %247 : vector<16x64xf32>
    %cst_96 = arith.constant dense<0.000000e+00> : vector<64xf32>
    %249 = vector.multi_reduction <add>, %248, %cst_96 [0] : vector<16x64xf32> to vector<64xf32>
    %250 = vector.shape_cast %249 : vector<64xf32> to vector<1x64xf32>
    %cst_97 = arith.constant 1.600000e+01 : f32
    %251 = vector.broadcast %cst_97 : f32 to vector<1x64xf32>
    %252 = arith.divf %250, %251 : vector<1x64xf32>
    %253 = vector.broadcast %245 : vector<1x64xf32> to vector<16x64xf32>
    %254 = arith.subf %241, %253 : vector<16x64xf32>
    %cst_98 = arith.constant 9.99999974E-6 : f32
    %255 = vector.broadcast %cst_98 : f32 to vector<1x64xf32>
    %256 = arith.addf %252, %255 : vector<1x64xf32>
    %257 = math.sqrt %256 : vector<1x64xf32>
    %cst_99 = arith.constant 1.000000e+00 : f32
    %258 = vector.broadcast %cst_99 : f32 to vector<1x64xf32>
    %259 = arith.divf %258, %257 : vector<1x64xf32>
    %260 = vector.broadcast %259 : vector<1x64xf32> to vector<16x64xf32>
    %261 = arith.mulf %254, %260 : vector<16x64xf32>
    %cst_100 = arith.constant 0.000000e+00 : f32
    %262 = vector.broadcast %cst_100 : f32 to vector<16x64xf32>
    %263 = arith.maximumf %261, %262 : vector<16x64xf32>
    %cst_101 = arith.constant dense<0.000000e+00> : vector<16x32xf32>
    %264 = tpu.matmul %263, %39, %cst_101 {dimension_numbers = #tpu.dot_dimension_numbers<[1], [0], [0], [1], [0, 0, 1, 1], [], []>} : vector<16x64xf32>, vector<64x32xf32>, vector<16x32xf32> -> vector<16x32xf32>
    %265 = vector.broadcast %41 : vector<1x32xf32> to vector<16x32xf32>
    %266 = arith.addf %264, %265 : vector<16x32xf32>
    %267 = arith.addf %8, %266 : vector<16x32xf32>
    %c0_102 = arith.constant 0 : index
    %c0_103 = arith.constant 0 : index
    %c0_104 = arith.constant 0 : index
    %c0_105 = arith.constant 0 : index
    %268 = vector.load %arg13[%c0_102, %c0_103, %c0_104, %c0_105] : memref<1x2x16x32xf32, #tpu.memory_space<vmem>>, vector<1x1x16x32xf32>
    %269 = vector.shape_cast %268 : vector<1x1x16x32xf32> to vector<16x32xf32>
    %270 = vector.shape_cast %154 : vector<16x32xf32> to vector<1x1x16x32xf32>
    tpu.vector_store %arg13[%c0_102, %c0_103, %c0_104, %c0_105], %270 {strides = array<i32>} : memref<1x2x16x32xf32, #tpu.memory_space<vmem>>, vector<1x1x16x32xf32>,
    %c0_106 = arith.constant 0 : index
    %c1 = arith.constant 1 : index
    %c0_107 = arith.constant 0 : index
    %c0_108 = arith.constant 0 : index
    %271 = vector.load %arg13[%c0_106, %c1, %c0_107, %c0_108] : memref<1x2x16x32xf32, #tpu.memory_space<vmem>>, vector<1x1x16x32xf32>
    %272 = vector.shape_cast %271 : vector<1x1x16x32xf32> to vector<16x32xf32>
    %273 = vector.shape_cast %267 : vector<16x32xf32> to vector<1x1x16x32xf32>
    tpu.vector_store %arg13[%c0_106, %c1, %c0_107, %c0_108], %273 {strides = array<i32>} : memref<1x2x16x32xf32, #tpu.memory_space<vmem>>, vector<1x1x16x32xf32>,
    return
  }
  func.func @transform_0(%arg0: i32, %arg1: i32, %arg2: memref<2xi32, #tpu.memory_space<smem>>) -> (i32, i32, i32, i32) {
    %c0_i32 = arith.constant 0 : i32
    %c0_i32_0 = arith.constant 0 : i32
    %c0_i32_1 = arith.constant 0 : i32
    %c0_i32_2 = arith.constant 0 : i32
    return %arg0, %c0_i32, %c0_i32_0, %c0_i32_1 : i32, i32, i32, i32
  }
  func.func @transform_1(%arg0: i32, %arg1: i32, %arg2: memref<2xi32, #tpu.memory_space<smem>>) -> (i32, i32, i32) {
    %c0_i32 = arith.constant 0 : i32
    %c0_i32_0 = arith.constant 0 : i32
    %c0_i32_1 = arith.constant 0 : i32
    return %arg1, %c0_i32, %c0_i32_0 : i32, i32, i32
  }
  func.func @transform_2(%arg0: i32, %arg1: i32, %arg2: memref<2xi32, #tpu.memory_space<smem>>) -> (i32, i32, i32) {
    %c0_i32 = arith.constant 0 : i32
    %c0_i32_0 = arith.constant 0 : i32
    %c0_i32_1 = arith.constant 0 : i32
    return %arg1, %c0_i32, %c0_i32_0 : i32, i32, i32
  }
  func.func @transform_3(%arg0: i32, %arg1: i32, %arg2: memref<2xi32, #tpu.memory_space<smem>>) -> (i32, i32, i32) {
    %c0_i32 = arith.constant 0 : i32
    %c0_i32_0 = arith.constant 0 : i32
    %c0_i32_1 = arith.constant 0 : i32
    return %arg1, %c0_i32, %c0_i32_0 : i32, i32, i32
  }
  func.func @transform_4(%arg0: i32, %arg1: i32, %arg2: memref<2xi32, #tpu.memory_space<smem>>) -> (i32, i32, i32) {
    %c0_i32 = arith.constant 0 : i32
    %c0_i32_0 = arith.constant 0 : i32
    %c0_i32_1 = arith.constant 0 : i32
    return %arg1, %c0_i32, %c0_i32_0 : i32, i32, i32
  }
  func.func @transform_5(%arg0: i32, %arg1: i32, %arg2: memref<2xi32, #tpu.memory_space<smem>>) -> (i32, i32, i32) {
    %c0_i32 = arith.constant 0 : i32
    %c0_i32_0 = arith.constant 0 : i32
    %c0_i32_1 = arith.constant 0 : i32
    return %arg1, %c0_i32, %c0_i32_0 : i32, i32, i32
  }
  func.func @transform_6(%arg0: i32, %arg1: i32, %arg2: memref<2xi32, #tpu.memory_space<smem>>) -> (i32, i32, i32) {
    %c0_i32 = arith.constant 0 : i32
    %c0_i32_0 = arith.constant 0 : i32
    %c0_i32_1 = arith.constant 0 : i32
    return %arg1, %c0_i32, %c0_i32_0 : i32, i32, i32
  }
  func.func @transform_7(%arg0: i32, %arg1: i32, %arg2: memref<2xi32, #tpu.memory_space<smem>>) -> (i32, i32, i32) {
    %c0_i32 = arith.constant 0 : i32
    %c0_i32_0 = arith.constant 0 : i32
    %c0_i32_1 = arith.constant 0 : i32
    return %arg1, %c0_i32, %c0_i32_0 : i32, i32, i32
  }
  func.func @transform_8(%arg0: i32, %arg1: i32, %arg2: memref<2xi32, #tpu.memory_space<smem>>) -> (i32, i32, i32) {
    %c0_i32 = arith.constant 0 : i32
    %c0_i32_0 = arith.constant 0 : i32
    %c0_i32_1 = arith.constant 0 : i32
    return %arg1, %c0_i32, %c0_i32_0 : i32, i32, i32
  }
  func.func @transform_9(%arg0: i32, %arg1: i32, %arg2: memref<2xi32, #tpu.memory_space<smem>>) -> (i32, i32, i32) {
    %c0_i32 = arith.constant 0 : i32
    %c0_i32_0 = arith.constant 0 : i32
    %c0_i32_1 = arith.constant 0 : i32
    return %arg1, %c0_i32, %c0_i32_0 : i32, i32, i32
  }
  func.func @transform_10(%arg0: i32, %arg1: i32, %arg2: memref<2xi32, #tpu.memory_space<smem>>) -> (i32, i32, i32, i32) {
    %c0_i32 = arith.constant 0 : i32
    %c0_i32_0 = arith.constant 0 : i32
    %c0_i32_1 = arith.constant 0 : i32
    %c0_i32_2 = arith.constant 0 : i32
    return %arg0, %c0_i32, %c0_i32_0, %c0_i32_1 : i32, i32, i32, i32
  }
}

</mosaic_0001>

<llo_original>
// kernel: _lambda_.1
$region0: #{_lambda_.1}
  #allocation0 [shape = 'u32[]', space=smem, size = 0x4, offset = 0x4, fixed_abs, tag = 'smem constant byte address 0x4 - core index']
  #allocation1 [shape = 'u32[144,128]{1,0:T(1,128)}', space=vmem, size = 0x12000, scoped, tag = 'internal scratch']
  #allocation2 [shape = 's32[1]{0}', space=sflag, size = 0x4, scoped, tag = 'scoped memory for _lambda_.1']
  #allocation3 [shape = 'u8[512]{0}', space=smem, size = 0x200, scoped, tag = 'prefetched SMEM operand 0']
  %s0 = inlined_call_operand.vmem [shape: s32[2], index: 0, kind: input, shape index: {}]
  %s1 = inlined_call_operand.vmem [shape: f32[2,2,16,32], index: 1, kind: input, shape index: {}, may-alias: {1,11}]
  %s2 = inlined_call_operand.hbm [shape: f32[2,32,32], index: 2, kind: input, shape index: {}]
  %s3 = inlined_call_operand.vmem [shape: f32[2,1,32], index: 3, kind: input, shape index: {}]
  %s4 = inlined_call_operand.hbm [shape: f32[2,32,64], index: 4, kind: input, shape index: {}]
  %s5 = inlined_call_operand.vmem [shape: f32[2,1,64], index: 5, kind: input, shape index: {}]
  %s6 = inlined_call_operand.hbm [shape: f32[2,32,64], index: 6, kind: input, shape index: {}]
  %s7 = inlined_call_operand.hbm [shape: f32[2,32,64], index: 7, kind: input, shape index: {}]
  %s8 = inlined_call_operand.vmem [shape: f32[2,1,64], index: 8, kind: input, shape index: {}]
  %s9 = inlined_call_operand.vmem [shape: f32[2,64,32], index: 9, kind: input, shape index: {}]
  %s10 = inlined_call_operand.vmem [shape: f32[2,1,32], index: 10, kind: input, shape index: {}]
  %s11 = inlined_call_operand.vmem [shape: f32[2,2,16,32], index: 11, kind: output, shape index: {}, may-alias: {1,11}]
  %s12 = sld [smem:[#allocation0]]
  $region93: #{_lambda_.1} parent=0
    _
  %s14 = ssub.s32 1, %s12
  %s15 = scalar_select 0, %s14, %s12
  %s16 = sshll.u32 %s0, 4
  %s17 = int_to_ptr.vmem [resolvable:$true] %s16
  %19 = dma.vmem_to_smem %s17, 16, [#allocation3], [#allocation2]
  %20 = dma.done [#allocation2], 16
  %21 = sfence
  $region1: #{_lambda_.1} parent=0
    #allocation4 [shape = 'u8[32768]{0}', space=vmem, size = 0x8000, scoped, tag = 'input window, operand 2']
    #allocation5 [shape = 's32[2]{0}', space=sflag, size = 0x8, scoped, tag = 'scoped memory for _lambda_.1']
    #allocation6 [shape = 'u8[32768]{0}', space=vmem, size = 0x8000, scoped, tag = 'input window, operand 4']
    #allocation7 [shape = 's32[2]{0}', space=sflag, size = 0x8, scoped, tag = 'scoped memory for _lambda_.1']
    #allocation8 [shape = 'u8[32768]{0}', space=vmem, size = 0x8000, scoped, tag = 'input window, operand 6']
    #allocation9 [shape = 'u8[32768]{0}', space=vmem, size = 0x8000, scoped, tag = 'input window, operand 7']
    #allocation10 [shape = 's32[2]{0}', space=sflag, size = 0x8, scoped, tag = 'scoped memory for _lambda_.1']
    %22 = vsyncpa [#allocation5], 0
    %s23 = scalar_lea.sflag [#allocation5], 1
    %24 = vsyncpa %s23, 0
    %25 = vsyncpa [#allocation7], 0
    %s26 = scalar_lea.sflag [#allocation7], 1
    %27 = vsyncpa %s26, 0
    %28 = vsyncpa [#allocation10], 0
    %s29 = scalar_lea.sflag [#allocation10], 1
    %30 = vsyncpa %s29, 0
    loop: start=0, step=1, limit=6
    $region2: #{_lambda_.1} parent=1 // loop_pre_header
      _
    $region3: #{_lambda_.1} parent=1 // loop_header
      %s32 = sphi 0, %s36
      %p33 = scmp.ge.s32.totalorder %s32, 6
      %s39 = sphi 0, %s51
      %s40 = sphi 0, %s47
      %s41 = sphi 0, %s39
      %s42 = sphi 0, %s40
      %s43 = sphi 0, %s41
      %s44 = sphi 0, %s42
      %s54 = sphi 0, %s56
      %s57 = sphi 0, %s54
      %s58 = sphi 0, %s57
      %s74 = sphi 0, %s58
      %s80 = sphi 0, %s82
      %s83 = sphi 0, %s80
      %s84 = sphi 0, %s83
      %s100 = sphi 0, %s84
      %s106 = sphi 0, %s108
      %s109 = sphi 0, %s106
      %s110 = sphi 0, %s109
      %s126 = sphi 0, %s110
      %s132 = sphi 0, %s134
      %s135 = sphi 0, %s132
      %s136 = sphi 0, %s135
      %s152 = sphi 0, %s136
      %s158 = sphi 0, %s160
      %s161 = sphi 0, %s158
      %s162 = sphi 0, %s161
      %s178 = sphi 0, %s162
      %s184 = sphi 0, %s186
      %s187 = sphi 0, %s184
      %s188 = sphi 0, %s187
      %s204 = sphi 0, %s188
      %s210 = sphi 0, %s212
      %s213 = sphi 0, %s210
      %s214 = sphi 0, %s213
      %s230 = sphi 0, %s214
      %s236 = sphi 0, %s238
      %s239 = sphi 0, %s236
      %s240 = sphi 0, %s239
      %s256 = sphi 0, %s240
      %s262 = sphi 0, %s264
      %s265 = sphi 0, %s262
      %s266 = sphi 0, %s265
      %s282 = sphi 0, %s266
      %s288 = sphi 0, %s290
      %s291 = sphi 0, %s288
      %s292 = sphi 0, %s291
      %s308 = sphi 0, %s292
      %s314 = sphi 0, %s316
      %s317 = sphi 0, %s314
      %s318 = sphi 0, %s317
      %s334 = sphi 0, %s318
    $region4: #{_lambda_.1} parent=1 // loop_header_branch
      %35 = sbr.rel (%p33) target = $region8
    $region5: #{_lambda_.1} parent=1 // loop_body
      %s37 = ssub.s32 %s32, 1
      %s38 = ssub.s32 %s32, 2
      %s45 = sadd.s32 1, %s40
      %p46 = scmp.ge.s32.totalorder %s45, 2
      %s47 = scalar_select %p46, 0, %s45
      %s48 = sadd.s32 1, %s39
      %s49 = scalar_select %p46, %s48, %s39
      %p50 = scmp.ge.s32.totalorder %s49, 2
      %s51 = scalar_select %p50, 0, %s49
      %s52 = ssub.s32 %s39, %s51
      %p53 = scmp.eq.s32.totalorder %s52, 0
      %s55 = sadd.s32 %s54, 1
      %s56 = scalar_select %p53, %s54, %s55
      %p59 = pneg %p53
      %p60 = scmp.eq.s32.totalorder %s32, 3
      %p61 = por %p59, %p60
      %p62 = scmp.ne.s32.totalorder %s54, %s57
      %p63 = scmp.eq.s32.totalorder %s32, 0
      %p64 = por %p62, %p63
      %p65 = scmp.ne.s32.totalorder %s54, %s57
      %p66 = scmp.eq.s32.totalorder %s37, 3
      %p67 = por %p65, %p66
      %p68 = scmp.ne.s32.totalorder %s57, %s58
      %p69 = scmp.eq.s32.totalorder %s37, 0
      %p70 = por %p68, %p69
      %p71 = scmp.ne.s32.totalorder %s57, %s58
      %p72 = scmp.eq.s32.totalorder %s38, 3
      %p73 = por %p71, %p72
      %p75 = scmp.ne.s32.totalorder %s58, %s74
      %p76 = scmp.eq.s32.totalorder %s38, 0
      %p77 = por %p75, %p76
      %s78 = ssub.s32 %s40, %s47
      %p79 = scmp.eq.s32.totalorder %s78, 0
      %s81 = sadd.s32 %s80, 1
      %s82 = scalar_select %p79, %s80, %s81
      %p85 = pneg %p79
      %p86 = scmp.eq.s32.totalorder %s32, 3
      %p87 = por %p85, %p86
      %p88 = scmp.ne.s32.totalorder %s80, %s83
      %p89 = scmp.eq.s32.totalorder %s32, 0
      %p90 = por %p88, %p89
      %p91 = scmp.ne.s32.totalorder %s80, %s83
      %p92 = scmp.eq.s32.totalorder %s37, 3
      %p93 = por %p91, %p92
      %p94 = scmp.ne.s32.totalorder %s83, %s84
      %p95 = scmp.eq.s32.totalorder %s37, 0
      %p96 = por %p94, %p95
      %p97 = scmp.ne.s32.totalorder %s83, %s84
      %p98 = scmp.eq.s32.totalorder %s38, 3
      %p99 = por %p97, %p98
      %p101 = scmp.ne.s32.totalorder %s84, %s100
      %p102 = scmp.eq.s32.totalorder %s38, 0
      %p103 = por %p101, %p102
      %s104 = ssub.s32 %s40, %s47
      %p105 = scmp.eq.s32.totalorder %s104, 0
      %s107 = sadd.s32 %s106, 1
      %s108 = scalar_select %p105, %s106, %s107
      %p111 = pneg %p105
      %p112 = scmp.eq.s32.totalorder %s32, 3
      %p113 = por %p111, %p112
      %p114 = scmp.ne.s32.totalorder %s106, %s109
      %p115 = scmp.eq.s32.totalorder %s32, 0
      %p116 = por %p114, %p115
      %p117 = scmp.ne.s32.totalorder %s106, %s109
      %p118 = scmp.eq.s32.totalorder %s37, 3
      %p119 = por %p117, %p118
      %p120 = scmp.ne.s32.totalorder %s109, %s110
      %p121 = scmp.eq.s32.totalorder %s37, 0
      %p122 = por %p120, %p121
      %p123 = scmp.ne.s32.totalorder %s109, %s110
      %p124 = scmp.eq.s32.totalorder %s38, 3
      %p125 = por %p123, %p124
      %p127 = scmp.ne.s32.totalorder %s110, %s126
      %p128 = scmp.eq.s32.totalorder %s38, 0
      %p129 = por %p127, %p128
      %s130 = ssub.s32 %s40, %s47
      %p131 = scmp.eq.s32.totalorder %s130, 0
      %s133 = sadd.s32 %s132, 1
      %s134 = scalar_select %p131, %s132, %s133
      %p137 = pneg %p131
      %p138 = scmp.eq.s32.totalorder %s32, 3
      %p139 = por %p137, %p138
      %p140 = scmp.ne.s32.totalorder %s132, %s135
      %p141 = scmp.eq.s32.totalorder %s32, 0
      %p142 = por %p140, %p141
      %p143 = scmp.ne.s32.totalorder %s132, %s135
      %p144 = scmp.eq.s32.totalorder %s37, 3
      %p145 = por %p143, %p144
      %p146 = scmp.ne.s32.totalorder %s135, %s136
      %p147 = scmp.eq.s32.totalorder %s37, 0
      %p148 = por %p146, %p147
      %p149 = scmp.ne.s32.totalorder %s135, %s136
      %p150 = scmp.eq.s32.totalorder %s38, 3
      %p151 = por %p149, %p150
      %p153 = scmp.ne.s32.totalorder %s136, %s152
      %p154 = scmp.eq.s32.totalorder %s38, 0
      %p155 = por %p153, %p154
      %s156 = ssub.s32 %s40, %s47
      %p157 = scmp.eq.s32.totalorder %s156, 0
      %s159 = sadd.s32 %s158, 1
      %s160 = scalar_select %p157, %s158, %s159
      %p163 = pneg %p157
      %p164 = scmp.eq.s32.totalorder %s32, 3
      %p165 = por %p163, %p164
      %p166 = scmp.ne.s32.totalorder %s158, %s161
      %p167 = scmp.eq.s32.totalorder %s32, 0
      %p168 = por %p166, %p167
      %p169 = scmp.ne.s32.totalorder %s158, %s161
      %p170 = scmp.eq.s32.totalorder %s37, 3
      %p171 = por %p169, %p170
      %p172 = scmp.ne.s32.totalorder %s161, %s162
      %p173 = scmp.eq.s32.totalorder %s37, 0
      %p174 = por %p172, %p173
      %p175 = scmp.ne.s32.totalorder %s161, %s162
      %p176 = scmp.eq.s32.totalorder %s38, 3
      %p177 = por %p175, %p176
      %p179 = scmp.ne.s32.totalorder %s162, %s178
      %p180 = scmp.eq.s32.totalorder %s38, 0
      %p181 = por %p179, %p180
      %s182 = ssub.s32 %s40, %s47
      %p183 = scmp.eq.s32.totalorder %s182, 0
      %s185 = sadd.s32 %s184, 1
      %s186 = scalar_select %p183, %s184, %s185
      %p189 = pneg %p183
      %p190 = scmp.eq.s32.totalorder %s32, 3
      %p191 = por %p189, %p190
      %p192 = scmp.ne.s32.totalorder %s184, %s187
      %p193 = scmp.eq.s32.totalorder %s32, 0
      %p194 = por %p192, %p193
      %p195 = scmp.ne.s32.totalorder %s184, %s187
      %p196 = scmp.eq.s32.totalorder %s37, 3
      %p197 = por %p195, %p196
      %p198 = scmp.ne.s32.totalorder %s187, %s188
      %p199 = scmp.eq.s32.totalorder %s37, 0
      %p200 = por %p198, %p199
      %p201 = scmp.ne.s32.totalorder %s187, %s188
      %p202 = scmp.eq.s32.totalorder %s38, 3
      %p203 = por %p201, %p202
      %p205 = scmp.ne.s32.totalorder %s188, %s204
      %p206 = scmp.eq.s32.totalorder %s38, 0
      %p207 = por %p205, %p206
      %s208 = ssub.s32 %s40, %s47
      %p209 = scmp.eq.s32.totalorder %s208, 0
      %s211 = sadd.s32 %s210, 1
      %s212 = scalar_select %p209, %s210, %s211
      %p215 = pneg %p209
      %p216 = scmp.eq.s32.totalorder %s32, 3
      %p217 = por %p215, %p216
      %p218 = scmp.ne.s32.totalorder %s210, %s213
      %p219 = scmp.eq.s32.totalorder %s32, 0
      %p220 = por %p218, %p219
      %p221 = scmp.ne.s32.totalorder %s210, %s213
      %p222 = scmp.eq.s32.totalorder %s37, 3
      %p223 = por %p221, %p222
      %p224 = scmp.ne.s32.totalorder %s213, %s214
      %p225 = scmp.eq.s32.totalorder %s37, 0
      %p226 = por %p224, %p225
      %p227 = scmp.ne.s32.totalorder %s213, %s214
      %p228 = scmp.eq.s32.totalorder %s38, 3
      %p229 = por %p227, %p228
      %p231 = scmp.ne.s32.totalorder %s214, %s230
      %p232 = scmp.eq.s32.totalorder %s38, 0
      %p233 = por %p231, %p232
      %s234 = ssub.s32 %s40, %s47
      %p235 = scmp.eq.s32.totalorder %s234, 0
      %s237 = sadd.s32 %s236, 1
      %s238 = scalar_select %p235, %s236, %s237
      %p241 = pneg %p235
      %p242 = scmp.eq.s32.totalorder %s32, 3
      %p243 = por %p241, %p242
      %p244 = scmp.ne.s32.totalorder %s236, %s239
      %p245 = scmp.eq.s32.totalorder %s32, 0
      %p246 = por %p244, %p245
      %p247 = scmp.ne.s32.totalorder %s236, %s239
      %p248 = scmp.eq.s32.totalorder %s37, 3
      %p249 = por %p247, %p248
      %p250 = scmp.ne.s32.totalorder %s239, %s240
      %p251 = scmp.eq.s32.totalorder %s37, 0
      %p252 = por %p250, %p251
      %p253 = scmp.ne.s32.totalorder %s239, %s240
      %p254 = scmp.eq.s32.totalorder %s38, 3
      %p255 = por %p253, %p254
      %p257 = scmp.ne.s32.totalorder %s240, %s256
      %p258 = scmp.eq.s32.totalorder %s38, 0
      %p259 = por %p257, %p258
      %s260 = ssub.s32 %s40, %s47
      %p261 = scmp.eq.s32.totalorder %s260, 0
      %s263 = sadd.s32 %s262, 1
      %s264 = scalar_select %p261, %s262, %s263
      %p267 = pneg %p261
      %p268 = scmp.eq.s32.totalorder %s32, 3
      %p269 = por %p267, %p268
      %p270 = scmp.ne.s32.totalorder %s262, %s265
      %p271 = scmp.eq.s32.totalorder %s32, 0
      %p272 = por %p270, %p271
      %p273 = scmp.ne.s32.totalorder %s262, %s265
      %p274 = scmp.eq.s32.totalorder %s37, 3
      %p275 = por %p273, %p274
      %p276 = scmp.ne.s32.totalorder %s265, %s266
      %p277 = scmp.eq.s32.totalorder %s37, 0
      %p278 = por %p276, %p277
      %p279 = scmp.ne.s32.totalorder %s265, %s266
      %p280 = scmp.eq.s32.totalorder %s38, 3
      %p281 = por %p279, %p280
      %p283 = scmp.ne.s32.totalorder %s266, %s282
      %p284 = scmp.eq.s32.totalorder %s38, 0
      %p285 = por %p283, %p284
      %s286 = ssub.s32 %s40, %s47
      %p287 = scmp.eq.s32.totalorder %s286, 0
      %s289 = sadd.s32 %s288, 1
      %s290 = scalar_select %p287, %s288, %s289
      %p293 = pneg %p287
      %p294 = scmp.eq.s32.totalorder %s32, 3
      %p295 = por %p293, %p294
      %p296 = scmp.ne.s32.totalorder %s288, %s291
      %p297 = scmp.eq.s32.totalorder %s32, 0
      %p298 = por %p296, %p297
      %p299 = scmp.ne.s32.totalorder %s288, %s291
      %p300 = scmp.eq.s32.totalorder %s37, 3
      %p301 = por %p299, %p300
      %p302 = scmp.ne.s32.totalorder %s291, %s292
      %p303 = scmp.eq.s32.totalorder %s37, 0
      %p304 = por %p302, %p303
      %p305 = scmp.ne.s32.totalorder %s291, %s292
      %p306 = scmp.eq.s32.totalorder %s38, 3
      %p307 = por %p305, %p306
      %p309 = scmp.ne.s32.totalorder %s292, %s308
      %p310 = scmp.eq.s32.totalorder %s38, 0
      %p311 = por %p309, %p310
      %s312 = ssub.s32 %s39, %s51
      %p313 = scmp.eq.s32.totalorder %s312, 0
      %s315 = sadd.s32 %s314, 1
      %s316 = scalar_select %p313, %s314, %s315
      %p319 = pneg %p313
      %p320 = scmp.eq.s32.totalorder %s32, 3
      %p321 = por %p319, %p320
      %p322 = scmp.ne.s32.totalorder %s314, %s317
      %p323 = scmp.eq.s32.totalorder %s32, 0
      %p324 = por %p322, %p323
      %p325 = scmp.ne.s32.totalorder %s314, %s317
      %p326 = scmp.eq.s32.totalorder %s37, 3
      %p327 = por %p325, %p326
      %p328 = scmp.ne.s32.totalorder %s317, %s318
      %p329 = scmp.eq.s32.totalorder %s37, 0
      %p330 = por %p328, %p329
      %p331 = scmp.ne.s32.totalorder %s317, %s318
      %p332 = scmp.eq.s32.totalorder %s38, 3
      %p333 = por %p331, %p332
      %p335 = scmp.ne.s32.totalorder %s318, %s334
      %p336 = scmp.eq.s32.totalorder %s38, 0
      %p337 = por %p335, %p336
      %p338 = scmp.le.s32.totalorder 1, %s32
      %p339 = scmp.lt.s32.totalorder %s32, 5
      %p340 = pnand %p338, %p339
      %p341 = pneg %p340
      // Predicated region
      $region9: #{_lambda_.1} parent=5 // pred_check
        _
      $region10: #{_lambda_.1} parent=5 // pred_check_branch
        %343 = sbr.rel (%p340) target = $region12
      $region11: #{_lambda_.1} parent=5 // pred_region
        %s344 = ssub.s32 %s32, 1
      $region12: #{_lambda_.1} parent=5 // pred_fallthru
        _
      %p345 = scmp.lt.s32.totalorder %s32, 4
      // Predicated region
      $region13: #{_lambda_.1} parent=5 // pred_check
        %p346 = pneg %p345
      $region14: #{_lambda_.1} parent=5 // pred_check_branch
        %348 = sbr.rel (%p346) target = $region16
      $region15: #{_lambda_.1} parent=5 // pred_region
        // Predicated region
        $region17: #{_lambda_.1} parent=15 // pred_check
          %p349 = pneg %p64
        $region18: #{_lambda_.1} parent=15 // pred_check_branch
          %351 = sbr.rel (%p349) target = $region20
        $region19: #{_lambda_.1} parent=15 // pred_region
          %p352 = scmp.lt.s32.totalorder %s39, 1
          %s353 = scalar_select %p352, %s39, 1
          %s354 = smul.addr %s353, 4
          %s355 = smul.addr %s354, 8
          %s356 = scalar_lea.vmem %s1, %s355
        $region20: #{_lambda_.1} parent=15 // pred_fallthru
          _
        // Predicated region
        $region21: #{_lambda_.1} parent=15 // pred_check
          %p357 = pneg %p90
        $region22: #{_lambda_.1} parent=15 // pred_check_branch
          %359 = sbr.rel (%p357) target = $region24
        $region23: #{_lambda_.1} parent=15 // pred_region
          %s360 = sand.u32 %s80, 1
          %s361 = scalar_lea.sflag [#allocation5], %s360
          %s362 = sand.u32 %s80, 1
          %s363 = smul.addr %s362, 32
          %s364 = scalar_lea.vmem [#allocation4], %s363
          %s366 = ssub.s32 512, 512
          %367 = vsyncadd %s361, %s366
          %s368 = smul.addr %s40, 4
          %s369 = smul.addr %s368, 128
          %s370 = scalar_lea.hbm %s2, %s369
          %s371 = sshll.u32 %s364, 4
          %s372 = int_to_ptr.vmem [resolvable:$true] %s371
          %377 = dma.hbm_to_vmem [thread:$0]  %s370, 512, %s372, %s361, 128, 128, 8
        $region24: #{_lambda_.1} parent=15 // pred_fallthru
          _
        // Predicated region
        $region25: #{_lambda_.1} parent=15 // pred_check
          %p378 = pneg %p116
        $region26: #{_lambda_.1} parent=15 // pred_check_branch
          %380 = sbr.rel (%p378) target = $region28
        $region27: #{_lambda_.1} parent=15 // pred_region
          %p381 = scmp.lt.s32.totalorder %s40, 1
          %s382 = scalar_select %p381, %s40, 1
          %s383 = scalar_lea.vmem %s3, %s382
        $region28: #{_lambda_.1} parent=15 // pred_fallthru
          _
        // Predicated region
        $region29: #{_lambda_.1} parent=15 // pred_check
          %p384 = pneg %p142
        $region30: #{_lambda_.1} parent=15 // pred_check_branch
          %386 = sbr.rel (%p384) target = $region32
        $region31: #{_lambda_.1} parent=15 // pred_region
          %s387 = sand.u32 %s32, 1
          %s388 = scalar_lea.sflag [#allocation7], %s387
          %s389 = sand.u32 %s132, 1
          %s390 = smul.addr %s389, 32
          %s391 = scalar_lea.vmem [#allocation6], %s390
          %s393 = ssub.s32 512, 512
          %394 = vsyncadd %s388, %s393
          %s395 = smul.addr %s40, 4
          %s396 = smul.addr %s395, 128
          %s397 = scalar_lea.hbm %s4, %s396
          %s398 = sshll.u32 %s391, 4
          %s399 = int_to_ptr.vmem [resolvable:$true] %s398
          %404 = dma.hbm_to_vmem [thread:$0]  %s397, 512, %s399, %s388, 128, 128, 8
        $region32: #{_lambda_.1} parent=15 // pred_fallthru
          _
        // Predicated region
        $region33: #{_lambda_.1} parent=15 // pred_check
          %p405 = pneg %p168
        $region34: #{_lambda_.1} parent=15 // pred_check_branch
          %407 = sbr.rel (%p405) target = $region36
        $region35: #{_lambda_.1} parent=15 // pred_region
          %p408 = scmp.lt.s32.totalorder %s40, 1
          %s409 = scalar_select %p408, %s40, 1
          %s410 = scalar_lea.vmem %s5, %s409
        $region36: #{_lambda_.1} parent=15 // pred_fallthru
          _
        // Predicated region
        $region37: #{_lambda_.1} parent=15 // pred_check
          %p411 = pneg %p194
        $region38: #{_lambda_.1} parent=15 // pred_check_branch
          %413 = sbr.rel (%p411) target = $region40
        $region39: #{_lambda_.1} parent=15 // pred_region
          %s414 = sand.u32 %s32, 1
          %s415 = scalar_lea.sflag [#allocation7], %s414
          %s416 = sand.u32 %s184, 1
          %s417 = smul.addr %s416, 32
          %s418 = scalar_lea.vmem [#allocation8], %s417
          %s420 = ssub.s32 512, 512
          %421 = vsyncadd %s415, %s420
          %s422 = smul.addr %s40, 4
          %s423 = smul.addr %s422, 128
          %s424 = scalar_lea.hbm %s6, %s423
          %s425 = sshll.u32 %s418, 4
          %s426 = int_to_ptr.vmem [resolvable:$true] %s425
          %431 = dma.hbm_to_vmem [thread:$0]  %s424, 512, %s426, %s415, 128, 128, 8
        $region40: #{_lambda_.1} parent=15 // pred_fallthru
          _
        // Predicated region
        $region41: #{_lambda_.1} parent=15 // pred_check
          %p432 = pneg %p220
        $region42: #{_lambda_.1} parent=15 // pred_check_branch
          %434 = sbr.rel (%p432) target = $region44
        $region43: #{_lambda_.1} parent=15 // pred_region
          %s435 = sand.u32 %s210, 1
          %s436 = scalar_lea.sflag [#allocation10], %s435
          %s437 = sand.u32 %s210, 1
          %s438 = smul.addr %s437, 32
          %s439 = scalar_lea.vmem [#allocation9], %s438
          %s441 = ssub.s32 512, 512
          %442 = vsyncadd %s436, %s441
          %s443 = smul.addr %s40, 4
          %s444 = smul.addr %s443, 128
          %s445 = scalar_lea.hbm %s7, %s444
          %s446 = sshll.u32 %s439, 4
          %s447 = int_to_ptr.vmem [resolvable:$true] %s446
          %452 = dma.hbm_to_vmem [thread:$0]  %s445, 512, %s447, %s436, 128, 128, 8
        $region44: #{_lambda_.1} parent=15 // pred_fallthru
          _
        // Predicated region
        $region45: #{_lambda_.1} parent=15 // pred_check
          %p453 = pneg %p246
        $region46: #{_lambda_.1} parent=15 // pred_check_branch
          %455 = sbr.rel (%p453) target = $region48
        $region47: #{_lambda_.1} parent=15 // pred_region
          %p456 = scmp.lt.s32.totalorder %s40, 1
          %s457 = scalar_select %p456, %s40, 1
          %s458 = scalar_lea.vmem %s8, %s457
        $region48: #{_lambda_.1} parent=15 // pred_fallthru
          _
        // Predicated region
        $region49: #{_lambda_.1} parent=15 // pred_check
          %p459 = pneg %p272
        $region50: #{_lambda_.1} parent=15 // pred_check_branch
          %461 = sbr.rel (%p459) target = $region52
        $region51: #{_lambda_.1} parent=15 // pred_region
          %p462 = scmp.lt.s32.totalorder %s40, 1
          %s463 = scalar_select %p462, %s40, 1
          %s464 = smul.addr %s463, 8
          %s465 = smul.addr %s464, 8
          %s466 = scalar_lea.vmem %s9, %s465
        $region52: #{_lambda_.1} parent=15 // pred_fallthru
          _
        // Predicated region
        $region53: #{_lambda_.1} parent=15 // pred_check
          %p467 = pneg %p298
        $region54: #{_lambda_.1} parent=15 // pred_check_branch
          %469 = sbr.rel (%p467) target = $region56
        $region55: #{_lambda_.1} parent=15 // pred_region
          %p470 = scmp.lt.s32.totalorder %s40, 1
          %s471 = scalar_select %p470, %s40, 1
          %s472 = scalar_lea.vmem %s10, %s471
        $region56: #{_lambda_.1} parent=15 // pred_fallthru
          _
      $region16: #{_lambda_.1} parent=5 // pred_fallthru
        _
      %p473 = scmp.le.s32.totalorder 1, %s32
      %p474 = scmp.lt.s32.totalorder %s32, 5
      %p475 = pnand %p473, %p474
      %p476 = pneg %p475
      // Predicated region
      $region57: #{_lambda_.1} parent=5 // pred_check
        _
      $region58: #{_lambda_.1} parent=5 // pred_check_branch
        %478 = sbr.rel (%p475) target = $region60
      $region59: #{_lambda_.1} parent=5 // pred_region
        %s479 = ssub.s32 %s32, 1
        %s480 = sand.u32 %s83, 1
        %s481 = scalar_lea.sflag [#allocation5], %s480
        %s482 = sand.u32 %s83, 1
        %s483 = smul.addr %s482, 32
        %s484 = scalar_lea.vmem [#allocation4], %s483
        // Predicated region
        $region61: #{_lambda_.1} parent=59 // pred_check
          %p485 = pneg %p96
        $region62: #{_lambda_.1} parent=59 // pred_check_branch
          %487 = sbr.rel (%p485) target = $region64
        $region63: #{_lambda_.1} parent=59 // pred_region
          %488 = dma.done %s481, 512
        $region64: #{_lambda_.1} parent=59 // pred_fallthru
          _
        %s489 = sand.u32 %s37, 1
        %s490 = scalar_lea.sflag [#allocation7], %s489
        %s491 = sand.u32 %s135, 1
        %s492 = smul.addr %s491, 32
        %s493 = scalar_lea.vmem [#allocation6], %s492
        // Predicated region
        $region65: #{_lambda_.1} parent=59 // pred_check
          %p494 = pneg %p148
        $region66: #{_lambda_.1} parent=59 // pred_check_branch
          %496 = sbr.rel (%p494) target = $region68
        $region67: #{_lambda_.1} parent=59 // pred_region
          %497 = dma.done %s490, 512
        $region68: #{_lambda_.1} parent=59 // pred_fallthru
          _
        %s498 = sand.u32 %s37, 1
        %s499 = scalar_lea.sflag [#allocation7], %s498
        %s500 = sand.u32 %s187, 1
        %s501 = smul.addr %s500, 32
        %s502 = scalar_lea.vmem [#allocation8], %s501
        // Predicated region
        $region69: #{_lambda_.1} parent=59 // pred_check
          %p503 = pneg %p200
        $region70: #{_lambda_.1} parent=59 // pred_check_branch
          %505 = sbr.rel (%p503) target = $region72
        $region71: #{_lambda_.1} parent=59 // pred_region
          %506 = dma.done %s499, 512
        $region72: #{_lambda_.1} parent=59 // pred_fallthru
          _
        %s507 = sand.u32 %s213, 1
        %s508 = scalar_lea.sflag [#allocation10], %s507
        %s509 = sand.u32 %s213, 1
        %s510 = smul.addr %s509, 32
        %s511 = scalar_lea.vmem [#allocation9], %s510
        // Predicated region
        $region73: #{_lambda_.1} parent=59 // pred_check
          %p512 = pneg %p226
        $region74: #{_lambda_.1} parent=59 // pred_check_branch
          %514 = sbr.rel (%p512) target = $region76
        $region75: #{_lambda_.1} parent=59 // pred_region
          %515 = dma.done %s508, 512
        $region76: #{_lambda_.1} parent=59 // pred_fallthru
          _
        %p516 = scmp.lt.s32.totalorder %s41, 1
        %s517 = scalar_select %p516, %s41, 1
        %s518 = smul.addr %s517, 4
        %s519 = smul.addr %s518, 8
        %s520 = scalar_lea.vmem %s1, %s519
        %p521 = pneg %p70
        %p522 = pneg %p67
        %s523 = sand.u32 %s83, 1
        %s524 = scalar_lea.sflag [#allocation5], %s523
        %s525 = sand.u32 %s83, 1
        %s526 = smul.addr %s525, 32
        %s527 = scalar_lea.vmem [#allocation4], %s526
        %p528 = pneg %p96
        %p529 = pneg %p93
        %p530 = scmp.lt.s32.totalorder %s42, 1
        %s531 = scalar_select %p530, %s42, 1
        %s532 = scalar_lea.vmem %s3, %s531
        %p533 = pneg %p122
        %p534 = pneg %p119
        %s535 = sand.u32 %s37, 1
        %s536 = scalar_lea.sflag [#allocation7], %s535
        %s537 = sand.u32 %s135, 1
        %s538 = smul.addr %s537, 32
        %s539 = scalar_lea.vmem [#allocation6], %s538
        %p540 = pneg %p148
        %p541 = pneg %p145
        %p542 = scmp.lt.s32.totalorder %s42, 1
        %s543 = scalar_select %p542, %s42, 1
        %s544 = scalar_lea.vmem %s5, %s543
        %p545 = pneg %p174
        %p546 = pneg %p171
        %s547 = sand.u32 %s37, 1
        %s548 = scalar_lea.sflag [#allocation7], %s547
        %s549 = sand.u32 %s187, 1
        %s550 = smul.addr %s549, 32
        %s551 = scalar_lea.vmem [#allocation8], %s550
        %p552 = pneg %p200
        %p553 = pneg %p197
        %s554 = sand.u32 %s213, 1
        %s555 = scalar_lea.sflag [#allocation10], %s554
        %s556 = sand.u32 %s213, 1
        %s557 = smul.addr %s556, 32
        %s558 = scalar_lea.vmem [#allocation9], %s557
        %p559 = pneg %p226
        %p560 = pneg %p223
        %p561 = scmp.lt.s32.totalorder %s42, 1
        %s562 = scalar_select %p561, %s42, 1
        %s563 = scalar_lea.vmem %s8, %s562
        %p564 = pneg %p252
        %p565 = pneg %p249
        %p566 = scmp.lt.s32.totalorder %s42, 1
        %s567 = scalar_select %p566, %s42, 1
        %s568 = smul.addr %s567, 8
        %s569 = smul.addr %s568, 8
        %s570 = scalar_lea.vmem %s9, %s569
        %p571 = pneg %p278
        %p572 = pneg %p275
        %p573 = scmp.lt.s32.totalorder %s42, 1
        %s574 = scalar_select %p573, %s42, 1
        %s575 = scalar_lea.vmem %s10, %s574
        %p576 = pneg %p304
        %p577 = pneg %p301
        %p578 = pneg %p330
        %p579 = pneg %p327
        %p580 = scmp.lt.s32.totalorder %s41, 1
        %s581 = scalar_select %p580, %s41, 1
        %s582 = smul.addr %s581, 4
        %s583 = smul.addr %s582, 8
        %s584 = scalar_lea.vmem %s11, %s583
        %p585 = scmp.lt.s32.totalorder %s41, 1
        %s586 = scalar_select %p585, %s41, 1
        %s587 = smul.addr %s586, 4
        %s588 = smul.addr %s587, 8
        %s589 = scalar_lea.vmem %s1, %s588
        %p590 = scmp.lt.s32.totalorder %s42, 1
        %s591 = scalar_select %p590, %s42, 1
        %s592 = scalar_lea.vmem %s3, %s591
        %p593 = scmp.lt.s32.totalorder %s42, 1
        %s594 = scalar_select %p593, %s42, 1
        %s595 = scalar_lea.vmem %s5, %s594
        %p596 = scmp.lt.s32.totalorder %s42, 1
        %s597 = scalar_select %p596, %s42, 1
        %s598 = scalar_lea.vmem %s8, %s597
        %p599 = scmp.lt.s32.totalorder %s42, 1
        %s600 = scalar_select %p599, %s42, 1
        %s601 = smul.addr %s600, 8
        %s602 = smul.addr %s601, 8
        %s603 = scalar_lea.vmem %s9, %s602
        %p604 = scmp.lt.s32.totalorder %s42, 1
        %s605 = scalar_select %p604, %s42, 1
        %s606 = scalar_lea.vmem %s10, %s605
        %p607 = scmp.lt.s32.totalorder %s41, 1
        %s608 = scalar_select %p607, %s41, 1
        %s609 = smul.addr %s608, 4
        %s610 = smul.addr %s609, 8
        %s611 = scalar_lea.vmem %s11, %s610
        %p612 = scmp.eq.s32.totalorder %s42, 0
        // Predicated region
        $region77: #{_lambda_.1} parent=59 // pred_check
          %p613 = pneg %p612
        $region78: #{_lambda_.1} parent=59 // pred_check_branch
          %615 = sbr.rel (%p613) target = $region80
        $region79: #{_lambda_.1} parent=59 // pred_region
          %v616 = vld [vmem:[%s589] sm:$0xff]
          %v617 = vld [vmem:[%s589 + $0x8] sm:$0xff]
          %v618 = vld [vmem:[%s589 + $0x10] sm:$0xff]
          %v619 = vld [vmem:[%s589 + $0x18] sm:$0xff]
          %vm620 = vcmask 261120
          %621 = vst.msk [vmem:[%s611] sm:$0xff] %vm620, %v616
          %622 = vst.msk [vmem:[%s611 + $0x8] sm:$0xff] %vm620, %v617
          %623 = vst.msk [vmem:[%s611 + $0x10] sm:$0xff] %vm620, %v618
          %624 = vst.msk [vmem:[%s611 + $0x18] sm:$0xff] %vm620, %v619
        $region80: #{_lambda_.1} parent=59 // pred_fallthru
          _
        %v625 = vld [vmem:[%s611] sm:$0xff]
        %v626 = vld [vmem:[%s611 + $0x8] sm:$0xff]
        %v627 = vld [vmem:[%s611 + $0x10] sm:$0xff]
        %v628 = vld [vmem:[%s611 + $0x18] sm:$0xff]
        %s629 = sld [smem:[#allocation3 + %s42]]
        %s630 = scvt.s32.f32 %s629
        %s631 = ssub.f32 1.0, %s630
        %v632 = vstv %s631
        %v633 = vmul.f32 %v625, %v632
        %v634 = vmul.f32 %v626, %v632
        %v635 = vstv %s630
        %v636 = vmul.f32 %v627, %v635
        %v637 = vmul.f32 %v628, %v635
        %v638 = vadd.f32 %v633, %v636
        %v639 = vadd.f32 %v634, %v637
        %v640 = vmul.f32 %v627, %v632
        %v641 = vmul.f32 %v628, %v632
        %v642 = vmul.f32 %v625, %v635
        %v643 = vmul.f32 %v626, %v635
        %v644 = vadd.f32 %v640, %v642
        %v645 = vadd.f32 %v641, %v643
        %v646 = vld [vmem:[%s484] sm:$0xff]
        %v647 = vld [vmem:[%s484 + $0x8] sm:$0xff]
        %v648 = vld [vmem:[%s484 + $0x10] sm:$0xff]
        %v649 = vld [vmem:[%s484 + $0x18] sm:$0xff]
        %v650 = vld [vmem:[%s592] sm:$0x1]
        %v651 = vld [vmem:[%s493] sm:$0xff]
        %v652 = vld [vmem:[%s493 + $0x8] sm:$0xff]
        %v653 = vld [vmem:[%s493 + $0x10] sm:$0xff]
        %v654 = vld [vmem:[%s493 + $0x18] sm:$0xff]
        %v655 = vld [vmem:[%s595] sm:$0x1]
        %v656 = vld [vmem:[%s502] sm:$0xff]
        %v657 = vld [vmem:[%s502 + $0x8] sm:$0xff]
        %v658 = vld [vmem:[%s502 + $0x10] sm:$0xff]
        %v659 = vld [vmem:[%s502 + $0x18] sm:$0xff]
        %v660 = vld [vmem:[%s511] sm:$0xff]
        %v661 = vld [vmem:[%s511 + $0x8] sm:$0xff]
        %v662 = vld [vmem:[%s511 + $0x10] sm:$0xff]
        %v663 = vld [vmem:[%s511 + $0x18] sm:$0xff]
        %v664 = vld [vmem:[%s598] sm:$0x1]
        %v665 = vld [vmem:[%s603] sm:$0xff]
        %v666 = vld [vmem:[%s603 + $0x8] sm:$0xff]
        %v667 = vld [vmem:[%s603 + $0x10] sm:$0xff]
        %v668 = vld [vmem:[%s603 + $0x18] sm:$0xff]
        %v669 = vld [vmem:[%s603 + $0x20] sm:$0xff]
        %v670 = vld [vmem:[%s603 + $0x28] sm:$0xff]
        %v671 = vld [vmem:[%s603 + $0x30] sm:$0xff]
        %v672 = vld [vmem:[%s603 + $0x38] sm:$0xff]
        %v673 = vld [vmem:[%s606] sm:$0x1]
        %v675 = vlaneseq
        %v676 = vshrl.u32 %v675, 7
        %v677 = vsub.s32 0, %v676
        %v678 = vrot.slane %v650, %v677
        %vm680 = vcmask 261120
        %v682 = vsel %vm680, %v625, 0
        %v685 = vsel %vm680, %v626, 0
        %687 = vmatprep.subr.mxu0 0.0
        %688 = vmatpush1.msra.mxu0 %v646
        %689 = vmatprep.subr.mxu0 0.0
        %690 = vmatpush1.msra.mxu0 %v647
        %691 = vmatprep.subr.mxu0 0.0
        %692 = vmatpush1.msra.mxu0 %v648
        %693 = vmatprep.subr.mxu0 0.0
        %694 = vmatpush1.msra.mxu0 %v649
        %695 = vmatprep.subr.mxu0 0.0
        %696 = vmatpush1.msra.mxu0 0.0
        %697 = vmatprep.subr.mxu0 0.0
        %698 = vmatpush1.msra.mxu0 0.0
        %699 = vmatprep.subr.mxu0 0.0
        %700 = vmatpush1.msra.mxu0 0.0
        %701 = vmatprep.subr.mxu0 0.0
        %702 = vmatpush1.msra.mxu0 0.0
        %703 = vmatprep.subr.mxu0 0.0
        %704 = vmatpush1.msra.mxu0 0.0
        %705 = vmatprep.subr.mxu0 0.0
        %706 = vmatpush1.msra.mxu0 0.0
        %707 = vmatprep.subr.mxu0 0.0
        %708 = vmatpush1.msra.mxu0 0.0
        %709 = vmatprep.subr.mxu0 0.0
        %710 = vmatpush1.msra.mxu0 0.0
        %711 = vmatprep.subr.mxu0 0.0
        %712 = vmatpush1.msra.mxu0 0.0
        %713 = vmatprep.subr.mxu0 0.0
        %714 = vmatpush1.msra.mxu0 0.0
        %715 = vmatprep.subr.mxu0 0.0
        %716 = vmatpush1.msra.mxu0 0.0
        %717 = vmatprep.subr.mxu0 0.0
        %718 = vmatpush1.msra.mxu0 0.0
        %719 = vmatprep.subr.mxu0 0.0
        %720 = vmatpush1.msra.mxu0 0.0
        %721 = vmatprep.subr.mxu0 0.0
        %722 = vmatpush1.msra.mxu0 0.0
        %723 = vmatprep.subr.mxu0 0.0
        %724 = vmatpush1.msra.mxu0 0.0
        %725 = vmatprep.subr.mxu0 0.0
        %726 = vmatpush1.msra.mxu0 0.0
        %727 = vmatprep.subr.mxu0 0.0
        %728 = vmatpush1.msra.mxu0 0.0
        %729 = vmatprep.subr.mxu0 0.0
        %730 = vmatpush1.msra.mxu0 0.0
        %731 = vmatprep.subr.mxu0 0.0
        %732 = vmatpush1.msra.mxu0 0.0
        %733 = vmatprep.subr.mxu0 0.0
        %734 = vmatpush1.msra.mxu0 0.0
        %735 = vmatprep.subr.mxu0 0.0
        %736 = vmatpush1.msra.mxu0 0.0
        %737 = vmatprep.subr.mxu0 0.0
        %738 = vmatpush1.msra.mxu0 0.0
        %739 = vmatprep.subr.mxu0 0.0
        %740 = vmatpush1.msra.mxu0 0.0
        %741 = vmatprep.subr.mxu0 0.0
        %742 = vmatpush1.msra.mxu0 0.0
        %743 = vmatprep.subr.mxu0 0.0
        %744 = vmatpush1.msra.mxu0 0.0
        %745 = vmatprep.subr.mxu0 0.0
        %746 = vmatpush1.msra.mxu0 0.0
        %747 = vmatprep.subr.mxu0 0.0
        %748 = vmatpush1.msra.mxu0 0.0
        %749 = vmatprep.subr.mxu0 0.0
        %750 = vmatpush1.msra.mxu0 0.0
        %751 = vmatprep.mubr.f32.mxu0 0.0
        %752 = vmatmul.mubr.f32.gmra.mrb[0].mxu0 %v682
        %v753 = vpop.f32.mrb[0].mxu0
        %v754 = vadd.f32 %v678, %v753
        %v755 = vpop.f32.mrb[0].mxu0
        %756 = vmatprep.mubr.f32.mxu0 0.0
        %757 = vmatmul.mubr.f32.gmra.mrb[0].mxu0 %v685
        %v758 = vpop.f32.mrb[0].mxu0
        %v759 = vadd.f32 %v678, %v758
        %v760 = vpop.f32.mrb[0].mxu0
        %761 = vdwg.mxu0
        %v763 = vlaneseq
        %v764 = vshrl.u32 %v763, 7
        %v765 = vsub.s32 0, %v764
        %v766 = vrot.slane %v655, %v765
        %v769 = vsel %vm680, %v638, 0
        %v772 = vsel %vm680, %v639, 0
        %774 = vmatprep.subr.mxu0 0.0
        %775 = vmatpush1.msra.mxu0 %v651
        %776 = vmatprep.subr.mxu0 0.0
        %777 = vmatpush1.msra.mxu0 %v652
        %778 = vmatprep.subr.mxu0 0.0
        %779 = vmatpush1.msra.mxu0 %v653
        %780 = vmatprep.subr.mxu0 0.0
        %781 = vmatpush1.msra.mxu0 %v654
        %782 = vmatprep.subr.mxu0 0.0
        %783 = vmatpush1.msra.mxu0 0.0
        %784 = vmatprep.subr.mxu0 0.0
        %785 = vmatpush1.msra.mxu0 0.0
        %786 = vmatprep.subr.mxu0 0.0
        %787 = vmatpush1.msra.mxu0 0.0
        %788 = vmatprep.subr.mxu0 0.0
        %789 = vmatpush1.msra.mxu0 0.0
        %790 = vmatprep.subr.mxu0 0.0
        %791 = vmatpush1.msra.mxu0 0.0
        %792 = vmatprep.subr.mxu0 0.0
        %793 = vmatpush1.msra.mxu0 0.0
        %794 = vmatprep.subr.mxu0 0.0
        %795 = vmatpush1.msra.mxu0 0.0
        %796 = vmatprep.subr.mxu0 0.0
        %797 = vmatpush1.msra.mxu0 0.0
        %798 = vmatprep.subr.mxu0 0.0
        %799 = vmatpush1.msra.mxu0 0.0
        %800 = vmatprep.subr.mxu0 0.0
        %801 = vmatpush1.msra.mxu0 0.0
        %802 = vmatprep.subr.mxu0 0.0
        %803 = vmatpush1.msra.mxu0 0.0
        %804 = vmatprep.subr.mxu0 0.0
        %805 = vmatpush1.msra.mxu0 0.0
        %806 = vmatprep.subr.mxu0 0.0
        %807 = vmatpush1.msra.mxu0 0.0
        %808 = vmatprep.subr.mxu0 0.0
        %809 = vmatpush1.msra.mxu0 0.0
        %810 = vmatprep.subr.mxu0 0.0
        %811 = vmatpush1.msra.mxu0 0.0
        %812 = vmatprep.subr.mxu0 0.0
        %813 = vmatpush1.msra.mxu0 0.0
        %814 = vmatprep.subr.mxu0 0.0
        %815 = vmatpush1.msra.mxu0 0.0
        %816 = vmatprep.subr.mxu0 0.0
        %817 = vmatpush1.msra.mxu0 0.0
        %818 = vmatprep.subr.mxu0 0.0
        %819 = vmatpush1.msra.mxu0 0.0
        %820 = vmatprep.subr.mxu0 0.0
        %821 = vmatpush1.msra.mxu0 0.0
        %822 = vmatprep.subr.mxu0 0.0
        %823 = vmatpush1.msra.mxu0 0.0
        %824 = vmatprep.subr.mxu0 0.0
        %825 = vmatpush1.msra.mxu0 0.0
        %826 = vmatprep.subr.mxu0 0.0
        %827 = vmatpush1.msra.mxu0 0.0
        %828 = vmatprep.subr.mxu0 0.0
        %829 = vmatpush1.msra.mxu0 0.0
        %830 = vmatprep.subr.mxu0 0.0
        %831 = vmatpush1.msra.mxu0 0.0
        %832 = vmatprep.subr.mxu0 0.0
        %833 = vmatpush1.msra.mxu0 0.0
        %834 = vmatprep.subr.mxu0 0.0
        %835 = vmatpush1.msra.mxu0 0.0
        %836 = vmatprep.subr.mxu0 0.0
        %837 = vmatpush1.msra.mxu0 0.0
        %838 = vmatprep.mubr.f32.mxu0 0.0
        %839 = vmatmul.mubr.f32.gmra.mrb[0].mxu0 %v769
        %v840 = vpop.f32.mrb[0].mxu0
        %v841 = vadd.f32 %v766, %v840
        %v842 = vpop.f32.mrb[0].mxu0
        %843 = vmatprep.mubr.f32.mxu0 0.0
        %844 = vmatmul.mubr.f32.gmra.mrb[0].mxu0 %v772
        %v845 = vpop.f32.mrb[0].mxu0
        %v846 = vadd.f32 %v766, %v845
        %v847 = vpop.f32.mrb[0].mxu0
        %848 = vdwg.mxu0
        %v850 = vlaneseq
        %v851 = vshrl.u32 %v850, 7
        %v852 = vsub.s32 0, %v851
        %v853 = vrot.slane %v664, %v852
        %855 = vmatprep.subr.mxu0 0.0
        %856 = vmatpush1.msra.mxu0 %v656
        %857 = vmatprep.subr.mxu0 0.0
        %858 = vmatpush1.msra.mxu0 %v657
        %859 = vmatprep.subr.mxu0 0.0
        %860 = vmatpush1.msra.mxu0 %v658
        %861 = vmatprep.subr.mxu0 0.0
        %862 = vmatpush1.msra.mxu0 %v659
        %863 = vmatprep.subr.mxu0 0.0
        %864 = vmatpush1.msra.mxu0 0.0
        %865 = vmatprep.subr.mxu0 0.0
        %866 = vmatpush1.msra.mxu0 0.0
        %867 = vmatprep.subr.mxu0 0.0
        %868 = vmatpush1.msra.mxu0 0.0
        %869 = vmatprep.subr.mxu0 0.0
        %870 = vmatpush1.msra.mxu0 0.0
        %871 = vmatprep.subr.mxu0 0.0
        %872 = vmatpush1.msra.mxu0 0.0
        %873 = vmatprep.subr.mxu0 0.0
        %874 = vmatpush1.msra.mxu0 0.0
        %875 = vmatprep.subr.mxu0 0.0
        %876 = vmatpush1.msra.mxu0 0.0
        %877 = vmatprep.subr.mxu0 0.0
        %878 = vmatpush1.msra.mxu0 0.0
        %879 = vmatprep.subr.mxu0 0.0
        %880 = vmatpush1.msra.mxu0 0.0
        %881 = vmatprep.subr.mxu0 0.0
        %882 = vmatpush1.msra.mxu0 0.0
        %883 = vmatprep.subr.mxu0 0.0
        %884 = vmatpush1.msra.mxu0 0.0
        %885 = vmatprep.subr.mxu0 0.0
        %886 = vmatpush1.msra.mxu0 0.0
        %887 = vmatprep.subr.mxu0 0.0
        %888 = vmatpush1.msra.mxu0 0.0
        %889 = vmatprep.subr.mxu0 0.0
        %890 = vmatpush1.msra.mxu0 0.0
        %891 = vmatprep.subr.mxu0 0.0
        %892 = vmatpush1.msra.mxu0 0.0
        %893 = vmatprep.subr.mxu0 0.0
        %894 = vmatpush1.msra.mxu0 0.0
        %895 = vmatprep.subr.mxu0 0.0
        %896 = vmatpush1.msra.mxu0 0.0
        %897 = vmatprep.subr.mxu0 0.0
        %898 = vmatpush1.msra.mxu0 0.0
        %899 = vmatprep.subr.mxu0 0.0
        %900 = vmatpush1.msra.mxu0 0.0
        %901 = vmatprep.subr.mxu0 0.0
        %902 = vmatpush1.msra.mxu0 0.0
        %903 = vmatprep.subr.mxu0 0.0
        %904 = vmatpush1.msra.mxu0 0.0
        %905 = vmatprep.subr.mxu0 0.0
        %906 = vmatpush1.msra.mxu0 0.0
        %907 = vmatprep.subr.mxu0 0.0
        %908 = vmatpush1.msra.mxu0 0.0
        %909 = vmatprep.subr.mxu0 0.0
        %910 = vmatpush1.msra.mxu0 0.0
        %911 = vmatprep.subr.mxu0 0.0
        %912 = vmatpush1.msra.mxu0 0.0
        %913 = vmatprep.subr.mxu0 0.0
        %914 = vmatpush1.msra.mxu0 0.0
        %915 = vmatprep.subr.mxu0 0.0
        %916 = vmatpush1.msra.mxu0 0.0
        %917 = vmatprep.subr.mxu0 0.0
        %918 = vmatpush1.msra.mxu0 0.0
        %919 = vmatprep.mubr.f32.mxu0 0.0
        %920 = vmatmul.mubr.f32.gmra.mrb[0].mxu0 %v682
        %v921 = vpop.f32.mrb[0].mxu0
        %v922 = vadd.f32 %v853, %v921
        %v923 = vpop.f32.mrb[0].mxu0
        %924 = vmatprep.mubr.f32.mxu0 0.0
        %925 = vmatmul.mubr.f32.gmra.mrb[0].mxu0 %v685
        %v926 = vpop.f32.mrb[0].mxu0
        %v927 = vadd.f32 %v853, %v926
        %v928 = vpop.f32.mrb[0].mxu0
        %929 = vdwg.mxu0
        %vm930 = vcmask 64512
        %v932 = vsel %vm930, %v754, 0
        %v935 = vsel %vm930, %v759, 0
        %v938 = vsel %vm930, %v841, 0
        %v941 = vsel %vm930, %v846, 0
        %943 = vmatprep.subr.mxu0 0.0
        %944 = vmatpush1.xpose.msra.mxu0 %v938
        %945 = vmatprep.subr.mxu0 0.0
        %946 = vmatpush1.xpose.msra.mxu0 %v941
        %947 = vmatprep.subr.mxu0 0.0
        %948 = vmatpush1.xpose.msra.mxu0 0.0
        %949 = vmatprep.subr.mxu0 0.0
        %950 = vmatpush1.xpose.msra.mxu0 0.0
        %951 = vmatprep.subr.mxu0 0.0
        %952 = vmatpush1.xpose.msra.mxu0 0.0
        %953 = vmatprep.subr.mxu0 0.0
        %954 = vmatpush1.xpose.msra.mxu0 0.0
        %955 = vmatprep.subr.mxu0 0.0
        %956 = vmatpush1.xpose.msra.mxu0 0.0
        %957 = vmatprep.subr.mxu0 0.0
        %958 = vmatpush1.xpose.msra.mxu0 0.0
        %959 = vmatprep.subr.mxu0 0.0
        %960 = vmatpush1.xpose.msra.mxu0 0.0
        %961 = vmatprep.subr.mxu0 0.0
        %962 = vmatpush1.xpose.msra.mxu0 0.0
        %963 = vmatprep.subr.mxu0 0.0
        %964 = vmatpush1.xpose.msra.mxu0 0.0
        %965 = vmatprep.subr.mxu0 0.0
        %966 = vmatpush1.xpose.msra.mxu0 0.0
        %967 = vmatprep.subr.mxu0 0.0
        %968 = vmatpush1.xpose.msra.mxu0 0.0
        %969 = vmatprep.subr.mxu0 0.0
        %970 = vmatpush1.xpose.msra.mxu0 0.0
        %971 = vmatprep.subr.mxu0 0.0
        %972 = vmatpush1.xpose.msra.mxu0 0.0
        %973 = vmatprep.subr.mxu0 0.0
        %974 = vmatpush1.xpose.msra.mxu0 0.0
        %975 = vmatprep.subr.mxu0 0.0
        %976 = vmatpush1.xpose.msra.mxu0 0.0
        %977 = vmatprep.subr.mxu0 0.0
        %978 = vmatpush1.xpose.msra.mxu0 0.0
        %979 = vmatprep.subr.mxu0 0.0
        %980 = vmatpush1.xpose.msra.mxu0 0.0
        %981 = vmatprep.subr.mxu0 0.0
        %982 = vmatpush1.xpose.msra.mxu0 0.0
        %983 = vmatprep.subr.mxu0 0.0
        %984 = vmatpush1.xpose.msra.mxu0 0.0
        %985 = vmatprep.subr.mxu0 0.0
        %986 = vmatpush1.xpose.msra.mxu0 0.0
        %987 = vmatprep.subr.mxu0 0.0
        %988 = vmatpush1.xpose.msra.mxu0 0.0
        %989 = vmatprep.subr.mxu0 0.0
        %990 = vmatpush1.xpose.msra.mxu0 0.0
        %991 = vmatprep.subr.mxu0 0.0
        %992 = vmatpush1.xpose.msra.mxu0 0.0
        %993 = vmatprep.subr.mxu0 0.0
        %994 = vmatpush1.xpose.msra.mxu0 0.0
        %995 = vmatprep.subr.mxu0 0.0
        %996 = vmatpush1.xpose.msra.mxu0 0.0
        %997 = vmatprep.subr.mxu0 0.0
        %998 = vmatpush1.xpose.msra.mxu0 0.0
        %999 = vmatprep.subr.mxu0 0.0
        %1000 = vmatpush1.xpose.msra.mxu0 0.0
        %1001 = vmatprep.subr.mxu0 0.0
        %1002 = vmatpush1.xpose.msra.mxu0 0.0
        %1003 = vmatprep.subr.mxu0 0.0
        %1004 = vmatpush1.xpose.msra.mxu0 0.0
        %1005 = vmatprep.subr.mxu0 0.0
        %1006 = vmatpush1.xpose.msra.mxu0 0.0
        %1007 = vmatprep.mubr.f32.mxu0 0.0
        %1008 = vmatmul.mubr.f32.gmra.mrb[0].mxu0 %v932
        %v1009 = vpop.f32.mrb[0].mxu0
        %v1010 = vadd.f32 0.0, %v1009
        %v1011 = vpop.f32.mrb[0].mxu0
        %1012 = vmatprep.mubr.f32.mxu0 0.0
        %1013 = vmatmul.mubr.f32.gmra.mrb[0].mxu0 %v935
        %v1014 = vpop.f32.mrb[0].mxu0
        %v1015 = vadd.f32 0.0, %v1014
        %v1016 = vpop.f32.mrb[0].mxu0
        %1017 = vdwg.mxu0
        %v1018 = vmul.f32 %v1010, 0.35355338
        %v1019 = vmul.f32 %v1015, 0.35355338
        %vm1020 = vcmask 130048
        %v1021 = vsel %vm1020, %v1018, -inf
        %1022 = vmax.xlane.f32.xlu0 %v1021
        %v1023 = vpop.xlane.xlu0 %1022
        %v1024 = vsel %vm1020, %v1019, -inf
        %1025 = vmax.xlane.f32.xlu0 %v1024
        %v1026 = vpop.xlane.xlu0 %1025
        %v1027 = vsub.f32 %v1018, %v1023
        %v1028 = vsub.f32 %v1019, %v1026
        %v1029 = vmul.f32 %v1027, 1.442695
        %v1030 = vpow.pop %v1029
        %v1031 = vmul.f32 %v1028, 1.442695
        %v1032 = vpow.pop %v1031
        %1033 = vrot.lane.b32.xlu0 %v841, 96
        %v1034 = vpop.permute.xlu0 %1033
        %1035 = vrot.lane.b32.xlu0 %v846, 96
        %v1036 = vpop.permute.xlu0 %1035
        %v1040 = vsel %vm1020, %v1030, 0
        %v1043 = vsel %vm1020, %v1032, 0
        %1045 = vmatprep.subr.mxu0 0.0
        %1046 = vmatpush1.msra.mxu0 %v1034
        %1047 = vmatprep.subr.mxu0 0.0
        %1048 = vmatpush1.msra.mxu0 %v1036
        %1049 = vmatprep.subr.mxu0 0.0
        %1050 = vmatpush1.msra.mxu0 0.0
        %1051 = vmatprep.subr.mxu0 0.0
        %1052 = vmatpush1.msra.mxu0 0.0
        %1053 = vmatprep.subr.mxu0 0.0
        %1054 = vmatpush1.msra.mxu0 0.0
        %1055 = vmatprep.subr.mxu0 0.0
        %1056 = vmatpush1.msra.mxu0 0.0
        %1057 = vmatprep.subr.mxu0 0.0
        %1058 = vmatpush1.msra.mxu0 0.0
        %1059 = vmatprep.subr.mxu0 0.0
        %1060 = vmatpush1.msra.mxu0 0.0
        %1061 = vmatprep.subr.mxu0 0.0
        %1062 = vmatpush1.msra.mxu0 0.0
        %1063 = vmatprep.subr.mxu0 0.0
        %1064 = vmatpush1.msra.mxu0 0.0
        %1065 = vmatprep.subr.mxu0 0.0
        %1066 = vmatpush1.msra.mxu0 0.0
        %1067 = vmatprep.subr.mxu0 0.0
        %1068 = vmatpush1.msra.mxu0 0.0
        %1069 = vmatprep.subr.mxu0 0.0
        %1070 = vmatpush1.msra.mxu0 0.0
        %1071 = vmatprep.subr.mxu0 0.0
        %1072 = vmatpush1.msra.mxu0 0.0
        %1073 = vmatprep.subr.mxu0 0.0
        %1074 = vmatpush1.msra.mxu0 0.0
        %1075 = vmatprep.subr.mxu0 0.0
        %1076 = vmatpush1.msra.mxu0 0.0
        %1077 = vmatprep.subr.mxu0 0.0
        %1078 = vmatpush1.msra.mxu0 0.0
        %1079 = vmatprep.subr.mxu0 0.0
        %1080 = vmatpush1.msra.mxu0 0.0
        %1081 = vmatprep.subr.mxu0 0.0
        %1082 = vmatpush1.msra.mxu0 0.0
        %1083 = vmatprep.subr.mxu0 0.0
        %1084 = vmatpush1.msra.mxu0 0.0
        %1085 = vmatprep.subr.mxu0 0.0
        %1086 = vmatpush1.msra.mxu0 0.0
        %1087 = vmatprep.subr.mxu0 0.0
        %1088 = vmatpush1.msra.mxu0 0.0
        %1089 = vmatprep.subr.mxu0 0.0
        %1090 = vmatpush1.msra.mxu0 0.0
        %1091 = vmatprep.subr.mxu0 0.0
        %1092 = vmatpush1.msra.mxu0 0.0
        %1093 = vmatprep.subr.mxu0 0.0
        %1094 = vmatpush1.msra.mxu0 0.0
        %1095 = vmatprep.subr.mxu0 0.0
        %1096 = vmatpush1.msra.mxu0 0.0
        %1097 = vmatprep.subr.mxu0 0.0
        %1098 = vmatpush1.msra.mxu0 0.0
        %1099 = vmatprep.subr.mxu0 0.0
        %1100 = vmatpush1.msra.mxu0 0.0
        %1101 = vmatprep.subr.mxu0 0.0
        %1102 = vmatpush1.msra.mxu0 0.0
        %1103 = vmatprep.subr.mxu0 0.0
        %1104 = vmatpush1.msra.mxu0 0.0
        %1105 = vmatprep.subr.mxu0 0.0
        %1106 = vmatpush1.msra.mxu0 0.0
        %1107 = vmatprep.subr.mxu0 0.0
        %1108 = vmatpush1.msra.mxu0 0.0
        %1109 = vmatprep.mubr.f32.mxu0 0.0
        %1110 = vmatmul.mubr.f32.gmra.mrb[0].mxu0 %v1040
        %v1111 = vpop.f32.mrb[0].mxu0
        %v1112 = vadd.f32 0.0, %v1111
        %v1113 = vpop.f32.mrb[0].mxu0
        %1114 = vmatprep.mubr.f32.mxu0 0.0
        %1115 = vmatmul.mubr.f32.gmra.mrb[0].mxu0 %v1043
        %v1116 = vpop.f32.mrb[0].mxu0
        %v1117 = vadd.f32 0.0, %v1116
        %v1118 = vpop.f32.mrb[0].mxu0
        %1119 = vdwg.mxu0
        %v1120 = vsel %vm1020, %v1030, 0.0
        %1121 = vadd.xlane.f32.xlu0 %v1120
        %v1122 = vpop.xlane.xlu0 %1121
        %v1123 = vsel %vm1020, %v1032, 0.0
        %1124 = vadd.xlane.f32.xlu0 %v1123
        %v1125 = vpop.xlane.xlu0 %1124
        %v1126 = vrcp.pop %v1122
        %v1127 = vmul.f32 %v1112, %v1126
        %v1128 = vrcp.pop %v1125
        %v1129 = vmul.f32 %v1117, %v1128
        %v1131 = vsel %vm930, %v1127, 0
        %v1134 = vsel %vm930, %v1129, 0
        %1136 = vmatprep.subr.mxu0 0.0
        %1137 = vmatpush1.msra.mxu0 %v660
        %1138 = vmatprep.subr.mxu0 0.0
        %1139 = vmatpush1.msra.mxu0 0.0
        %1140 = vmatprep.subr.mxu0 0.0
        %1141 = vmatpush1.msra.mxu0 0.0
        %1142 = vmatprep.subr.mxu0 0.0
        %1143 = vmatpush1.msra.mxu0 0.0
        %1144 = vmatprep.subr.mxu0 0.0
        %1145 = vmatpush1.msra.mxu0 0.0
        %1146 = vmatprep.subr.mxu0 0.0
        %1147 = vmatpush1.msra.mxu0 0.0
        %1148 = vmatprep.subr.mxu0 0.0
        %1149 = vmatpush1.msra.mxu0 0.0
        %1150 = vmatprep.subr.mxu0 0.0
        %1151 = vmatpush1.msra.mxu0 0.0
        %1152 = vmatprep.subr.mxu0 0.0
        %1153 = vmatpush1.msra.mxu0 0.0
        %1154 = vmatprep.subr.mxu0 0.0
        %1155 = vmatpush1.msra.mxu0 0.0
        %1156 = vmatprep.subr.mxu0 0.0
        %1157 = vmatpush1.msra.mxu0 0.0
        %1158 = vmatprep.subr.mxu0 0.0
        %1159 = vmatpush1.msra.mxu0 0.0
        %1160 = vmatprep.subr.mxu0 0.0
        %1161 = vmatpush1.msra.mxu0 0.0
        %1162 = vmatprep.subr.mxu0 0.0
        %1163 = vmatpush1.msra.mxu0 0.0
        %1164 = vmatprep.subr.mxu0 0.0
        %1165 = vmatpush1.msra.mxu0 0.0
        %1166 = vmatprep.subr.mxu0 0.0
        %1167 = vmatpush1.msra.mxu0 0.0
        %1168 = vmatprep.subr.mxu0 0.0
        %1169 = vmatpush1.msra.mxu0 0.0
        %1170 = vmatprep.subr.mxu0 0.0
        %1171 = vmatpush1.msra.mxu0 0.0
        %1172 = vmatprep.subr.mxu0 0.0
        %1173 = vmatpush1.msra.mxu0 0.0
        %1174 = vmatprep.subr.mxu0 0.0
        %1175 = vmatpush1.msra.mxu0 0.0
        %1176 = vmatprep.subr.mxu0 0.0
        %1177 = vmatpush1.msra.mxu0 0.0
        %1178 = vmatprep.subr.mxu0 0.0
        %1179 = vmatpush1.msra.mxu0 0.0
        %1180 = vmatprep.subr.mxu0 0.0
        %1181 = vmatpush1.msra.mxu0 0.0
        %1182 = vmatprep.subr.mxu0 0.0
        %1183 = vmatpush1.msra.mxu0 0.0
        %1184 = vmatprep.subr.mxu0 0.0
        %1185 = vmatpush1.msra.mxu0 0.0
        %1186 = vmatprep.subr.mxu0 0.0
        %1187 = vmatpush1.msra.mxu0 0.0
        %1188 = vmatprep.subr.mxu0 0.0
        %1189 = vmatpush1.msra.mxu0 0.0
        %1190 = vmatprep.subr.mxu0 0.0
        %1191 = vmatpush1.msra.mxu0 0.0
        %1192 = vmatprep.subr.mxu0 0.0
        %1193 = vmatpush1.msra.mxu0 0.0
        %1194 = vmatprep.subr.mxu0 0.0
        %1195 = vmatpush1.msra.mxu0 0.0
        %1196 = vmatprep.subr.mxu0 0.0
        %1197 = vmatpush1.msra.mxu0 0.0
        %1198 = vmatprep.subr.mxu0 0.0
        %1199 = vmatpush1.msra.mxu0 0.0
        %1200 = vmatprep.mubr.f32.mxu0 0.0
        %1201 = vmatmul.mubr.f32.gmra.mrb[0].mxu0 %v1131
        %v1202 = vpop.f32.mrb[0].mxu0
        %v1203 = vadd.f32 0.0, %v1202
        %v1204 = vpop.f32.mrb[0].mxu0
        %1205 = vmatprep.mubr.f32.mxu0 0.0
        %1206 = vmatmul.mubr.f32.gmra.mrb[0].mxu0 %v1134
        %v1207 = vpop.f32.mrb[0].mxu0
        %v1208 = vadd.f32 0.0, %v1207
        %v1209 = vpop.f32.mrb[0].mxu0
        %1210 = vdwg.mxu0
        %v1211 = vadd.f32 %v922, %v1203
        %v1212 = vadd.f32 %v927, %v1208
        %1213 = vrot.lane.b32.xlu0 %v754, 120
        %v1214 = vpop.permute.xlu0 %1213
        %1215 = vrot.lane.b32.xlu0 %v759, 120
        %v1216 = vpop.permute.xlu0 %1215
        %1217 = vrot.lane.b32.xlu0 %v841, 120
        %v1218 = vpop.permute.xlu0 %1217
        %1219 = vrot.lane.b32.xlu0 %v846, 120
        %v1220 = vpop.permute.xlu0 %1219
        %v1221 = vsel %vm930, %v1214, 0
        %v1223 = vsel %vm930, %v1216, 0
        %v1225 = vsel %vm930, %v1218, 0
        %v1227 = vsel %vm930, %v1220, 0
        %1229 = vmatprep.subr.mxu0 0.0
        %1230 = vmatpush1.xpose.msra.mxu0 %v1225
        %1231 = vmatprep.subr.mxu0 0.0
        %1232 = vmatpush1.xpose.msra.mxu0 %v1227
        %1233 = vmatprep.subr.mxu0 0.0
        %1234 = vmatpush1.xpose.msra.mxu0 0.0
        %1235 = vmatprep.subr.mxu0 0.0
        %1236 = vmatpush1.xpose.msra.mxu0 0.0
        %1237 = vmatprep.subr.mxu0 0.0
        %1238 = vmatpush1.xpose.msra.mxu0 0.0
        %1239 = vmatprep.subr.mxu0 0.0
        %1240 = vmatpush1.xpose.msra.mxu0 0.0
        %1241 = vmatprep.subr.mxu0 0.0
        %1242 = vmatpush1.xpose.msra.mxu0 0.0
        %1243 = vmatprep.subr.mxu0 0.0
        %1244 = vmatpush1.xpose.msra.mxu0 0.0
        %1245 = vmatprep.subr.mxu0 0.0
        %1246 = vmatpush1.xpose.msra.mxu0 0.0
        %1247 = vmatprep.subr.mxu0 0.0
        %1248 = vmatpush1.xpose.msra.mxu0 0.0
        %1249 = vmatprep.subr.mxu0 0.0
        %1250 = vmatpush1.xpose.msra.mxu0 0.0
        %1251 = vmatprep.subr.mxu0 0.0
        %1252 = vmatpush1.xpose.msra.mxu0 0.0
        %1253 = vmatprep.subr.mxu0 0.0
        %1254 = vmatpush1.xpose.msra.mxu0 0.0
        %1255 = vmatprep.subr.mxu0 0.0
        %1256 = vmatpush1.xpose.msra.mxu0 0.0
        %1257 = vmatprep.subr.mxu0 0.0
        %1258 = vmatpush1.xpose.msra.mxu0 0.0
        %1259 = vmatprep.subr.mxu0 0.0
        %1260 = vmatpush1.xpose.msra.mxu0 0.0
        %1261 = vmatprep.subr.mxu0 0.0
        %1262 = vmatpush1.xpose.msra.mxu0 0.0
        %1263 = vmatprep.subr.mxu0 0.0
        %1264 = vmatpush1.xpose.msra.mxu0 0.0
        %1265 = vmatprep.subr.mxu0 0.0
        %1266 = vmatpush1.xpose.msra.mxu0 0.0
        %1267 = vmatprep.subr.mxu0 0.0
        %1268 = vmatpush1.xpose.msra.mxu0 0.0
        %1269 = vmatprep.subr.mxu0 0.0
        %1270 = vmatpush1.xpose.msra.mxu0 0.0
        %1271 = vmatprep.subr.mxu0 0.0
        %1272 = vmatpush1.xpose.msra.mxu0 0.0
        %1273 = vmatprep.subr.mxu0 0.0
        %1274 = vmatpush1.xpose.msra.mxu0 0.0
        %1275 = vmatprep.subr.mxu0 0.0
        %1276 = vmatpush1.xpose.msra.mxu0 0.0
        %1277 = vmatprep.subr.mxu0 0.0
        %1278 = vmatpush1.xpose.msra.mxu0 0.0
        %1279 = vmatprep.subr.mxu0 0.0
        %1280 = vmatpush1.xpose.msra.mxu0 0.0
        %1281 = vmatprep.subr.mxu0 0.0
        %1282 = vmatpush1.xpose.msra.mxu0 0.0
        %1283 = vmatprep.subr.mxu0 0.0
        %1284 = vmatpush1.xpose.msra.mxu0 0.0
        %1285 = vmatprep.subr.mxu0 0.0
        %1286 = vmatpush1.xpose.msra.mxu0 0.0
        %1287 = vmatprep.subr.mxu0 0.0
        %1288 = vmatpush1.xpose.msra.mxu0 0.0
        %1289 = vmatprep.subr.mxu0 0.0
        %1290 = vmatpush1.xpose.msra.mxu0 0.0
        %1291 = vmatprep.subr.mxu0 0.0
        %1292 = vmatpush1.xpose.msra.mxu0 0.0
        %1293 = vmatprep.mubr.f32.mxu0 0.0
        %1294 = vmatmul.mubr.f32.gmra.mrb[0].mxu0 %v1221
        %v1295 = vpop.f32.mrb[0].mxu0
        %v1296 = vadd.f32 0.0, %v1295
        %v1297 = vpop.f32.mrb[0].mxu0
        %1298 = vmatprep.mubr.f32.mxu0 0.0
        %1299 = vmatmul.mubr.f32.gmra.mrb[0].mxu0 %v1223
        %v1300 = vpop.f32.mrb[0].mxu0
        %v1301 = vadd.f32 0.0, %v1300
        %v1302 = vpop.f32.mrb[0].mxu0
        %1303 = vdwg.mxu0
        %v1304 = vmul.f32 %v1296, 0.35355338
        %v1305 = vmul.f32 %v1301, 0.35355338
        %v1306 = vsel %vm1020, %v1304, -inf
        %1307 = vmax.xlane.f32.xlu0 %v1306
        %v1308 = vpop.xlane.xlu0 %1307
        %v1309 = vsel %vm1020, %v1305, -inf
        %1310 = vmax.xlane.f32.xlu0 %v1309
        %v1311 = vpop.xlane.xlu0 %1310
        %v1312 = vsub.f32 %v1304, %v1308
        %v1313 = vsub.f32 %v1305, %v1311
        %v1314 = vmul.f32 %v1312, 1.442695
        %v1315 = vpow.pop %v1314
        %v1316 = vmul.f32 %v1313, 1.442695
        %v1317 = vpow.pop %v1316
        %1318 = vrot.lane.b32.xlu0 %v841, 88
        %v1319 = vpop.permute.xlu0 %1318
        %1320 = vrot.lane.b32.xlu0 %v846, 88
        %v1321 = vpop.permute.xlu0 %1320
        %v1325 = vsel %vm1020, %v1315, 0
        %v1328 = vsel %vm1020, %v1317, 0
        %1330 = vmatprep.subr.mxu0 0.0
        %1331 = vmatpush1.msra.mxu0 %v1319
        %1332 = vmatprep.subr.mxu0 0.0
        %1333 = vmatpush1.msra.mxu0 %v1321
        %1334 = vmatprep.subr.mxu0 0.0
        %1335 = vmatpush1.msra.mxu0 0.0
        %1336 = vmatprep.subr.mxu0 0.0
        %1337 = vmatpush1.msra.mxu0 0.0
        %1338 = vmatprep.subr.mxu0 0.0
        %1339 = vmatpush1.msra.mxu0 0.0
        %1340 = vmatprep.subr.mxu0 0.0
        %1341 = vmatpush1.msra.mxu0 0.0
        %1342 = vmatprep.subr.mxu0 0.0
        %1343 = vmatpush1.msra.mxu0 0.0
        %1344 = vmatprep.subr.mxu0 0.0
        %1345 = vmatpush1.msra.mxu0 0.0
        %1346 = vmatprep.subr.mxu0 0.0
        %1347 = vmatpush1.msra.mxu0 0.0
        %1348 = vmatprep.subr.mxu0 0.0
        %1349 = vmatpush1.msra.mxu0 0.0
        %1350 = vmatprep.subr.mxu0 0.0
        %1351 = vmatpush1.msra.mxu0 0.0
        %1352 = vmatprep.subr.mxu0 0.0
        %1353 = vmatpush1.msra.mxu0 0.0
        %1354 = vmatprep.subr.mxu0 0.0
        %1355 = vmatpush1.msra.mxu0 0.0
        %1356 = vmatprep.subr.mxu0 0.0
        %1357 = vmatpush1.msra.mxu0 0.0
        %1358 = vmatprep.subr.mxu0 0.0
        %1359 = vmatpush1.msra.mxu0 0.0
        %1360 = vmatprep.subr.mxu0 0.0
        %1361 = vmatpush1.msra.mxu0 0.0
        %1362 = vmatprep.subr.mxu0 0.0
        %1363 = vmatpush1.msra.mxu0 0.0
        %1364 = vmatprep.subr.mxu0 0.0
        %1365 = vmatpush1.msra.mxu0 0.0
        %1366 = vmatprep.subr.mxu0 0.0
        %1367 = vmatpush1.msra.mxu0 0.0
        %1368 = vmatprep.subr.mxu0 0.0
        %1369 = vmatpush1.msra.mxu0 0.0
        %1370 = vmatprep.subr.mxu0 0.0
        %1371 = vmatpush1.msra.mxu0 0.0
        %1372 = vmatprep.subr.mxu0 0.0
        %1373 = vmatpush1.msra.mxu0 0.0
        %1374 = vmatprep.subr.mxu0 0.0
        %1375 = vmatpush1.msra.mxu0 0.0
        %1376 = vmatprep.subr.mxu0 0.0
        %1377 = vmatpush1.msra.mxu0 0.0
        %1378 = vmatprep.subr.mxu0 0.0
        %1379 = vmatpush1.msra.mxu0 0.0
        %1380 = vmatprep.subr.mxu0 0.0
        %1381 = vmatpush1.msra.mxu0 0.0
        %1382 = vmatprep.subr.mxu0 0.0
        %1383 = vmatpush1.msra.mxu0 0.0
        %1384 = vmatprep.subr.mxu0 0.0
        %1385 = vmatpush1.msra.mxu0 0.0
        %1386 = vmatprep.subr.mxu0 0.0
        %1387 = vmatpush1.msra.mxu0 0.0
        %1388 = vmatprep.subr.mxu0 0.0
        %1389 = vmatpush1.msra.mxu0 0.0
        %1390 = vmatprep.subr.mxu0 0.0
        %1391 = vmatpush1.msra.mxu0 0.0
        %1392 = vmatprep.subr.mxu0 0.0
        %1393 = vmatpush1.msra.mxu0 0.0
        %1394 = vmatprep.mubr.f32.mxu0 0.0
        %1395 = vmatmul.mubr.f32.gmra.mrb[0].mxu0 %v1325
        %v1396 = vpop.f32.mrb[0].mxu0
        %v1397 = vadd.f32 0.0, %v1396
        %v1398 = vpop.f32.mrb[0].mxu0
        %1399 = vmatprep.mubr.f32.mxu0 0.0
        %1400 = vmatmul.mubr.f32.gmra.mrb[0].mxu0 %v1328
        %v1401 = vpop.f32.mrb[0].mxu0
        %v1402 = vadd.f32 0.0, %v1401
        %v1403 = vpop.f32.mrb[0].mxu0
        %1404 = vdwg.mxu0
        %v1405 = vsel %vm1020, %v1315, 0.0
        %1406 = vadd.xlane.f32.xlu0 %v1405
        %v1407 = vpop.xlane.xlu0 %1406
        %v1408 = vsel %vm1020, %v1317, 0.0
        %1409 = vadd.xlane.f32.xlu0 %v1408
        %v1410 = vpop.xlane.xlu0 %1409
        %v1411 = vrcp.pop %v1407
        %v1412 = vmul.f32 %v1397, %v1411
        %v1413 = vrcp.pop %v1410
        %v1414 = vmul.f32 %v1402, %v1413
        %v1416 = vsel %vm930, %v1412, 0
        %v1419 = vsel %vm930, %v1414, 0
        %1421 = vmatprep.subr.mxu0 0.0
        %1422 = vmatpush1.msra.mxu0 %v661
        %1423 = vmatprep.subr.mxu0 0.0
        %1424 = vmatpush1.msra.mxu0 0.0
        %1425 = vmatprep.subr.mxu0 0.0
        %1426 = vmatpush1.msra.mxu0 0.0
        %1427 = vmatprep.subr.mxu0 0.0
        %1428 = vmatpush1.msra.mxu0 0.0
        %1429 = vmatprep.subr.mxu0 0.0
        %1430 = vmatpush1.msra.mxu0 0.0
        %1431 = vmatprep.subr.mxu0 0.0
        %1432 = vmatpush1.msra.mxu0 0.0
        %1433 = vmatprep.subr.mxu0 0.0
        %1434 = vmatpush1.msra.mxu0 0.0
        %1435 = vmatprep.subr.mxu0 0.0
        %1436 = vmatpush1.msra.mxu0 0.0
        %1437 = vmatprep.subr.mxu0 0.0
        %1438 = vmatpush1.msra.mxu0 0.0
        %1439 = vmatprep.subr.mxu0 0.0
        %1440 = vmatpush1.msra.mxu0 0.0
        %1441 = vmatprep.subr.mxu0 0.0
        %1442 = vmatpush1.msra.mxu0 0.0
        %1443 = vmatprep.subr.mxu0 0.0
        %1444 = vmatpush1.msra.mxu0 0.0
        %1445 = vmatprep.subr.mxu0 0.0
        %1446 = vmatpush1.msra.mxu0 0.0
        %1447 = vmatprep.subr.mxu0 0.0
        %1448 = vmatpush1.msra.mxu0 0.0
        %1449 = vmatprep.subr.mxu0 0.0
        %1450 = vmatpush1.msra.mxu0 0.0
        %1451 = vmatprep.subr.mxu0 0.0
        %1452 = vmatpush1.msra.mxu0 0.0
        %1453 = vmatprep.subr.mxu0 0.0
        %1454 = vmatpush1.msra.mxu0 0.0
        %1455 = vmatprep.subr.mxu0 0.0
        %1456 = vmatpush1.msra.mxu0 0.0
        %1457 = vmatprep.subr.mxu0 0.0
        %1458 = vmatpush1.msra.mxu0 0.0
        %1459 = vmatprep.subr.mxu0 0.0
        %1460 = vmatpush1.msra.mxu0 0.0
        %1461 = vmatprep.subr.mxu0 0.0
        %1462 = vmatpush1.msra.mxu0 0.0
        %1463 = vmatprep.subr.mxu0 0.0
        %1464 = vmatpush1.msra.mxu0 0.0
        %1465 = vmatprep.subr.mxu0 0.0
        %1466 = vmatpush1.msra.mxu0 0.0
        %1467 = vmatprep.subr.mxu0 0.0
        %1468 = vmatpush1.msra.mxu0 0.0
        %1469 = vmatprep.subr.mxu0 0.0
        %1470 = vmatpush1.msra.mxu0 0.0
        %1471 = vmatprep.subr.mxu0 0.0
        %1472 = vmatpush1.msra.mxu0 0.0
        %1473 = vmatprep.subr.mxu0 0.0
        %1474 = vmatpush1.msra.mxu0 0.0
        %1475 = vmatprep.subr.mxu0 0.0
        %1476 = vmatpush1.msra.mxu0 0.0
        %1477 = vmatprep.subr.mxu0 0.0
        %1478 = vmatpush1.msra.mxu0 0.0
        %1479 = vmatprep.subr.mxu0 0.0
        %1480 = vmatpush1.msra.mxu0 0.0
        %1481 = vmatprep.subr.mxu0 0.0
        %1482 = vmatpush1.msra.mxu0 0.0
        %1483 = vmatprep.subr.mxu0 0.0
        %1484 = vmatpush1.msra.mxu0 0.0
        %1485 = vmatprep.mubr.f32.mxu0 0.0
        %1486 = vmatmul.mubr.f32.gmra.mrb[0].mxu0 %v1416
        %v1487 = vpop.f32.mrb[0].mxu0
        %v1488 = vadd.f32 0.0, %v1487
        %v1489 = vpop.f32.mrb[0].mxu0
        %1490 = vmatprep.mubr.f32.mxu0 0.0
        %1491 = vmatmul.mubr.f32.gmra.mrb[0].mxu0 %v1419
        %v1492 = vpop.f32.mrb[0].mxu0
        %v1493 = vadd.f32 0.0, %v1492
        %v1494 = vpop.f32.mrb[0].mxu0
        %1495 = vdwg.mxu0
        %v1496 = vadd.f32 %v1211, %v1488
        %v1497 = vadd.f32 %v1212, %v1493
        %1498 = vrot.lane.b32.xlu0 %v754, 112
        %v1499 = vpop.permute.xlu0 %1498
        %1500 = vrot.lane.b32.xlu0 %v759, 112
        %v1501 = vpop.permute.xlu0 %1500
        %1502 = vrot.lane.b32.xlu0 %v841, 112
        %v1503 = vpop.permute.xlu0 %1502
        %1504 = vrot.lane.b32.xlu0 %v846, 112
        %v1505 = vpop.permute.xlu0 %1504
        %v1506 = vsel %vm930, %v1499, 0
        %v1508 = vsel %vm930, %v1501, 0
        %v1510 = vsel %vm930, %v1503, 0
        %v1512 = vsel %vm930, %v1505, 0
        %1514 = vmatprep.subr.mxu0 0.0
        %1515 = vmatpush1.xpose.msra.mxu0 %v1510
        %1516 = vmatprep.subr.mxu0 0.0
        %1517 = vmatpush1.xpose.msra.mxu0 %v1512
        %1518 = vmatprep.subr.mxu0 0.0
        %1519 = vmatpush1.xpose.msra.mxu0 0.0
        %1520 = vmatprep.subr.mxu0 0.0
        %1521 = vmatpush1.xpose.msra.mxu0 0.0
        %1522 = vmatprep.subr.mxu0 0.0
        %1523 = vmatpush1.xpose.msra.mxu0 0.0
        %1524 = vmatprep.subr.mxu0 0.0
        %1525 = vmatpush1.xpose.msra.mxu0 0.0
        %1526 = vmatprep.subr.mxu0 0.0
        %1527 = vmatpush1.xpose.msra.mxu0 0.0
        %1528 = vmatprep.subr.mxu0 0.0
        %1529 = vmatpush1.xpose.msra.mxu0 0.0
        %1530 = vmatprep.subr.mxu0 0.0
        %1531 = vmatpush1.xpose.msra.mxu0 0.0
        %1532 = vmatprep.subr.mxu0 0.0
        %1533 = vmatpush1.xpose.msra.mxu0 0.0
        %1534 = vmatprep.subr.mxu0 0.0
        %1535 = vmatpush1.xpose.msra.mxu0 0.0
        %1536 = vmatprep.subr.mxu0 0.0
        %1537 = vmatpush1.xpose.msra.mxu0 0.0
        %1538 = vmatprep.subr.mxu0 0.0
        %1539 = vmatpush1.xpose.msra.mxu0 0.0
        %1540 = vmatprep.subr.mxu0 0.0
        %1541 = vmatpush1.xpose.msra.mxu0 0.0
        %1542 = vmatprep.subr.mxu0 0.0
        %1543 = vmatpush1.xpose.msra.mxu0 0.0
        %1544 = vmatprep.subr.mxu0 0.0
        %1545 = vmatpush1.xpose.msra.mxu0 0.0
        %1546 = vmatprep.subr.mxu0 0.0
        %1547 = vmatpush1.xpose.msra.mxu0 0.0
        %1548 = vmatprep.subr.mxu0 0.0
        %1549 = vmatpush1.xpose.msra.mxu0 0.0
        %1550 = vmatprep.subr.mxu0 0.0
        %1551 = vmatpush1.xpose.msra.mxu0 0.0
        %1552 = vmatprep.subr.mxu0 0.0
        %1553 = vmatpush1.xpose.msra.mxu0 0.0
        %1554 = vmatprep.subr.mxu0 0.0
        %1555 = vmatpush1.xpose.msra.mxu0 0.0
        %1556 = vmatprep.subr.mxu0 0.0
        %1557 = vmatpush1.xpose.msra.mxu0 0.0
        %1558 = vmatprep.subr.mxu0 0.0
        %1559 = vmatpush1.xpose.msra.mxu0 0.0
        %1560 = vmatprep.subr.mxu0 0.0
        %1561 = vmatpush1.xpose.msra.mxu0 0.0
        %1562 = vmatprep.subr.mxu0 0.0
        %1563 = vmatpush1.xpose.msra.mxu0 0.0
        %1564 = vmatprep.subr.mxu0 0.0
        %1565 = vmatpush1.xpose.msra.mxu0 0.0
        %1566 = vmatprep.subr.mxu0 0.0
        %1567 = vmatpush1.xpose.msra.mxu0 0.0
        %1568 = vmatprep.subr.mxu0 0.0
        %1569 = vmatpush1.xpose.msra.mxu0 0.0
        %1570 = vmatprep.subr.mxu0 0.0
        %1571 = vmatpush1.xpose.msra.mxu0 0.0
        %1572 = vmatprep.subr.mxu0 0.0
        %1573 = vmatpush1.xpose.msra.mxu0 0.0
        %1574 = vmatprep.subr.mxu0 0.0
        %1575 = vmatpush1.xpose.msra.mxu0 0.0
        %1576 = vmatprep.subr.mxu0 0.0
        %1577 = vmatpush1.xpose.msra.mxu0 0.0
        %1578 = vmatprep.mubr.f32.mxu0 0.0
        %1579 = vmatmul.mubr.f32.gmra.mrb[0].mxu0 %v1506
        %v1580 = vpop.f32.mrb[0].mxu0
        %v1581 = vadd.f32 0.0, %v1580
        %v1582 = vpop.f32.mrb[0].mxu0
        %1583 = vmatprep.mubr.f32.mxu0 0.0
        %1584 = vmatmul.mubr.f32.gmra.mrb[0].mxu0 %v1508
        %v1585 = vpop.f32.mrb[0].mxu0
        %v1586 = vadd.f32 0.0, %v1585
        %v1587 = vpop.f32.mrb[0].mxu0
        %1588 = vdwg.mxu0
        %v1589 = vmul.f32 %v1581, 0.35355338
        %v1590 = vmul.f32 %v1586, 0.35355338
        %v1591 = vsel %vm1020, %v1589, -inf
        %1592 = vmax.xlane.f32.xlu0 %v1591
        %v1593 = vpop.xlane.xlu0 %1592
        %v1594 = vsel %vm1020, %v1590, -inf
        %1595 = vmax.xlane.f32.xlu0 %v1594
        %v1596 = vpop.xlane.xlu0 %1595
        %v1597 = vsub.f32 %v1589, %v1593
        %v1598 = vsub.f32 %v1590, %v1596
        %v1599 = vmul.f32 %v1597, 1.442695
        %v1600 = vpow.pop %v1599
        %v1601 = vmul.f32 %v1598, 1.442695
        %v1602 = vpow.pop %v1601
        %1603 = vrot.lane.b32.xlu0 %v841, 80
        %v1604 = vpop.permute.xlu0 %1603
        %1605 = vrot.lane.b32.xlu0 %v846, 80
        %v1606 = vpop.permute.xlu0 %1605
        %v1610 = vsel %vm1020, %v1600, 0
        %v1613 = vsel %vm1020, %v1602, 0
        %1615 = vmatprep.subr.mxu0 0.0
        %1616 = vmatpush1.msra.mxu0 %v1604
        %1617 = vmatprep.subr.mxu0 0.0
        %1618 = vmatpush1.msra.mxu0 %v1606
        %1619 = vmatprep.subr.mxu0 0.0
        %1620 = vmatpush1.msra.mxu0 0.0
        %1621 = vmatprep.subr.mxu0 0.0
        %1622 = vmatpush1.msra.mxu0 0.0
        %1623 = vmatprep.subr.mxu0 0.0
        %1624 = vmatpush1.msra.mxu0 0.0
        %1625 = vmatprep.subr.mxu0 0.0
        %1626 = vmatpush1.msra.mxu0 0.0
        %1627 = vmatprep.subr.mxu0 0.0
        %1628 = vmatpush1.msra.mxu0 0.0
        %1629 = vmatprep.subr.mxu0 0.0
        %1630 = vmatpush1.msra.mxu0 0.0
        %1631 = vmatprep.subr.mxu0 0.0
        %1632 = vmatpush1.msra.mxu0 0.0
        %1633 = vmatprep.subr.mxu0 0.0
        %1634 = vmatpush1.msra.mxu0 0.0
        %1635 = vmatprep.subr.mxu0 0.0
        %1636 = vmatpush1.msra.mxu0 0.0
        %1637 = vmatprep.subr.mxu0 0.0
        %1638 = vmatpush1.msra.mxu0 0.0
        %1639 = vmatprep.subr.mxu0 0.0
        %1640 = vmatpush1.msra.mxu0 0.0
        %1641 = vmatprep.subr.mxu0 0.0
        %1642 = vmatpush1.msra.mxu0 0.0
        %1643 = vmatprep.subr.mxu0 0.0
        %1644 = vmatpush1.msra.mxu0 0.0
        %1645 = vmatprep.subr.mxu0 0.0
        %1646 = vmatpush1.msra.mxu0 0.0
        %1647 = vmatprep.subr.mxu0 0.0
        %1648 = vmatpush1.msra.mxu0 0.0
        %1649 = vmatprep.subr.mxu0 0.0
        %1650 = vmatpush1.msra.mxu0 0.0
        %1651 = vmatprep.subr.mxu0 0.0
        %1652 = vmatpush1.msra.mxu0 0.0
        %1653 = vmatprep.subr.mxu0 0.0
        %1654 = vmatpush1.msra.mxu0 0.0
        %1655 = vmatprep.subr.mxu0 0.0
        %1656 = vmatpush1.msra.mxu0 0.0
        %1657 = vmatprep.subr.mxu0 0.0
        %1658 = vmatpush1.msra.mxu0 0.0
        %1659 = vmatprep.subr.mxu0 0.0
        %1660 = vmatpush1.msra.mxu0 0.0
        %1661 = vmatprep.subr.mxu0 0.0
        %1662 = vmatpush1.msra.mxu0 0.0
        %1663 = vmatprep.subr.mxu0 0.0
        %1664 = vmatpush1.msra.mxu0 0.0
        %1665 = vmatprep.subr.mxu0 0.0
        %1666 = vmatpush1.msra.mxu0 0.0
        %1667 = vmatprep.subr.mxu0 0.0
        %1668 = vmatpush1.msra.mxu0 0.0
        %1669 = vmatprep.subr.mxu0 0.0
        %1670 = vmatpush1.msra.mxu0 0.0
        %1671 = vmatprep.subr.mxu0 0.0
        %1672 = vmatpush1.msra.mxu0 0.0
        %1673 = vmatprep.subr.mxu0 0.0
        %1674 = vmatpush1.msra.mxu0 0.0
        %1675 = vmatprep.subr.mxu0 0.0
        %1676 = vmatpush1.msra.mxu0 0.0
        %1677 = vmatprep.subr.mxu0 0.0
        %1678 = vmatpush1.msra.mxu0 0.0
        %1679 = vmatprep.mubr.f32.mxu0 0.0
        %1680 = vmatmul.mubr.f32.gmra.mrb[0].mxu0 %v1610
        %v1681 = vpop.f32.mrb[0].mxu0
        %v1682 = vadd.f32 0.0, %v1681
        %v1683 = vpop.f32.mrb[0].mxu0
        %1684 = vmatprep.mubr.f32.mxu0 0.0
        %1685 = vmatmul.mubr.f32.gmra.mrb[0].mxu0 %v1613
        %v1686 = vpop.f32.mrb[0].mxu0
        %v1687 = vadd.f32 0.0, %v1686
        %v1688 = vpop.f32.mrb[0].mxu0
        %1689 = vdwg.mxu0
        %v1690 = vsel %vm1020, %v1600, 0.0
        %1691 = vadd.xlane.f32.xlu0 %v1690
        %v1692 = vpop.xlane.xlu0 %1691
        %v1693 = vsel %vm1020, %v1602, 0.0
        %1694 = vadd.xlane.f32.xlu0 %v1693
        %v1695 = vpop.xlane.xlu0 %1694
        %v1696 = vrcp.pop %v1692
        %v1697 = vmul.f32 %v1682, %v1696
        %v1698 = vrcp.pop %v1695
        %v1699 = vmul.f32 %v1687, %v1698
        %v1701 = vsel %vm930, %v1697, 0
        %v1704 = vsel %vm930, %v1699, 0
        %1706 = vmatprep.subr.mxu0 0.0
        %1707 = vmatpush1.msra.mxu0 %v662
        %1708 = vmatprep.subr.mxu0 0.0
        %1709 = vmatpush1.msra.mxu0 0.0
        %1710 = vmatprep.subr.mxu0 0.0
        %1711 = vmatpush1.msra.mxu0 0.0
        %1712 = vmatprep.subr.mxu0 0.0
        %1713 = vmatpush1.msra.mxu0 0.0
        %1714 = vmatprep.subr.mxu0 0.0
        %1715 = vmatpush1.msra.mxu0 0.0
        %1716 = vmatprep.subr.mxu0 0.0
        %1717 = vmatpush1.msra.mxu0 0.0
        %1718 = vmatprep.subr.mxu0 0.0
        %1719 = vmatpush1.msra.mxu0 0.0
        %1720 = vmatprep.subr.mxu0 0.0
        %1721 = vmatpush1.msra.mxu0 0.0
        %1722 = vmatprep.subr.mxu0 0.0
        %1723 = vmatpush1.msra.mxu0 0.0
        %1724 = vmatprep.subr.mxu0 0.0
        %1725 = vmatpush1.msra.mxu0 0.0
        %1726 = vmatprep.subr.mxu0 0.0
        %1727 = vmatpush1.msra.mxu0 0.0
        %1728 = vmatprep.subr.mxu0 0.0
        %1729 = vmatpush1.msra.mxu0 0.0
        %1730 = vmatprep.subr.mxu0 0.0
        %1731 = vmatpush1.msra.mxu0 0.0
        %1732 = vmatprep.subr.mxu0 0.0
        %1733 = vmatpush1.msra.mxu0 0.0
        %1734 = vmatprep.subr.mxu0 0.0
        %1735 = vmatpush1.msra.mxu0 0.0
        %1736 = vmatprep.subr.mxu0 0.0
        %1737 = vmatpush1.msra.mxu0 0.0
        %1738 = vmatprep.subr.mxu0 0.0
        %1739 = vmatpush1.msra.mxu0 0.0
        %1740 = vmatprep.subr.mxu0 0.0
        %1741 = vmatpush1.msra.mxu0 0.0
        %1742 = vmatprep.subr.mxu0 0.0
        %1743 = vmatpush1.msra.mxu0 0.0
        %1744 = vmatprep.subr.mxu0 0.0
        %1745 = vmatpush1.msra.mxu0 0.0
        %1746 = vmatprep.subr.mxu0 0.0
        %1747 = vmatpush1.msra.mxu0 0.0
        %1748 = vmatprep.subr.mxu0 0.0
        %1749 = vmatpush1.msra.mxu0 0.0
        %1750 = vmatprep.subr.mxu0 0.0
        %1751 = vmatpush1.msra.mxu0 0.0
        %1752 = vmatprep.subr.mxu0 0.0
        %1753 = vmatpush1.msra.mxu0 0.0
        %1754 = vmatprep.subr.mxu0 0.0
        %1755 = vmatpush1.msra.mxu0 0.0
        %1756 = vmatprep.subr.mxu0 0.0
        %1757 = vmatpush1.msra.mxu0 0.0
        %1758 = vmatprep.subr.mxu0 0.0
        %1759 = vmatpush1.msra.mxu0 0.0
        %1760 = vmatprep.subr.mxu0 0.0
        %1761 = vmatpush1.msra.mxu0 0.0
        %1762 = vmatprep.subr.mxu0 0.0
        %1763 = vmatpush1.msra.mxu0 0.0
        %1764 = vmatprep.subr.mxu0 0.0
        %1765 = vmatpush1.msra.mxu0 0.0
        %1766 = vmatprep.subr.mxu0 0.0
        %1767 = vmatpush1.msra.mxu0 0.0
        %1768 = vmatprep.subr.mxu0 0.0
        %1769 = vmatpush1.msra.mxu0 0.0
        %1770 = vmatprep.mubr.f32.mxu0 0.0
        %1771 = vmatmul.mubr.f32.gmra.mrb[0].mxu0 %v1701
        %v1772 = vpop.f32.mrb[0].mxu0
        %v1773 = vadd.f32 0.0, %v1772
        %v1774 = vpop.f32.mrb[0].mxu0
        %1775 = vmatprep.mubr.f32.mxu0 0.0
        %1776 = vmatmul.mubr.f32.gmra.mrb[0].mxu0 %v1704
        %v1777 = vpop.f32.mrb[0].mxu0
        %v1778 = vadd.f32 0.0, %v1777
        %v1779 = vpop.f32.mrb[0].mxu0
        %1780 = vdwg.mxu0
        %v1781 = vadd.f32 %v1496, %v1773
        %v1782 = vadd.f32 %v1497, %v1778
        %1783 = vrot.lane.b32.xlu0 %v754, 104
        %v1784 = vpop.permute.xlu0 %1783
        %1785 = vrot.lane.b32.xlu0 %v759, 104
        %v1786 = vpop.permute.xlu0 %1785
        %1787 = vrot.lane.b32.xlu0 %v841, 104
        %v1788 = vpop.permute.xlu0 %1787
        %1789 = vrot.lane.b32.xlu0 %v846, 104
        %v1790 = vpop.permute.xlu0 %1789
        %v1791 = vsel %vm930, %v1784, 0
        %v1793 = vsel %vm930, %v1786, 0
        %v1795 = vsel %vm930, %v1788, 0
        %v1797 = vsel %vm930, %v1790, 0
        %1799 = vmatprep.subr.mxu0 0.0
        %1800 = vmatpush1.xpose.msra.mxu0 %v1795
        %1801 = vmatprep.subr.mxu0 0.0
        %1802 = vmatpush1.xpose.msra.mxu0 %v1797
        %1803 = vmatprep.subr.mxu0 0.0
        %1804 = vmatpush1.xpose.msra.mxu0 0.0
        %1805 = vmatprep.subr.mxu0 0.0
        %1806 = vmatpush1.xpose.msra.mxu0 0.0
        %1807 = vmatprep.subr.mxu0 0.0
        %1808 = vmatpush1.xpose.msra.mxu0 0.0
        %1809 = vmatprep.subr.mxu0 0.0
        %1810 = vmatpush1.xpose.msra.mxu0 0.0
        %1811 = vmatprep.subr.mxu0 0.0
        %1812 = vmatpush1.xpose.msra.mxu0 0.0
        %1813 = vmatprep.subr.mxu0 0.0
        %1814 = vmatpush1.xpose.msra.mxu0 0.0
        %1815 = vmatprep.subr.mxu0 0.0
        %1816 = vmatpush1.xpose.msra.mxu0 0.0
        %1817 = vmatprep.subr.mxu0 0.0
        %1818 = vmatpush1.xpose.msra.mxu0 0.0
        %1819 = vmatprep.subr.mxu0 0.0
        %1820 = vmatpush1.xpose.msra.mxu0 0.0
        %1821 = vmatprep.subr.mxu0 0.0
        %1822 = vmatpush1.xpose.msra.mxu0 0.0
        %1823 = vmatprep.subr.mxu0 0.0
        %1824 = vmatpush1.xpose.msra.mxu0 0.0
        %1825 = vmatprep.subr.mxu0 0.0
        %1826 = vmatpush1.xpose.msra.mxu0 0.0
        %1827 = vmatprep.subr.mxu0 0.0
        %1828 = vmatpush1.xpose.msra.mxu0 0.0
        %1829 = vmatprep.subr.mxu0 0.0
        %1830 = vmatpush1.xpose.msra.mxu0 0.0
        %1831 = vmatprep.subr.mxu0 0.0
        %1832 = vmatpush1.xpose.msra.mxu0 0.0
        %1833 = vmatprep.subr.mxu0 0.0
        %1834 = vmatpush1.xpose.msra.mxu0 0.0
        %1835 = vmatprep.subr.mxu0 0.0
        %1836 = vmatpush1.xpose.msra.mxu0 0.0
        %1837 = vmatprep.subr.mxu0 0.0
        %1838 = vmatpush1.xpose.msra.mxu0 0.0
        %1839 = vmatprep.subr.mxu0 0.0
        %1840 = vmatpush1.xpose.msra.mxu0 0.0
        %1841 = vmatprep.subr.mxu0 0.0
        %1842 = vmatpush1.xpose.msra.mxu0 0.0
        %1843 = vmatprep.subr.mxu0 0.0
        %1844 = vmatpush1.xpose.msra.mxu0 0.0
        %1845 = vmatprep.subr.mxu0 0.0
        %1846 = vmatpush1.xpose.msra.mxu0 0.0
        %1847 = vmatprep.subr.mxu0 0.0
        %1848 = vmatpush1.xpose.msra.mxu0 0.0
        %1849 = vmatprep.subr.mxu0 0.0
        %1850 = vmatpush1.xpose.msra.mxu0 0.0
        %1851 = vmatprep.subr.mxu0 0.0
        %1852 = vmatpush1.xpose.msra.mxu0 0.0
        %1853 = vmatprep.subr.mxu0 0.0
        %1854 = vmatpush1.xpose.msra.mxu0 0.0
        %1855 = vmatprep.subr.mxu0 0.0
        %1856 = vmatpush1.xpose.msra.mxu0 0.0
        %1857 = vmatprep.subr.mxu0 0.0
        %1858 = vmatpush1.xpose.msra.mxu0 0.0
        %1859 = vmatprep.subr.mxu0 0.0
        %1860 = vmatpush1.xpose.msra.mxu0 0.0
        %1861 = vmatprep.subr.mxu0 0.0
        %1862 = vmatpush1.xpose.msra.mxu0 0.0
        %1863 = vmatprep.mubr.f32.mxu0 0.0
        %1864 = vmatmul.mubr.f32.gmra.mrb[0].mxu0 %v1791
        %v1865 = vpop.f32.mrb[0].mxu0
        %v1866 = vadd.f32 0.0, %v1865
        %v1867 = vpop.f32.mrb[0].mxu0
        %1868 = vmatprep.mubr.f32.mxu0 0.0
        %1869 = vmatmul.mubr.f32.gmra.mrb[0].mxu0 %v1793
        %v1870 = vpop.f32.mrb[0].mxu0
        %v1871 = vadd.f32 0.0, %v1870
        %v1872 = vpop.f32.mrb[0].mxu0
        %1873 = vdwg.mxu0
        %v1874 = vmul.f32 %v1866, 0.35355338
        %v1875 = vmul.f32 %v1871, 0.35355338
        %v1876 = vsel %vm1020, %v1874, -inf
        %1877 = vmax.xlane.f32.xlu0 %v1876
        %v1878 = vpop.xlane.xlu0 %1877
        %v1879 = vsel %vm1020, %v1875, -inf
        %1880 = vmax.xlane.f32.xlu0 %v1879
        %v1881 = vpop.xlane.xlu0 %1880
        %v1882 = vsub.f32 %v1874, %v1878
        %v1883 = vsub.f32 %v1875, %v1881
        %v1884 = vmul.f32 %v1882, 1.442695
        %v1885 = vpow.pop %v1884
        %v1886 = vmul.f32 %v1883, 1.442695
        %v1887 = vpow.pop %v1886
        %1888 = vrot.lane.b32.xlu0 %v841, 72
        %v1889 = vpop.permute.xlu0 %1888
        %1890 = vrot.lane.b32.xlu0 %v846, 72
        %v1891 = vpop.permute.xlu0 %1890
        %v1895 = vsel %vm1020, %v1885, 0
        %v1898 = vsel %vm1020, %v1887, 0
        %1900 = vmatprep.subr.mxu0 0.0
        %1901 = vmatpush1.msra.mxu0 %v1889
        %1902 = vmatprep.subr.mxu0 0.0
        %1903 = vmatpush1.msra.mxu0 %v1891
        %1904 = vmatprep.subr.mxu0 0.0
        %1905 = vmatpush1.msra.mxu0 0.0
        %1906 = vmatprep.subr.mxu0 0.0
        %1907 = vmatpush1.msra.mxu0 0.0
        %1908 = vmatprep.subr.mxu0 0.0
        %1909 = vmatpush1.msra.mxu0 0.0
        %1910 = vmatprep.subr.mxu0 0.0
        %1911 = vmatpush1.msra.mxu0 0.0
        %1912 = vmatprep.subr.mxu0 0.0
        %1913 = vmatpush1.msra.mxu0 0.0
        %1914 = vmatprep.subr.mxu0 0.0
        %1915 = vmatpush1.msra.mxu0 0.0
        %1916 = vmatprep.subr.mxu0 0.0
        %1917 = vmatpush1.msra.mxu0 0.0
        %1918 = vmatprep.subr.mxu0 0.0
        %1919 = vmatpush1.msra.mxu0 0.0
        %1920 = vmatprep.subr.mxu0 0.0
        %1921 = vmatpush1.msra.mxu0 0.0
        %1922 = vmatprep.subr.mxu0 0.0
        %1923 = vmatpush1.msra.mxu0 0.0
        %1924 = vmatprep.subr.mxu0 0.0
        %1925 = vmatpush1.msra.mxu0 0.0
        %1926 = vmatprep.subr.mxu0 0.0
        %1927 = vmatpush1.msra.mxu0 0.0
        %1928 = vmatprep.subr.mxu0 0.0
        %1929 = vmatpush1.msra.mxu0 0.0
        %1930 = vmatprep.subr.mxu0 0.0
        %1931 = vmatpush1.msra.mxu0 0.0
        %1932 = vmatprep.subr.mxu0 0.0
        %1933 = vmatpush1.msra.mxu0 0.0
        %1934 = vmatprep.subr.mxu0 0.0
        %1935 = vmatpush1.msra.mxu0 0.0
        %1936 = vmatprep.subr.mxu0 0.0
        %1937 = vmatpush1.msra.mxu0 0.0
        %1938 = vmatprep.subr.mxu0 0.0
        %1939 = vmatpush1.msra.mxu0 0.0
        %1940 = vmatprep.subr.mxu0 0.0
        %1941 = vmatpush1.msra.mxu0 0.0
        %1942 = vmatprep.subr.mxu0 0.0
        %1943 = vmatpush1.msra.mxu0 0.0
        %1944 = vmatprep.subr.mxu0 0.0
        %1945 = vmatpush1.msra.mxu0 0.0
        %1946 = vmatprep.subr.mxu0 0.0
        %1947 = vmatpush1.msra.mxu0 0.0
        %1948 = vmatprep.subr.mxu0 0.0
        %1949 = vmatpush1.msra.mxu0 0.0
        %1950 = vmatprep.subr.mxu0 0.0
        %1951 = vmatpush1.msra.mxu0 0.0
        %1952 = vmatprep.subr.mxu0 0.0
        %1953 = vmatpush1.msra.mxu0 0.0
        %1954 = vmatprep.subr.mxu0 0.0
        %1955 = vmatpush1.msra.mxu0 0.0
        %1956 = vmatprep.subr.mxu0 0.0
        %1957 = vmatpush1.msra.mxu0 0.0
        %1958 = vmatprep.subr.mxu0 0.0
        %1959 = vmatpush1.msra.mxu0 0.0
        %1960 = vmatprep.subr.mxu0 0.0
        %1961 = vmatpush1.msra.mxu0 0.0
        %1962 = vmatprep.subr.mxu0 0.0
        %1963 = vmatpush1.msra.mxu0 0.0
        %1964 = vmatprep.mubr.f32.mxu0 0.0
        %1965 = vmatmul.mubr.f32.gmra.mrb[0].mxu0 %v1895
        %v1966 = vpop.f32.mrb[0].mxu0
        %v1967 = vadd.f32 0.0, %v1966
        %v1968 = vpop.f32.mrb[0].mxu0
        %1969 = vmatprep.mubr.f32.mxu0 0.0
        %1970 = vmatmul.mubr.f32.gmra.mrb[0].mxu0 %v1898
        %v1971 = vpop.f32.mrb[0].mxu0
        %v1972 = vadd.f32 0.0, %v1971
        %v1973 = vpop.f32.mrb[0].mxu0
        %1974 = vdwg.mxu0
        %v1975 = vsel %vm1020, %v1885, 0.0
        %1976 = vadd.xlane.f32.xlu0 %v1975
        %v1977 = vpop.xlane.xlu0 %1976
        %v1978 = vsel %vm1020, %v1887, 0.0
        %1979 = vadd.xlane.f32.xlu0 %v1978
        %v1980 = vpop.xlane.xlu0 %1979
        %v1981 = vrcp.pop %v1977
        %v1982 = vmul.f32 %v1967, %v1981
        %v1983 = vrcp.pop %v1980
        %v1984 = vmul.f32 %v1972, %v1983
        %v1986 = vsel %vm930, %v1982, 0
        %v1989 = vsel %vm930, %v1984, 0
        %1991 = vmatprep.subr.mxu0 0.0
        %1992 = vmatpush1.msra.mxu0 %v663
        %1993 = vmatprep.subr.mxu0 0.0
        %1994 = vmatpush1.msra.mxu0 0.0
        %1995 = vmatprep.subr.mxu0 0.0
        %1996 = vmatpush1.msra.mxu0 0.0
        %1997 = vmatprep.subr.mxu0 0.0
        %1998 = vmatpush1.msra.mxu0 0.0
        %1999 = vmatprep.subr.mxu0 0.0
        %2000 = vmatpush1.msra.mxu0 0.0
        %2001 = vmatprep.subr.mxu0 0.0
        %2002 = vmatpush1.msra.mxu0 0.0
        %2003 = vmatprep.subr.mxu0 0.0
        %2004 = vmatpush1.msra.mxu0 0.0
        %2005 = vmatprep.subr.mxu0 0.0
        %2006 = vmatpush1.msra.mxu0 0.0
        %2007 = vmatprep.subr.mxu0 0.0
        %2008 = vmatpush1.msra.mxu0 0.0
        %2009 = vmatprep.subr.mxu0 0.0
        %2010 = vmatpush1.msra.mxu0 0.0
        %2011 = vmatprep.subr.mxu0 0.0
        %2012 = vmatpush1.msra.mxu0 0.0
        %2013 = vmatprep.subr.mxu0 0.0
        %2014 = vmatpush1.msra.mxu0 0.0
        %2015 = vmatprep.subr.mxu0 0.0
        %2016 = vmatpush1.msra.mxu0 0.0
        %2017 = vmatprep.subr.mxu0 0.0
        %2018 = vmatpush1.msra.mxu0 0.0
        %2019 = vmatprep.subr.mxu0 0.0
        %2020 = vmatpush1.msra.mxu0 0.0
        %2021 = vmatprep.subr.mxu0 0.0
        %2022 = vmatpush1.msra.mxu0 0.0
        %2023 = vmatprep.subr.mxu0 0.0
        %2024 = vmatpush1.msra.mxu0 0.0
        %2025 = vmatprep.subr.mxu0 0.0
        %2026 = vmatpush1.msra.mxu0 0.0
        %2027 = vmatprep.subr.mxu0 0.0
        %2028 = vmatpush1.msra.mxu0 0.0
        %2029 = vmatprep.subr.mxu0 0.0
        %2030 = vmatpush1.msra.mxu0 0.0
        %2031 = vmatprep.subr.mxu0 0.0
        %2032 = vmatpush1.msra.mxu0 0.0
        %2033 = vmatprep.subr.mxu0 0.0
        %2034 = vmatpush1.msra.mxu0 0.0
        %2035 = vmatprep.subr.mxu0 0.0
        %2036 = vmatpush1.msra.mxu0 0.0
        %2037 = vmatprep.subr.mxu0 0.0
        %2038 = vmatpush1.msra.mxu0 0.0
        %2039 = vmatprep.subr.mxu0 0.0
        %2040 = vmatpush1.msra.mxu0 0.0
        %2041 = vmatprep.subr.mxu0 0.0
        %2042 = vmatpush1.msra.mxu0 0.0
        %2043 = vmatprep.subr.mxu0 0.0
        %2044 = vmatpush1.msra.mxu0 0.0
        %2045 = vmatprep.subr.mxu0 0.0
        %2046 = vmatpush1.msra.mxu0 0.0
        %2047 = vmatprep.subr.mxu0 0.0
        %2048 = vmatpush1.msra.mxu0 0.0
        %2049 = vmatprep.subr.mxu0 0.0
        %2050 = vmatpush1.msra.mxu0 0.0
        %2051 = vmatprep.subr.mxu0 0.0
        %2052 = vmatpush1.msra.mxu0 0.0
        %2053 = vmatprep.subr.mxu0 0.0
        %2054 = vmatpush1.msra.mxu0 0.0
        %2055 = vmatprep.mubr.f32.mxu0 0.0
        %2056 = vmatmul.mubr.f32.gmra.mrb[0].mxu0 %v1986
        %v2057 = vpop.f32.mrb[0].mxu0
        %v2058 = vadd.f32 0.0, %v2057
        %v2059 = vpop.f32.mrb[0].mxu0
        %2060 = vmatprep.mubr.f32.mxu0 0.0
        %2061 = vmatmul.mubr.f32.gmra.mrb[0].mxu0 %v1989
        %v2062 = vpop.f32.mrb[0].mxu0
        %v2063 = vadd.f32 0.0, %v2062
        %v2064 = vpop.f32.mrb[0].mxu0
        %2065 = vdwg.mxu0
        %v2066 = vadd.f32 %v1781, %v2058
        %v2067 = vadd.f32 %v1782, %v2063
        %vm2068 = vcmask 523264
        %v2069 = vsel %vm2068, %v2066, 0.0
        %v2070 = vsel %vm2068, %v2067, 0.0
        %v2071 = vadd.f32 %v2069, %v2070
        %v2072 = vrot.slane %v2071, 4
        %v2073 = vadd.f32 %v2071, %v2072
        %v2074 = vrot.slane %v2073, 2
        %v2075 = vadd.f32 %v2073, %v2074
        %v2076 = vrot.slane %v2075, 1
        %v2077 = vadd.f32 %v2075, %v2076
        %v2078 = vrcp.pop 16.0
        %v2079 = vmul.f32 %v2077, %v2078
        %v2080 = vsub.f32 %v2066, %v2079
        %v2081 = vsub.f32 %v2067, %v2079
        %v2082 = vmul.f32 %v2080, %v2080
        %v2083 = vmul.f32 %v2081, %v2081
        %v2084 = vsel %vm2068, %v2082, 0.0
        %v2085 = vsel %vm2068, %v2083, 0.0
        %v2086 = vadd.f32 %v2084, %v2085
        %v2087 = vrot.slane %v2086, 4
        %v2088 = vadd.f32 %v2086, %v2087
        %v2089 = vrot.slane %v2088, 2
        %v2090 = vadd.f32 %v2088, %v2089
        %v2091 = vrot.slane %v2090, 1
        %v2092 = vadd.f32 %v2090, %v2091
        %v2093 = vmul.f32 %v2092, %v2078
        %v2094 = vadd.f32 %v2093, 1e-05
        %v2095 = vrsqrt.pop %v2094
        %v2096 = vmul.f32 %v2094, %v2095
        %vm2097 = vcmp.eq.f32.partialorder %v2094, inf
        %v2098 = vsel %vm2097, %v2094, %v2096
        %vm2099 = vcmp.eq.f32.partialorder %v2094, 0.0
        %v2100 = vand.u32 %v2094, 2147483648
        %v2101 = vsel %vm2099, %v2100, %v2098
        %v2102 = vrcp.pop %v2101
        %v2103 = vmul.f32 1.0, %v2102
        %v2104 = vmul.f32 %v2080, %v2103
        %v2105 = vmul.f32 %v2081, %v2103
        %v2106 = vmax.f32 %v2104, 0.0
        %v2107 = vmax.f32 %v2105, 0.0
        %v2109 = vlaneseq
        %v2110 = vshrl.u32 %v2109, 7
        %v2111 = vsub.s32 0, %v2110
        %v2112 = vrot.slane %v673, %v2111
        %v2115 = vsel %vm2068, %v2106, 0
        %v2118 = vsel %vm2068, %v2107, 0
        %2120 = vmatprep.subr.mxu0 0.0
        %2121 = vmatpush1.msra.mxu0 %v665
        %2122 = vmatprep.subr.mxu0 0.0
        %2123 = vmatpush1.msra.mxu0 %v666
        %2124 = vmatprep.subr.mxu0 0.0
        %2125 = vmatpush1.msra.mxu0 %v667
        %2126 = vmatprep.subr.mxu0 0.0
        %2127 = vmatpush1.msra.mxu0 %v668
        %2128 = vmatprep.subr.mxu0 0.0
        %2129 = vmatpush1.msra.mxu0 %v669
        %2130 = vmatprep.subr.mxu0 0.0
        %2131 = vmatpush1.msra.mxu0 %v670
        %2132 = vmatprep.subr.mxu0 0.0
        %2133 = vmatpush1.msra.mxu0 %v671
        %2134 = vmatprep.subr.mxu0 0.0
        %2135 = vmatpush1.msra.mxu0 %v672
        %2136 = vmatprep.subr.mxu0 0.0
        %2137 = vmatpush1.msra.mxu0 0.0
        %2138 = vmatprep.subr.mxu0 0.0
        %2139 = vmatpush1.msra.mxu0 0.0
        %2140 = vmatprep.subr.mxu0 0.0
        %2141 = vmatpush1.msra.mxu0 0.0
        %2142 = vmatprep.subr.mxu0 0.0
        %2143 = vmatpush1.msra.mxu0 0.0
        %2144 = vmatprep.subr.mxu0 0.0
        %2145 = vmatpush1.msra.mxu0 0.0
        %2146 = vmatprep.subr.mxu0 0.0
        %2147 = vmatpush1.msra.mxu0 0.0
        %2148 = vmatprep.subr.mxu0 0.0
        %2149 = vmatpush1.msra.mxu0 0.0
        %2150 = vmatprep.subr.mxu0 0.0
        %2151 = vmatpush1.msra.mxu0 0.0
        %2152 = vmatprep.subr.mxu0 0.0
        %2153 = vmatpush1.msra.mxu0 0.0
        %2154 = vmatprep.subr.mxu0 0.0
        %2155 = vmatpush1.msra.mxu0 0.0
        %2156 = vmatprep.subr.mxu0 0.0
        %2157 = vmatpush1.msra.mxu0 0.0
        %2158 = vmatprep.subr.mxu0 0.0
        %2159 = vmatpush1.msra.mxu0 0.0
        %2160 = vmatprep.subr.mxu0 0.0
        %2161 = vmatpush1.msra.mxu0 0.0
        %2162 = vmatprep.subr.mxu0 0.0
        %2163 = vmatpush1.msra.mxu0 0.0
        %2164 = vmatprep.subr.mxu0 0.0
        %2165 = vmatpush1.msra.mxu0 0.0
        %2166 = vmatprep.subr.mxu0 0.0
        %2167 = vmatpush1.msra.mxu0 0.0
        %2168 = vmatprep.subr.mxu0 0.0
        %2169 = vmatpush1.msra.mxu0 0.0
        %2170 = vmatprep.subr.mxu0 0.0
        %2171 = vmatpush1.msra.mxu0 0.0
        %2172 = vmatprep.subr.mxu0 0.0
        %2173 = vmatpush1.msra.mxu0 0.0
        %2174 = vmatprep.subr.mxu0 0.0
        %2175 = vmatpush1.msra.mxu0 0.0
        %2176 = vmatprep.subr.mxu0 0.0
        %2177 = vmatpush1.msra.mxu0 0.0
        %2178 = vmatprep.subr.mxu0 0.0
        %2179 = vmatpush1.msra.mxu0 0.0
        %2180 = vmatprep.subr.mxu0 0.0
        %2181 = vmatpush1.msra.mxu0 0.0
        %2182 = vmatprep.subr.mxu0 0.0
        %2183 = vmatpush1.msra.mxu0 0.0
        %2184 = vmatprep.mubr.f32.mxu0 0.0
        %2185 = vmatmul.mubr.f32.gmra.mrb[0].mxu0 %v2115
        %v2186 = vpop.f32.mrb[0].mxu0
        %v2187 = vadd.f32 %v2112, %v2186
        %v2188 = vpop.f32.mrb[0].mxu0
        %2189 = vmatprep.mubr.f32.mxu0 0.0
        %2190 = vmatmul.mubr.f32.gmra.mrb[0].mxu0 %v2118
        %v2191 = vpop.f32.mrb[0].mxu0
        %v2192 = vadd.f32 %v2112, %v2191
        %v2193 = vpop.f32.mrb[0].mxu0
        %2194 = vdwg.mxu0
        %v2195 = vadd.f32 %v625, %v2187
        %v2196 = vadd.f32 %v626, %v2192
        %v2198 = vsel %vm680, %v627, 0
        %v2201 = vsel %vm680, %v628, 0
        %2203 = vmatprep.subr.mxu0 0.0
        %2204 = vmatpush1.msra.mxu0 %v646
        %2205 = vmatprep.subr.mxu0 0.0
        %2206 = vmatpush1.msra.mxu0 %v647
        %2207 = vmatprep.subr.mxu0 0.0
        %2208 = vmatpush1.msra.mxu0 %v648
        %2209 = vmatprep.subr.mxu0 0.0
        %2210 = vmatpush1.msra.mxu0 %v649
        %2211 = vmatprep.subr.mxu0 0.0
        %2212 = vmatpush1.msra.mxu0 0.0
        %2213 = vmatprep.subr.mxu0 0.0
        %2214 = vmatpush1.msra.mxu0 0.0
        %2215 = vmatprep.subr.mxu0 0.0
        %2216 = vmatpush1.msra.mxu0 0.0
        %2217 = vmatprep.subr.mxu0 0.0
        %2218 = vmatpush1.msra.mxu0 0.0
        %2219 = vmatprep.subr.mxu0 0.0
        %2220 = vmatpush1.msra.mxu0 0.0
        %2221 = vmatprep.subr.mxu0 0.0
        %2222 = vmatpush1.msra.mxu0 0.0
        %2223 = vmatprep.subr.mxu0 0.0
        %2224 = vmatpush1.msra.mxu0 0.0
        %2225 = vmatprep.subr.mxu0 0.0
        %2226 = vmatpush1.msra.mxu0 0.0
        %2227 = vmatprep.subr.mxu0 0.0
        %2228 = vmatpush1.msra.mxu0 0.0
        %2229 = vmatprep.subr.mxu0 0.0
        %2230 = vmatpush1.msra.mxu0 0.0
        %2231 = vmatprep.subr.mxu0 0.0
        %2232 = vmatpush1.msra.mxu0 0.0
        %2233 = vmatprep.subr.mxu0 0.0
        %2234 = vmatpush1.msra.mxu0 0.0
        %2235 = vmatprep.subr.mxu0 0.0
        %2236 = vmatpush1.msra.mxu0 0.0
        %2237 = vmatprep.subr.mxu0 0.0
        %2238 = vmatpush1.msra.mxu0 0.0
        %2239 = vmatprep.subr.mxu0 0.0
        %2240 = vmatpush1.msra.mxu0 0.0
        %2241 = vmatprep.subr.mxu0 0.0
        %2242 = vmatpush1.msra.mxu0 0.0
        %2243 = vmatprep.subr.mxu0 0.0
        %2244 = vmatpush1.msra.mxu0 0.0
        %2245 = vmatprep.subr.mxu0 0.0
        %2246 = vmatpush1.msra.mxu0 0.0
        %2247 = vmatprep.subr.mxu0 0.0
        %2248 = vmatpush1.msra.mxu0 0.0
        %2249 = vmatprep.subr.mxu0 0.0
        %2250 = vmatpush1.msra.mxu0 0.0
        %2251 = vmatprep.subr.mxu0 0.0
        %2252 = vmatpush1.msra.mxu0 0.0
        %2253 = vmatprep.subr.mxu0 0.0
        %2254 = vmatpush1.msra.mxu0 0.0
        %2255 = vmatprep.subr.mxu0 0.0
        %2256 = vmatpush1.msra.mxu0 0.0
        %2257 = vmatprep.subr.mxu0 0.0
        %2258 = vmatpush1.msra.mxu0 0.0
        %2259 = vmatprep.subr.mxu0 0.0
        %2260 = vmatpush1.msra.mxu0 0.0
        %2261 = vmatprep.subr.mxu0 0.0
        %2262 = vmatpush1.msra.mxu0 0.0
        %2263 = vmatprep.subr.mxu0 0.0
        %2264 = vmatpush1.msra.mxu0 0.0
        %2265 = vmatprep.subr.mxu0 0.0
        %2266 = vmatpush1.msra.mxu0 0.0
        %2267 = vmatprep.mubr.f32.mxu0 0.0
        %2268 = vmatmul.mubr.f32.gmra.mrb[0].mxu0 %v2198
        %v2269 = vpop.f32.mrb[0].mxu0
        %v2270 = vadd.f32 %v678, %v2269
        %v2271 = vpop.f32.mrb[0].mxu0
        %2272 = vmatprep.mubr.f32.mxu0 0.0
        %2273 = vmatmul.mubr.f32.gmra.mrb[0].mxu0 %v2201
        %v2274 = vpop.f32.mrb[0].mxu0
        %v2275 = vadd.f32 %v678, %v2274
        %v2276 = vpop.f32.mrb[0].mxu0
        %2277 = vdwg.mxu0
        %v2279 = vsel %vm680, %v644, 0
        %v2282 = vsel %vm680, %v645, 0
        %2284 = vmatprep.subr.mxu0 0.0
        %2285 = vmatpush1.msra.mxu0 %v651
        %2286 = vmatprep.subr.mxu0 0.0
        %2287 = vmatpush1.msra.mxu0 %v652
        %2288 = vmatprep.subr.mxu0 0.0
        %2289 = vmatpush1.msra.mxu0 %v653
        %2290 = vmatprep.subr.mxu0 0.0
        %2291 = vmatpush1.msra.mxu0 %v654
        %2292 = vmatprep.subr.mxu0 0.0
        %2293 = vmatpush1.msra.mxu0 0.0
        %2294 = vmatprep.subr.mxu0 0.0
        %2295 = vmatpush1.msra.mxu0 0.0
        %2296 = vmatprep.subr.mxu0 0.0
        %2297 = vmatpush1.msra.mxu0 0.0
        %2298 = vmatprep.subr.mxu0 0.0
        %2299 = vmatpush1.msra.mxu0 0.0
        %2300 = vmatprep.subr.mxu0 0.0
        %2301 = vmatpush1.msra.mxu0 0.0
        %2302 = vmatprep.subr.mxu0 0.0
        %2303 = vmatpush1.msra.mxu0 0.0
        %2304 = vmatprep.subr.mxu0 0.0
        %2305 = vmatpush1.msra.mxu0 0.0
        %2306 = vmatprep.subr.mxu0 0.0
        %2307 = vmatpush1.msra.mxu0 0.0
        %2308 = vmatprep.subr.mxu0 0.0
        %2309 = vmatpush1.msra.mxu0 0.0
        %2310 = vmatprep.subr.mxu0 0.0
        %2311 = vmatpush1.msra.mxu0 0.0
        %2312 = vmatprep.subr.mxu0 0.0
        %2313 = vmatpush1.msra.mxu0 0.0
        %2314 = vmatprep.subr.mxu0 0.0
        %2315 = vmatpush1.msra.mxu0 0.0
        %2316 = vmatprep.subr.mxu0 0.0
        %2317 = vmatpush1.msra.mxu0 0.0
        %2318 = vmatprep.subr.mxu0 0.0
        %2319 = vmatpush1.msra.mxu0 0.0
        %2320 = vmatprep.subr.mxu0 0.0
        %2321 = vmatpush1.msra.mxu0 0.0
        %2322 = vmatprep.subr.mxu0 0.0
        %2323 = vmatpush1.msra.mxu0 0.0
        %2324 = vmatprep.subr.mxu0 0.0
        %2325 = vmatpush1.msra.mxu0 0.0
        %2326 = vmatprep.subr.mxu0 0.0
        %2327 = vmatpush1.msra.mxu0 0.0
        %2328 = vmatprep.subr.mxu0 0.0
        %2329 = vmatpush1.msra.mxu0 0.0
        %2330 = vmatprep.subr.mxu0 0.0
        %2331 = vmatpush1.msra.mxu0 0.0
        %2332 = vmatprep.subr.mxu0 0.0
        %2333 = vmatpush1.msra.mxu0 0.0
        %2334 = vmatprep.subr.mxu0 0.0
        %2335 = vmatpush1.msra.mxu0 0.0
        %2336 = vmatprep.subr.mxu0 0.0
        %2337 = vmatpush1.msra.mxu0 0.0
        %2338 = vmatprep.subr.mxu0 0.0
        %2339 = vmatpush1.msra.mxu0 0.0
        %2340 = vmatprep.subr.mxu0 0.0
        %2341 = vmatpush1.msra.mxu0 0.0
        %2342 = vmatprep.subr.mxu0 0.0
        %2343 = vmatpush1.msra.mxu0 0.0
        %2344 = vmatprep.subr.mxu0 0.0
        %2345 = vmatpush1.msra.mxu0 0.0
        %2346 = vmatprep.subr.mxu0 0.0
        %2347 = vmatpush1.msra.mxu0 0.0
        %2348 = vmatprep.mubr.f32.mxu0 0.0
        %2349 = vmatmul.mubr.f32.gmra.mrb[0].mxu0 %v2279
        %v2350 = vpop.f32.mrb[0].mxu0
        %v2351 = vadd.f32 %v766, %v2350
        %v2352 = vpop.f32.mrb[0].mxu0
        %2353 = vmatprep.mubr.f32.mxu0 0.0
        %2354 = vmatmul.mubr.f32.gmra.mrb[0].mxu0 %v2282
        %v2355 = vpop.f32.mrb[0].mxu0
        %v2356 = vadd.f32 %v766, %v2355
        %v2357 = vpop.f32.mrb[0].mxu0
        %2358 = vdwg.mxu0
        %2359 = vmatprep.subr.mxu0 0.0
        %2360 = vmatpush1.msra.mxu0 %v656
        %2361 = vmatprep.subr.mxu0 0.0
        %2362 = vmatpush1.msra.mxu0 %v657
        %2363 = vmatprep.subr.mxu0 0.0
        %2364 = vmatpush1.msra.mxu0 %v658
        %2365 = vmatprep.subr.mxu0 0.0
        %2366 = vmatpush1.msra.mxu0 %v659
        %2367 = vmatprep.subr.mxu0 0.0
        %2368 = vmatpush1.msra.mxu0 0.0
        %2369 = vmatprep.subr.mxu0 0.0
        %2370 = vmatpush1.msra.mxu0 0.0
        %2371 = vmatprep.subr.mxu0 0.0
        %2372 = vmatpush1.msra.mxu0 0.0
        %2373 = vmatprep.subr.mxu0 0.0
        %2374 = vmatpush1.msra.mxu0 0.0
        %2375 = vmatprep.subr.mxu0 0.0
        %2376 = vmatpush1.msra.mxu0 0.0
        %2377 = vmatprep.subr.mxu0 0.0
        %2378 = vmatpush1.msra.mxu0 0.0
        %2379 = vmatprep.subr.mxu0 0.0
        %2380 = vmatpush1.msra.mxu0 0.0
        %2381 = vmatprep.subr.mxu0 0.0
        %2382 = vmatpush1.msra.mxu0 0.0
        %2383 = vmatprep.subr.mxu0 0.0
        %2384 = vmatpush1.msra.mxu0 0.0
        %2385 = vmatprep.subr.mxu0 0.0
        %2386 = vmatpush1.msra.mxu0 0.0
        %2387 = vmatprep.subr.mxu0 0.0
        %2388 = vmatpush1.msra.mxu0 0.0
        %2389 = vmatprep.subr.mxu0 0.0
        %2390 = vmatpush1.msra.mxu0 0.0
        %2391 = vmatprep.subr.mxu0 0.0
        %2392 = vmatpush1.msra.mxu0 0.0
        %2393 = vmatprep.subr.mxu0 0.0
        %2394 = vmatpush1.msra.mxu0 0.0
        %2395 = vmatprep.subr.mxu0 0.0
        %2396 = vmatpush1.msra.mxu0 0.0
        %2397 = vmatprep.subr.mxu0 0.0
        %2398 = vmatpush1.msra.mxu0 0.0
        %2399 = vmatprep.subr.mxu0 0.0
        %2400 = vmatpush1.msra.mxu0 0.0
        %2401 = vmatprep.subr.mxu0 0.0
        %2402 = vmatpush1.msra.mxu0 0.0
        %2403 = vmatprep.subr.mxu0 0.0
        %2404 = vmatpush1.msra.mxu0 0.0
        %2405 = vmatprep.subr.mxu0 0.0
        %2406 = vmatpush1.msra.mxu0 0.0
        %2407 = vmatprep.subr.mxu0 0.0
        %2408 = vmatpush1.msra.mxu0 0.0
        %2409 = vmatprep.subr.mxu0 0.0
        %2410 = vmatpush1.msra.mxu0 0.0
        %2411 = vmatprep.subr.mxu0 0.0
        %2412 = vmatpush1.msra.mxu0 0.0
        %2413 = vmatprep.subr.mxu0 0.0
        %2414 = vmatpush1.msra.mxu0 0.0
        %2415 = vmatprep.subr.mxu0 0.0
        %2416 = vmatpush1.msra.mxu0 0.0
        %2417 = vmatprep.subr.mxu0 0.0
        %2418 = vmatpush1.msra.mxu0 0.0
        %2419 = vmatprep.subr.mxu0 0.0
        %2420 = vmatpush1.msra.mxu0 0.0
        %2421 = vmatprep.subr.mxu0 0.0
        %2422 = vmatpush1.msra.mxu0 0.0
        %2423 = vmatprep.mubr.f32.mxu0 0.0
        %2424 = vmatmul.mubr.f32.gmra.mrb[0].mxu0 %v2198
        %v2425 = vpop.f32.mrb[0].mxu0
        %v2426 = vadd.f32 %v853, %v2425
        %v2427 = vpop.f32.mrb[0].mxu0
        %2428 = vmatprep.mubr.f32.mxu0 0.0
        %2429 = vmatmul.mubr.f32.gmra.mrb[0].mxu0 %v2201
        %v2430 = vpop.f32.mrb[0].mxu0
        %v2431 = vadd.f32 %v853, %v2430
        %v2432 = vpop.f32.mrb[0].mxu0
        %2433 = vdwg.mxu0
        %v2435 = vsel %vm930, %v2270, 0
        %v2438 = vsel %vm930, %v2275, 0
        %v2441 = vsel %vm930, %v2351, 0
        %v2444 = vsel %vm930, %v2356, 0
        %2446 = vmatprep.subr.mxu0 0.0
        %2447 = vmatpush1.xpose.msra.mxu0 %v2441
        %2448 = vmatprep.subr.mxu0 0.0
        %2449 = vmatpush1.xpose.msra.mxu0 %v2444
        %2450 = vmatprep.subr.mxu0 0.0
        %2451 = vmatpush1.xpose.msra.mxu0 0.0
        %2452 = vmatprep.subr.mxu0 0.0
        %2453 = vmatpush1.xpose.msra.mxu0 0.0
        %2454 = vmatprep.subr.mxu0 0.0
        %2455 = vmatpush1.xpose.msra.mxu0 0.0
        %2456 = vmatprep.subr.mxu0 0.0
        %2457 = vmatpush1.xpose.msra.mxu0 0.0
        %2458 = vmatprep.subr.mxu0 0.0
        %2459 = vmatpush1.xpose.msra.mxu0 0.0
        %2460 = vmatprep.subr.mxu0 0.0
        %2461 = vmatpush1.xpose.msra.mxu0 0.0
        %2462 = vmatprep.subr.mxu0 0.0
        %2463 = vmatpush1.xpose.msra.mxu0 0.0
        %2464 = vmatprep.subr.mxu0 0.0
        %2465 = vmatpush1.xpose.msra.mxu0 0.0
        %2466 = vmatprep.subr.mxu0 0.0
        %2467 = vmatpush1.xpose.msra.mxu0 0.0
        %2468 = vmatprep.subr.mxu0 0.0
        %2469 = vmatpush1.xpose.msra.mxu0 0.0
        %2470 = vmatprep.subr.mxu0 0.0
        %2471 = vmatpush1.xpose.msra.mxu0 0.0
        %2472 = vmatprep.subr.mxu0 0.0
        %2473 = vmatpush1.xpose.msra.mxu0 0.0
        %2474 = vmatprep.subr.mxu0 0.0
        %2475 = vmatpush1.xpose.msra.mxu0 0.0
        %2476 = vmatprep.subr.mxu0 0.0
        %2477 = vmatpush1.xpose.msra.mxu0 0.0
        %2478 = vmatprep.subr.mxu0 0.0
        %2479 = vmatpush1.xpose.msra.mxu0 0.0
        %2480 = vmatprep.subr.mxu0 0.0
        %2481 = vmatpush1.xpose.msra.mxu0 0.0
        %2482 = vmatprep.subr.mxu0 0.0
        %2483 = vmatpush1.xpose.msra.mxu0 0.0
        %2484 = vmatprep.subr.mxu0 0.0
        %2485 = vmatpush1.xpose.msra.mxu0 0.0
        %2486 = vmatprep.subr.mxu0 0.0
        %2487 = vmatpush1.xpose.msra.mxu0 0.0
        %2488 = vmatprep.subr.mxu0 0.0
        %2489 = vmatpush1.xpose.msra.mxu0 0.0
        %2490 = vmatprep.subr.mxu0 0.0
        %2491 = vmatpush1.xpose.msra.mxu0 0.0
        %2492 = vmatprep.subr.mxu0 0.0
        %2493 = vmatpush1.xpose.msra.mxu0 0.0
        %2494 = vmatprep.subr.mxu0 0.0
        %2495 = vmatpush1.xpose.msra.mxu0 0.0
        %2496 = vmatprep.subr.mxu0 0.0
        %2497 = vmatpush1.xpose.msra.mxu0 0.0
        %2498 = vmatprep.subr.mxu0 0.0
        %2499 = vmatpush1.xpose.msra.mxu0 0.0
        %2500 = vmatprep.subr.mxu0 0.0
        %2501 = vmatpush1.xpose.msra.mxu0 0.0
        %2502 = vmatprep.subr.mxu0 0.0
        %2503 = vmatpush1.xpose.msra.mxu0 0.0
        %2504 = vmatprep.subr.mxu0 0.0
        %2505 = vmatpush1.xpose.msra.mxu0 0.0
        %2506 = vmatprep.subr.mxu0 0.0
        %2507 = vmatpush1.xpose.msra.mxu0 0.0
        %2508 = vmatprep.subr.mxu0 0.0
        %2509 = vmatpush1.xpose.msra.mxu0 0.0
        %2510 = vmatprep.mubr.f32.mxu0 0.0
        %2511 = vmatmul.mubr.f32.gmra.mrb[0].mxu0 %v2435
        %v2512 = vpop.f32.mrb[0].mxu0
        %v2513 = vadd.f32 0.0, %v2512
        %v2514 = vpop.f32.mrb[0].mxu0
        %2515 = vmatprep.mubr.f32.mxu0 0.0
        %2516 = vmatmul.mubr.f32.gmra.mrb[0].mxu0 %v2438
        %v2517 = vpop.f32.mrb[0].mxu0
        %v2518 = vadd.f32 0.0, %v2517
        %v2519 = vpop.f32.mrb[0].mxu0
        %2520 = vdwg.mxu0
        %v2521 = vmul.f32 %v2513, 0.35355338
        %v2522 = vmul.f32 %v2518, 0.35355338
        %v2523 = vsel %vm1020, %v2521, -inf
        %2524 = vmax.xlane.f32.xlu0 %v2523
        %v2525 = vpop.xlane.xlu0 %2524
        %v2526 = vsel %vm1020, %v2522, -inf
        %2527 = vmax.xlane.f32.xlu0 %v2526
        %v2528 = vpop.xlane.xlu0 %2527
        %v2529 = vsub.f32 %v2521, %v2525
        %v2530 = vsub.f32 %v2522, %v2528
        %v2531 = vmul.f32 %v2529, 1.442695
        %v2532 = vpow.pop %v2531
        %v2533 = vmul.f32 %v2530, 1.442695
        %v2534 = vpow.pop %v2533
        %2535 = vrot.lane.b32.xlu0 %v2351, 96
        %v2536 = vpop.permute.xlu0 %2535
        %2537 = vrot.lane.b32.xlu0 %v2356, 96
        %v2538 = vpop.permute.xlu0 %2537
        %v2542 = vsel %vm1020, %v2532, 0
        %v2545 = vsel %vm1020, %v2534, 0
        %2547 = vmatprep.subr.mxu0 0.0
        %2548 = vmatpush1.msra.mxu0 %v2536
        %2549 = vmatprep.subr.mxu0 0.0
        %2550 = vmatpush1.msra.mxu0 %v2538
        %2551 = vmatprep.subr.mxu0 0.0
        %2552 = vmatpush1.msra.mxu0 0.0
        %2553 = vmatprep.subr.mxu0 0.0
        %2554 = vmatpush1.msra.mxu0 0.0
        %2555 = vmatprep.subr.mxu0 0.0
        %2556 = vmatpush1.msra.mxu0 0.0
        %2557 = vmatprep.subr.mxu0 0.0
        %2558 = vmatpush1.msra.mxu0 0.0
        %2559 = vmatprep.subr.mxu0 0.0
        %2560 = vmatpush1.msra.mxu0 0.0
        %2561 = vmatprep.subr.mxu0 0.0
        %2562 = vmatpush1.msra.mxu0 0.0
        %2563 = vmatprep.subr.mxu0 0.0
        %2564 = vmatpush1.msra.mxu0 0.0
        %2565 = vmatprep.subr.mxu0 0.0
        %2566 = vmatpush1.msra.mxu0 0.0
        %2567 = vmatprep.subr.mxu0 0.0
        %2568 = vmatpush1.msra.mxu0 0.0
        %2569 = vmatprep.subr.mxu0 0.0
        %2570 = vmatpush1.msra.mxu0 0.0
        %2571 = vmatprep.subr.mxu0 0.0
        %2572 = vmatpush1.msra.mxu0 0.0
        %2573 = vmatprep.subr.mxu0 0.0
        %2574 = vmatpush1.msra.mxu0 0.0
        %2575 = vmatprep.subr.mxu0 0.0
        %2576 = vmatpush1.msra.mxu0 0.0
        %2577 = vmatprep.subr.mxu0 0.0
        %2578 = vmatpush1.msra.mxu0 0.0
        %2579 = vmatprep.subr.mxu0 0.0
        %2580 = vmatpush1.msra.mxu0 0.0
        %2581 = vmatprep.subr.mxu0 0.0
        %2582 = vmatpush1.msra.mxu0 0.0
        %2583 = vmatprep.subr.mxu0 0.0
        %2584 = vmatpush1.msra.mxu0 0.0
        %2585 = vmatprep.subr.mxu0 0.0
        %2586 = vmatpush1.msra.mxu0 0.0
        %2587 = vmatprep.subr.mxu0 0.0
        %2588 = vmatpush1.msra.mxu0 0.0
        %2589 = vmatprep.subr.mxu0 0.0
        %2590 = vmatpush1.msra.mxu0 0.0
        %2591 = vmatprep.subr.mxu0 0.0
        %2592 = vmatpush1.msra.mxu0 0.0
        %2593 = vmatprep.subr.mxu0 0.0
        %2594 = vmatpush1.msra.mxu0 0.0
        %2595 = vmatprep.subr.mxu0 0.0
        %2596 = vmatpush1.msra.mxu0 0.0
        %2597 = vmatprep.subr.mxu0 0.0
        %2598 = vmatpush1.msra.mxu0 0.0
        %2599 = vmatprep.subr.mxu0 0.0
        %2600 = vmatpush1.msra.mxu0 0.0
        %2601 = vmatprep.subr.mxu0 0.0
        %2602 = vmatpush1.msra.mxu0 0.0
        %2603 = vmatprep.subr.mxu0 0.0
        %2604 = vmatpush1.msra.mxu0 0.0
        %2605 = vmatprep.subr.mxu0 0.0
        %2606 = vmatpush1.msra.mxu0 0.0
        %2607 = vmatprep.subr.mxu0 0.0
        %2608 = vmatpush1.msra.mxu0 0.0
        %2609 = vmatprep.subr.mxu0 0.0
        %2610 = vmatpush1.msra.mxu0 0.0
        %2611 = vmatprep.mubr.f32.mxu0 0.0
        %2612 = vmatmul.mubr.f32.gmra.mrb[0].mxu0 %v2542
        %v2613 = vpop.f32.mrb[0].mxu0
        %v2614 = vadd.f32 0.0, %v2613
        %v2615 = vpop.f32.mrb[0].mxu0
        %2616 = vmatprep.mubr.f32.mxu0 0.0
        %2617 = vmatmul.mubr.f32.gmra.mrb[0].mxu0 %v2545
        %v2618 = vpop.f32.mrb[0].mxu0
        %v2619 = vadd.f32 0.0, %v2618
        %v2620 = vpop.f32.mrb[0].mxu0
        %2621 = vdwg.mxu0
        %v2622 = vsel %vm1020, %v2532, 0.0
        %2623 = vadd.xlane.f32.xlu0 %v2622
        %v2624 = vpop.xlane.xlu0 %2623
        %v2625 = vsel %vm1020, %v2534, 0.0
        %2626 = vadd.xlane.f32.xlu0 %v2625
        %v2627 = vpop.xlane.xlu0 %2626
        %v2628 = vrcp.pop %v2624
        %v2629 = vmul.f32 %v2614, %v2628
        %v2630 = vrcp.pop %v2627
        %v2631 = vmul.f32 %v2619, %v2630
        %v2633 = vsel %vm930, %v2629, 0
        %v2636 = vsel %vm930, %v2631, 0
        %2638 = vmatprep.subr.mxu0 0.0
        %2639 = vmatpush1.msra.mxu0 %v660
        %2640 = vmatprep.subr.mxu0 0.0
        %2641 = vmatpush1.msra.mxu0 0.0
        %2642 = vmatprep.subr.mxu0 0.0
        %2643 = vmatpush1.msra.mxu0 0.0
        %2644 = vmatprep.subr.mxu0 0.0
        %2645 = vmatpush1.msra.mxu0 0.0
        %2646 = vmatprep.subr.mxu0 0.0
        %2647 = vmatpush1.msra.mxu0 0.0
        %2648 = vmatprep.subr.mxu0 0.0
        %2649 = vmatpush1.msra.mxu0 0.0
        %2650 = vmatprep.subr.mxu0 0.0
        %2651 = vmatpush1.msra.mxu0 0.0
        %2652 = vmatprep.subr.mxu0 0.0
        %2653 = vmatpush1.msra.mxu0 0.0
        %2654 = vmatprep.subr.mxu0 0.0
        %2655 = vmatpush1.msra.mxu0 0.0
        %2656 = vmatprep.subr.mxu0 0.0
        %2657 = vmatpush1.msra.mxu0 0.0
        %2658 = vmatprep.subr.mxu0 0.0
        %2659 = vmatpush1.msra.mxu0 0.0
        %2660 = vmatprep.subr.mxu0 0.0
        %2661 = vmatpush1.msra.mxu0 0.0
        %2662 = vmatprep.subr.mxu0 0.0
        %2663 = vmatpush1.msra.mxu0 0.0
        %2664 = vmatprep.subr.mxu0 0.0
        %2665 = vmatpush1.msra.mxu0 0.0
        %2666 = vmatprep.subr.mxu0 0.0
        %2667 = vmatpush1.msra.mxu0 0.0
        %2668 = vmatprep.subr.mxu0 0.0
        %2669 = vmatpush1.msra.mxu0 0.0
        %2670 = vmatprep.subr.mxu0 0.0
        %2671 = vmatpush1.msra.mxu0 0.0
        %2672 = vmatprep.subr.mxu0 0.0
        %2673 = vmatpush1.msra.mxu0 0.0
        %2674 = vmatprep.subr.mxu0 0.0
        %2675 = vmatpush1.msra.mxu0 0.0
        %2676 = vmatprep.subr.mxu0 0.0
        %2677 = vmatpush1.msra.mxu0 0.0
        %2678 = vmatprep.subr.mxu0 0.0
        %2679 = vmatpush1.msra.mxu0 0.0
        %2680 = vmatprep.subr.mxu0 0.0
        %2681 = vmatpush1.msra.mxu0 0.0
        %2682 = vmatprep.subr.mxu0 0.0
        %2683 = vmatpush1.msra.mxu0 0.0
        %2684 = vmatprep.subr.mxu0 0.0
        %2685 = vmatpush1.msra.mxu0 0.0
        %2686 = vmatprep.subr.mxu0 0.0
        %2687 = vmatpush1.msra.mxu0 0.0
        %2688 = vmatprep.subr.mxu0 0.0
        %2689 = vmatpush1.msra.mxu0 0.0
        %2690 = vmatprep.subr.mxu0 0.0
        %2691 = vmatpush1.msra.mxu0 0.0
        %2692 = vmatprep.subr.mxu0 0.0
        %2693 = vmatpush1.msra.mxu0 0.0
        %2694 = vmatprep.subr.mxu0 0.0
        %2695 = vmatpush1.msra.mxu0 0.0
        %2696 = vmatprep.subr.mxu0 0.0
        %2697 = vmatpush1.msra.mxu0 0.0
        %2698 = vmatprep.subr.mxu0 0.0
        %2699 = vmatpush1.msra.mxu0 0.0
        %2700 = vmatprep.subr.mxu0 0.0
        %2701 = vmatpush1.msra.mxu0 0.0
        %2702 = vmatprep.mubr.f32.mxu0 0.0
        %2703 = vmatmul.mubr.f32.gmra.mrb[0].mxu0 %v2633
        %v2704 = vpop.f32.mrb[0].mxu0
        %v2705 = vadd.f32 0.0, %v2704
        %v2706 = vpop.f32.mrb[0].mxu0
        %2707 = vmatprep.mubr.f32.mxu0 0.0
        %2708 = vmatmul.mubr.f32.gmra.mrb[0].mxu0 %v2636
        %v2709 = vpop.f32.mrb[0].mxu0
        %v2710 = vadd.f32 0.0, %v2709
        %v2711 = vpop.f32.mrb[0].mxu0
        %2712 = vdwg.mxu0
        %v2713 = vadd.f32 %v2426, %v2705
        %v2714 = vadd.f32 %v2431, %v2710
        %2715 = vrot.lane.b32.xlu0 %v2270, 120
        %v2716 = vpop.permute.xlu0 %2715
        %2717 = vrot.lane.b32.xlu0 %v2275, 120
        %v2718 = vpop.permute.xlu0 %2717
        %2719 = vrot.lane.b32.xlu0 %v2351, 120
        %v2720 = vpop.permute.xlu0 %2719
        %2721 = vrot.lane.b32.xlu0 %v2356, 120
        %v2722 = vpop.permute.xlu0 %2721
        %v2723 = vsel %vm930, %v2716, 0
        %v2725 = vsel %vm930, %v2718, 0
        %v2727 = vsel %vm930, %v2720, 0
        %v2729 = vsel %vm930, %v2722, 0
        %2731 = vmatprep.subr.mxu0 0.0
        %2732 = vmatpush1.xpose.msra.mxu0 %v2727
        %2733 = vmatprep.subr.mxu0 0.0
        %2734 = vmatpush1.xpose.msra.mxu0 %v2729
        %2735 = vmatprep.subr.mxu0 0.0
        %2736 = vmatpush1.xpose.msra.mxu0 0.0
        %2737 = vmatprep.subr.mxu0 0.0
        %2738 = vmatpush1.xpose.msra.mxu0 0.0
        %2739 = vmatprep.subr.mxu0 0.0
        %2740 = vmatpush1.xpose.msra.mxu0 0.0
        %2741 = vmatprep.subr.mxu0 0.0
        %2742 = vmatpush1.xpose.msra.mxu0 0.0
        %2743 = vmatprep.subr.mxu0 0.0
        %2744 = vmatpush1.xpose.msra.mxu0 0.0
        %2745 = vmatprep.subr.mxu0 0.0
        %2746 = vmatpush1.xpose.msra.mxu0 0.0
        %2747 = vmatprep.subr.mxu0 0.0
        %2748 = vmatpush1.xpose.msra.mxu0 0.0
        %2749 = vmatprep.subr.mxu0 0.0
        %2750 = vmatpush1.xpose.msra.mxu0 0.0
        %2751 = vmatprep.subr.mxu0 0.0
        %2752 = vmatpush1.xpose.msra.mxu0 0.0
        %2753 = vmatprep.subr.mxu0 0.0
        %2754 = vmatpush1.xpose.msra.mxu0 0.0
        %2755 = vmatprep.subr.mxu0 0.0
        %2756 = vmatpush1.xpose.msra.mxu0 0.0
        %2757 = vmatprep.subr.mxu0 0.0
        %2758 = vmatpush1.xpose.msra.mxu0 0.0
        %2759 = vmatprep.subr.mxu0 0.0
        %2760 = vmatpush1.xpose.msra.mxu0 0.0
        %2761 = vmatprep.subr.mxu0 0.0
        %2762 = vmatpush1.xpose.msra.mxu0 0.0
        %2763 = vmatprep.subr.mxu0 0.0
        %2764 = vmatpush1.xpose.msra.mxu0 0.0
        %2765 = vmatprep.subr.mxu0 0.0
        %2766 = vmatpush1.xpose.msra.mxu0 0.0
        %2767 = vmatprep.subr.mxu0 0.0
        %2768 = vmatpush1.xpose.msra.mxu0 0.0
        %2769 = vmatprep.subr.mxu0 0.0
        %2770 = vmatpush1.xpose.msra.mxu0 0.0
        %2771 = vmatprep.subr.mxu0 0.0
        %2772 = vmatpush1.xpose.msra.mxu0 0.0
        %2773 = vmatprep.subr.mxu0 0.0
        %2774 = vmatpush1.xpose.msra.mxu0 0.0
        %2775 = vmatprep.subr.mxu0 0.0
        %2776 = vmatpush1.xpose.msra.mxu0 0.0
        %2777 = vmatprep.subr.mxu0 0.0
        %2778 = vmatpush1.xpose.msra.mxu0 0.0
        %2779 = vmatprep.subr.mxu0 0.0
        %2780 = vmatpush1.xpose.msra.mxu0 0.0
        %2781 = vmatprep.subr.mxu0 0.0
        %2782 = vmatpush1.xpose.msra.mxu0 0.0
        %2783 = vmatprep.subr.mxu0 0.0
        %2784 = vmatpush1.xpose.msra.mxu0 0.0
        %2785 = vmatprep.subr.mxu0 0.0
        %2786 = vmatpush1.xpose.msra.mxu0 0.0
        %2787 = vmatprep.subr.mxu0 0.0
        %2788 = vmatpush1.xpose.msra.mxu0 0.0
        %2789 = vmatprep.subr.mxu0 0.0
        %2790 = vmatpush1.xpose.msra.mxu0 0.0
        %2791 = vmatprep.subr.mxu0 0.0
        %2792 = vmatpush1.xpose.msra.mxu0 0.0
        %2793 = vmatprep.subr.mxu0 0.0
        %2794 = vmatpush1.xpose.msra.mxu0 0.0
        %2795 = vmatprep.mubr.f32.mxu0 0.0
        %2796 = vmatmul.mubr.f32.gmra.mrb[0].mxu0 %v2723
        %v2797 = vpop.f32.mrb[0].mxu0
        %v2798 = vadd.f32 0.0, %v2797
        %v2799 = vpop.f32.mrb[0].mxu0
        %2800 = vmatprep.mubr.f32.mxu0 0.0
        %2801 = vmatmul.mubr.f32.gmra.mrb[0].mxu0 %v2725
        %v2802 = vpop.f32.mrb[0].mxu0
        %v2803 = vadd.f32 0.0, %v2802
        %v2804 = vpop.f32.mrb[0].mxu0
        %2805 = vdwg.mxu0
        %v2806 = vmul.f32 %v2798, 0.35355338
        %v2807 = vmul.f32 %v2803, 0.35355338
        %v2808 = vsel %vm1020, %v2806, -inf
        %2809 = vmax.xlane.f32.xlu0 %v2808
        %v2810 = vpop.xlane.xlu0 %2809
        %v2811 = vsel %vm1020, %v2807, -inf
        %2812 = vmax.xlane.f32.xlu0 %v2811
        %v2813 = vpop.xlane.xlu0 %2812
        %v2814 = vsub.f32 %v2806, %v2810
        %v2815 = vsub.f32 %v2807, %v2813
        %v2816 = vmul.f32 %v2814, 1.442695
        %v2817 = vpow.pop %v2816
        %v2818 = vmul.f32 %v2815, 1.442695
        %v2819 = vpow.pop %v2818
        %2820 = vrot.lane.b32.xlu0 %v2351, 88
        %v2821 = vpop.permute.xlu0 %2820
        %2822 = vrot.lane.b32.xlu0 %v2356, 88
        %v2823 = vpop.permute.xlu0 %2822
        %v2827 = vsel %vm1020, %v2817, 0
        %v2830 = vsel %vm1020, %v2819, 0
        %2832 = vmatprep.subr.mxu0 0.0
        %2833 = vmatpush1.msra.mxu0 %v2821
        %2834 = vmatprep.subr.mxu0 0.0
        %2835 = vmatpush1.msra.mxu0 %v2823
        %2836 = vmatprep.subr.mxu0 0.0
        %2837 = vmatpush1.msra.mxu0 0.0
        %2838 = vmatprep.subr.mxu0 0.0
        %2839 = vmatpush1.msra.mxu0 0.0
        %2840 = vmatprep.subr.mxu0 0.0
        %2841 = vmatpush1.msra.mxu0 0.0
        %2842 = vmatprep.subr.mxu0 0.0
        %2843 = vmatpush1.msra.mxu0 0.0
        %2844 = vmatprep.subr.mxu0 0.0
        %2845 = vmatpush1.msra.mxu0 0.0
        %2846 = vmatprep.subr.mxu0 0.0
        %2847 = vmatpush1.msra.mxu0 0.0
        %2848 = vmatprep.subr.mxu0 0.0
        %2849 = vmatpush1.msra.mxu0 0.0
        %2850 = vmatprep.subr.mxu0 0.0
        %2851 = vmatpush1.msra.mxu0 0.0
        %2852 = vmatprep.subr.mxu0 0.0
        %2853 = vmatpush1.msra.mxu0 0.0
        %2854 = vmatprep.subr.mxu0 0.0
        %2855 = vmatpush1.msra.mxu0 0.0
        %2856 = vmatprep.subr.mxu0 0.0
        %2857 = vmatpush1.msra.mxu0 0.0
        %2858 = vmatprep.subr.mxu0 0.0
        %2859 = vmatpush1.msra.mxu0 0.0
        %2860 = vmatprep.subr.mxu0 0.0
        %2861 = vmatpush1.msra.mxu0 0.0
        %2862 = vmatprep.subr.mxu0 0.0
        %2863 = vmatpush1.msra.mxu0 0.0
        %2864 = vmatprep.subr.mxu0 0.0
        %2865 = vmatpush1.msra.mxu0 0.0
        %2866 = vmatprep.subr.mxu0 0.0
        %2867 = vmatpush1.msra.mxu0 0.0
        %2868 = vmatprep.subr.mxu0 0.0
        %2869 = vmatpush1.msra.mxu0 0.0
        %2870 = vmatprep.subr.mxu0 0.0
        %2871 = vmatpush1.msra.mxu0 0.0
        %2872 = vmatprep.subr.mxu0 0.0
        %2873 = vmatpush1.msra.mxu0 0.0
        %2874 = vmatprep.subr.mxu0 0.0
        %2875 = vmatpush1.msra.mxu0 0.0
        %2876 = vmatprep.subr.mxu0 0.0
        %2877 = vmatpush1.msra.mxu0 0.0
        %2878 = vmatprep.subr.mxu0 0.0
        %2879 = vmatpush1.msra.mxu0 0.0
        %2880 = vmatprep.subr.mxu0 0.0
        %2881 = vmatpush1.msra.mxu0 0.0
        %2882 = vmatprep.subr.mxu0 0.0
        %2883 = vmatpush1.msra.mxu0 0.0
        %2884 = vmatprep.subr.mxu0 0.0
        %2885 = vmatpush1.msra.mxu0 0.0
        %2886 = vmatprep.subr.mxu0 0.0
        %2887 = vmatpush1.msra.mxu0 0.0
        %2888 = vmatprep.subr.mxu0 0.0
        %2889 = vmatpush1.msra.mxu0 0.0
        %2890 = vmatprep.subr.mxu0 0.0
        %2891 = vmatpush1.msra.mxu0 0.0
        %2892 = vmatprep.subr.mxu0 0.0
        %2893 = vmatpush1.msra.mxu0 0.0
        %2894 = vmatprep.subr.mxu0 0.0
        %2895 = vmatpush1.msra.mxu0 0.0
        %2896 = vmatprep.mubr.f32.mxu0 0.0
        %2897 = vmatmul.mubr.f32.gmra.mrb[0].mxu0 %v2827
        %v2898 = vpop.f32.mrb[0].mxu0
        %v2899 = vadd.f32 0.0, %v2898
        %v2900 = vpop.f32.mrb[0].mxu0
        %2901 = vmatprep.mubr.f32.mxu0 0.0
        %2902 = vmatmul.mubr.f32.gmra.mrb[0].mxu0 %v2830
        %v2903 = vpop.f32.mrb[0].mxu0
        %v2904 = vadd.f32 0.0, %v2903
        %v2905 = vpop.f32.mrb[0].mxu0
        %2906 = vdwg.mxu0
        %v2907 = vsel %vm1020, %v2817, 0.0
        %2908 = vadd.xlane.f32.xlu0 %v2907
        %v2909 = vpop.xlane.xlu0 %2908
        %v2910 = vsel %vm1020, %v2819, 0.0
        %2911 = vadd.xlane.f32.xlu0 %v2910
        %v2912 = vpop.xlane.xlu0 %2911
        %v2913 = vrcp.pop %v2909
        %v2914 = vmul.f32 %v2899, %v2913
        %v2915 = vrcp.pop %v2912
        %v2916 = vmul.f32 %v2904, %v2915
        %v2918 = vsel %vm930, %v2914, 0
        %v2921 = vsel %vm930, %v2916, 0
        %2923 = vmatprep.subr.mxu0 0.0
        %2924 = vmatpush1.msra.mxu0 %v661
        %2925 = vmatprep.subr.mxu0 0.0
        %2926 = vmatpush1.msra.mxu0 0.0
        %2927 = vmatprep.subr.mxu0 0.0
        %2928 = vmatpush1.msra.mxu0 0.0
        %2929 = vmatprep.subr.mxu0 0.0
        %2930 = vmatpush1.msra.mxu0 0.0
        %2931 = vmatprep.subr.mxu0 0.0
        %2932 = vmatpush1.msra.mxu0 0.0
        %2933 = vmatprep.subr.mxu0 0.0
        %2934 = vmatpush1.msra.mxu0 0.0
        %2935 = vmatprep.subr.mxu0 0.0
        %2936 = vmatpush1.msra.mxu0 0.0
        %2937 = vmatprep.subr.mxu0 0.0
        %2938 = vmatpush1.msra.mxu0 0.0
        %2939 = vmatprep.subr.mxu0 0.0
        %2940 = vmatpush1.msra.mxu0 0.0
        %2941 = vmatprep.subr.mxu0 0.0
        %2942 = vmatpush1.msra.mxu0 0.0
        %2943 = vmatprep.subr.mxu0 0.0
        %2944 = vmatpush1.msra.mxu0 0.0
        %2945 = vmatprep.subr.mxu0 0.0
        %2946 = vmatpush1.msra.mxu0 0.0
        %2947 = vmatprep.subr.mxu0 0.0
        %2948 = vmatpush1.msra.mxu0 0.0
        %2949 = vmatprep.subr.mxu0 0.0
        %2950 = vmatpush1.msra.mxu0 0.0
        %2951 = vmatprep.subr.mxu0 0.0
        %2952 = vmatpush1.msra.mxu0 0.0
        %2953 = vmatprep.subr.mxu0 0.0
        %2954 = vmatpush1.msra.mxu0 0.0
        %2955 = vmatprep.subr.mxu0 0.0
        %2956 = vmatpush1.msra.mxu0 0.0
        %2957 = vmatprep.subr.mxu0 0.0
        %2958 = vmatpush1.msra.mxu0 0.0
        %2959 = vmatprep.subr.mxu0 0.0
        %2960 = vmatpush1.msra.mxu0 0.0
        %2961 = vmatprep.subr.mxu0 0.0
        %2962 = vmatpush1.msra.mxu0 0.0
        %2963 = vmatprep.subr.mxu0 0.0
        %2964 = vmatpush1.msra.mxu0 0.0
        %2965 = vmatprep.subr.mxu0 0.0
        %2966 = vmatpush1.msra.mxu0 0.0
        %2967 = vmatprep.subr.mxu0 0.0
        %2968 = vmatpush1.msra.mxu0 0.0
        %2969 = vmatprep.subr.mxu0 0.0
        %2970 = vmatpush1.msra.mxu0 0.0
        %2971 = vmatprep.subr.mxu0 0.0
        %2972 = vmatpush1.msra.mxu0 0.0
        %2973 = vmatprep.subr.mxu0 0.0
        %2974 = vmatpush1.msra.mxu0 0.0
        %2975 = vmatprep.subr.mxu0 0.0
        %2976 = vmatpush1.msra.mxu0 0.0
        %2977 = vmatprep.subr.mxu0 0.0
        %2978 = vmatpush1.msra.mxu0 0.0
        %2979 = vmatprep.subr.mxu0 0.0
        %2980 = vmatpush1.msra.mxu0 0.0
        %2981 = vmatprep.subr.mxu0 0.0
        %2982 = vmatpush1.msra.mxu0 0.0
        %2983 = vmatprep.subr.mxu0 0.0
        %2984 = vmatpush1.msra.mxu0 0.0
        %2985 = vmatprep.subr.mxu0 0.0
        %2986 = vmatpush1.msra.mxu0 0.0
        %2987 = vmatprep.mubr.f32.mxu0 0.0
        %2988 = vmatmul.mubr.f32.gmra.mrb[0].mxu0 %v2918
        %v2989 = vpop.f32.mrb[0].mxu0
        %v2990 = vadd.f32 0.0, %v2989
        %v2991 = vpop.f32.mrb[0].mxu0
        %2992 = vmatprep.mubr.f32.mxu0 0.0
        %2993 = vmatmul.mubr.f32.gmra.mrb[0].mxu0 %v2921
        %v2994 = vpop.f32.mrb[0].mxu0
        %v2995 = vadd.f32 0.0, %v2994
        %v2996 = vpop.f32.mrb[0].mxu0
        %2997 = vdwg.mxu0
        %v2998 = vadd.f32 %v2713, %v2990
        %v2999 = vadd.f32 %v2714, %v2995
        %3000 = vrot.lane.b32.xlu0 %v2270, 112
        %v3001 = vpop.permute.xlu0 %3000
        %3002 = vrot.lane.b32.xlu0 %v2275, 112
        %v3003 = vpop.permute.xlu0 %3002
        %3004 = vrot.lane.b32.xlu0 %v2351, 112
        %v3005 = vpop.permute.xlu0 %3004
        %3006 = vrot.lane.b32.xlu0 %v2356, 112
        %v3007 = vpop.permute.xlu0 %3006
        %v3008 = vsel %vm930, %v3001, 0
        %v3010 = vsel %vm930, %v3003, 0
        %v3012 = vsel %vm930, %v3005, 0
        %v3014 = vsel %vm930, %v3007, 0
        %3016 = vmatprep.subr.mxu0 0.0
        %3017 = vmatpush1.xpose.msra.mxu0 %v3012
        %3018 = vmatprep.subr.mxu0 0.0
        %3019 = vmatpush1.xpose.msra.mxu0 %v3014
        %3020 = vmatprep.subr.mxu0 0.0
        %3021 = vmatpush1.xpose.msra.mxu0 0.0
        %3022 = vmatprep.subr.mxu0 0.0
        %3023 = vmatpush1.xpose.msra.mxu0 0.0
        %3024 = vmatprep.subr.mxu0 0.0
        %3025 = vmatpush1.xpose.msra.mxu0 0.0
        %3026 = vmatprep.subr.mxu0 0.0
        %3027 = vmatpush1.xpose.msra.mxu0 0.0
        %3028 = vmatprep.subr.mxu0 0.0
        %3029 = vmatpush1.xpose.msra.mxu0 0.0
        %3030 = vmatprep.subr.mxu0 0.0
        %3031 = vmatpush1.xpose.msra.mxu0 0.0
        %3032 = vmatprep.subr.mxu0 0.0
        %3033 = vmatpush1.xpose.msra.mxu0 0.0
        %3034 = vmatprep.subr.mxu0 0.0
        %3035 = vmatpush1.xpose.msra.mxu0 0.0
        %3036 = vmatprep.subr.mxu0 0.0
        %3037 = vmatpush1.xpose.msra.mxu0 0.0
        %3038 = vmatprep.subr.mxu0 0.0
        %3039 = vmatpush1.xpose.msra.mxu0 0.0
        %3040 = vmatprep.subr.mxu0 0.0
        %3041 = vmatpush1.xpose.msra.mxu0 0.0
        %3042 = vmatprep.subr.mxu0 0.0
        %3043 = vmatpush1.xpose.msra.mxu0 0.0
        %3044 = vmatprep.subr.mxu0 0.0
        %3045 = vmatpush1.xpose.msra.mxu0 0.0
        %3046 = vmatprep.subr.mxu0 0.0
        %3047 = vmatpush1.xpose.msra.mxu0 0.0
        %3048 = vmatprep.subr.mxu0 0.0
        %3049 = vmatpush1.xpose.msra.mxu0 0.0
        %3050 = vmatprep.subr.mxu0 0.0
        %3051 = vmatpush1.xpose.msra.mxu0 0.0
        %3052 = vmatprep.subr.mxu0 0.0
        %3053 = vmatpush1.xpose.msra.mxu0 0.0
        %3054 = vmatprep.subr.mxu0 0.0
        %3055 = vmatpush1.xpose.msra.mxu0 0.0
        %3056 = vmatprep.subr.mxu0 0.0
        %3057 = vmatpush1.xpose.msra.mxu0 0.0
        %3058 = vmatprep.subr.mxu0 0.0
        %3059 = vmatpush1.xpose.msra.mxu0 0.0
        %3060 = vmatprep.subr.mxu0 0.0
        %3061 = vmatpush1.xpose.msra.mxu0 0.0
        %3062 = vmatprep.subr.mxu0 0.0
        %3063 = vmatpush1.xpose.msra.mxu0 0.0
        %3064 = vmatprep.subr.mxu0 0.0
        %3065 = vmatpush1.xpose.msra.mxu0 0.0
        %3066 = vmatprep.subr.mxu0 0.0
        %3067 = vmatpush1.xpose.msra.mxu0 0.0
        %3068 = vmatprep.subr.mxu0 0.0
        %3069 = vmatpush1.xpose.msra.mxu0 0.0
        %3070 = vmatprep.subr.mxu0 0.0
        %3071 = vmatpush1.xpose.msra.mxu0 0.0
        %3072 = vmatprep.subr.mxu0 0.0
        %3073 = vmatpush1.xpose.msra.mxu0 0.0
        %3074 = vmatprep.subr.mxu0 0.0
        %3075 = vmatpush1.xpose.msra.mxu0 0.0
        %3076 = vmatprep.subr.mxu0 0.0
        %3077 = vmatpush1.xpose.msra.mxu0 0.0
        %3078 = vmatprep.subr.mxu0 0.0
        %3079 = vmatpush1.xpose.msra.mxu0 0.0
        %3080 = vmatprep.mubr.f32.mxu0 0.0
        %3081 = vmatmul.mubr.f32.gmra.mrb[0].mxu0 %v3008
        %v3082 = vpop.f32.mrb[0].mxu0
        %v3083 = vadd.f32 0.0, %v3082
        %v3084 = vpop.f32.mrb[0].mxu0
        %3085 = vmatprep.mubr.f32.mxu0 0.0
        %3086 = vmatmul.mubr.f32.gmra.mrb[0].mxu0 %v3010
        %v3087 = vpop.f32.mrb[0].mxu0
        %v3088 = vadd.f32 0.0, %v3087
        %v3089 = vpop.f32.mrb[0].mxu0
        %3090 = vdwg.mxu0
        %v3091 = vmul.f32 %v3083, 0.35355338
        %v3092 = vmul.f32 %v3088, 0.35355338
        %v3093 = vsel %vm1020, %v3091, -inf
        %3094 = vmax.xlane.f32.xlu0 %v3093
        %v3095 = vpop.xlane.xlu0 %3094
        %v3096 = vsel %vm1020, %v3092, -inf
        %3097 = vmax.xlane.f32.xlu0 %v3096
        %v3098 = vpop.xlane.xlu0 %3097
        %v3099 = vsub.f32 %v3091, %v3095
        %v3100 = vsub.f32 %v3092, %v3098
        %v3101 = vmul.f32 %v3099, 1.442695
        %v3102 = vpow.pop %v3101
        %v3103 = vmul.f32 %v3100, 1.442695
        %v3104 = vpow.pop %v3103
        %3105 = vrot.lane.b32.xlu0 %v2351, 80
        %v3106 = vpop.permute.xlu0 %3105
        %3107 = vrot.lane.b32.xlu0 %v2356, 80
        %v3108 = vpop.permute.xlu0 %3107
        %v3112 = vsel %vm1020, %v3102, 0
        %v3115 = vsel %vm1020, %v3104, 0
        %3117 = vmatprep.subr.mxu0 0.0
        %3118 = vmatpush1.msra.mxu0 %v3106
        %3119 = vmatprep.subr.mxu0 0.0
        %3120 = vmatpush1.msra.mxu0 %v3108
        %3121 = vmatprep.subr.mxu0 0.0
        %3122 = vmatpush1.msra.mxu0 0.0
        %3123 = vmatprep.subr.mxu0 0.0
        %3124 = vmatpush1.msra.mxu0 0.0
        %3125 = vmatprep.subr.mxu0 0.0
        %3126 = vmatpush1.msra.mxu0 0.0
        %3127 = vmatprep.subr.mxu0 0.0
        %3128 = vmatpush1.msra.mxu0 0.0
        %3129 = vmatprep.subr.mxu0 0.0
        %3130 = vmatpush1.msra.mxu0 0.0
        %3131 = vmatprep.subr.mxu0 0.0
        %3132 = vmatpush1.msra.mxu0 0.0
        %3133 = vmatprep.subr.mxu0 0.0
        %3134 = vmatpush1.msra.mxu0 0.0
        %3135 = vmatprep.subr.mxu0 0.0
        %3136 = vmatpush1.msra.mxu0 0.0
        %3137 = vmatprep.subr.mxu0 0.0
        %3138 = vmatpush1.msra.mxu0 0.0
        %3139 = vmatprep.subr.mxu0 0.0
        %3140 = vmatpush1.msra.mxu0 0.0
        %3141 = vmatprep.subr.mxu0 0.0
        %3142 = vmatpush1.msra.mxu0 0.0
        %3143 = vmatprep.subr.mxu0 0.0
        %3144 = vmatpush1.msra.mxu0 0.0
        %3145 = vmatprep.subr.mxu0 0.0
        %3146 = vmatpush1.msra.mxu0 0.0
        %3147 = vmatprep.subr.mxu0 0.0
        %3148 = vmatpush1.msra.mxu0 0.0
        %3149 = vmatprep.subr.mxu0 0.0
        %3150 = vmatpush1.msra.mxu0 0.0
        %3151 = vmatprep.subr.mxu0 0.0
        %3152 = vmatpush1.msra.mxu0 0.0
        %3153 = vmatprep.subr.mxu0 0.0
        %3154 = vmatpush1.msra.mxu0 0.0
        %3155 = vmatprep.subr.mxu0 0.0
        %3156 = vmatpush1.msra.mxu0 0.0
        %3157 = vmatprep.subr.mxu0 0.0
        %3158 = vmatpush1.msra.mxu0 0.0
        %3159 = vmatprep.subr.mxu0 0.0
        %3160 = vmatpush1.msra.mxu0 0.0
        %3161 = vmatprep.subr.mxu0 0.0
        %3162 = vmatpush1.msra.mxu0 0.0
        %3163 = vmatprep.subr.mxu0 0.0
        %3164 = vmatpush1.msra.mxu0 0.0
        %3165 = vmatprep.subr.mxu0 0.0
        %3166 = vmatpush1.msra.mxu0 0.0
        %3167 = vmatprep.subr.mxu0 0.0
        %3168 = vmatpush1.msra.mxu0 0.0
        %3169 = vmatprep.subr.mxu0 0.0
        %3170 = vmatpush1.msra.mxu0 0.0
        %3171 = vmatprep.subr.mxu0 0.0
        %3172 = vmatpush1.msra.mxu0 0.0
        %3173 = vmatprep.subr.mxu0 0.0
        %3174 = vmatpush1.msra.mxu0 0.0
        %3175 = vmatprep.subr.mxu0 0.0
        %3176 = vmatpush1.msra.mxu0 0.0
        %3177 = vmatprep.subr.mxu0 0.0
        %3178 = vmatpush1.msra.mxu0 0.0
        %3179 = vmatprep.subr.mxu0 0.0
        %3180 = vmatpush1.msra.mxu0 0.0
        %3181 = vmatprep.mubr.f32.mxu0 0.0
        %3182 = vmatmul.mubr.f32.gmra.mrb[0].mxu0 %v3112
        %v3183 = vpop.f32.mrb[0].mxu0
        %v3184 = vadd.f32 0.0, %v3183
        %v3185 = vpop.f32.mrb[0].mxu0
        %3186 = vmatprep.mubr.f32.mxu0 0.0
        %3187 = vmatmul.mubr.f32.gmra.mrb[0].mxu0 %v3115
        %v3188 = vpop.f32.mrb[0].mxu0
        %v3189 = vadd.f32 0.0, %v3188
        %v3190 = vpop.f32.mrb[0].mxu0
        %3191 = vdwg.mxu0
        %v3192 = vsel %vm1020, %v3102, 0.0
        %3193 = vadd.xlane.f32.xlu0 %v3192
        %v3194 = vpop.xlane.xlu0 %3193
        %v3195 = vsel %vm1020, %v3104, 0.0
        %3196 = vadd.xlane.f32.xlu0 %v3195
        %v3197 = vpop.xlane.xlu0 %3196
        %v3198 = vrcp.pop %v3194
        %v3199 = vmul.f32 %v3184, %v3198
        %v3200 = vrcp.pop %v3197
        %v3201 = vmul.f32 %v3189, %v3200
        %v3203 = vsel %vm930, %v3199, 0
        %v3206 = vsel %vm930, %v3201, 0
        %3208 = vmatprep.subr.mxu0 0.0
        %3209 = vmatpush1.msra.mxu0 %v662
        %3210 = vmatprep.subr.mxu0 0.0
        %3211 = vmatpush1.msra.mxu0 0.0
        %3212 = vmatprep.subr.mxu0 0.0
        %3213 = vmatpush1.msra.mxu0 0.0
        %3214 = vmatprep.subr.mxu0 0.0
        %3215 = vmatpush1.msra.mxu0 0.0
        %3216 = vmatprep.subr.mxu0 0.0
        %3217 = vmatpush1.msra.mxu0 0.0
        %3218 = vmatprep.subr.mxu0 0.0
        %3219 = vmatpush1.msra.mxu0 0.0
        %3220 = vmatprep.subr.mxu0 0.0
        %3221 = vmatpush1.msra.mxu0 0.0
        %3222 = vmatprep.subr.mxu0 0.0
        %3223 = vmatpush1.msra.mxu0 0.0
        %3224 = vmatprep.subr.mxu0 0.0
        %3225 = vmatpush1.msra.mxu0 0.0
        %3226 = vmatprep.subr.mxu0 0.0
        %3227 = vmatpush1.msra.mxu0 0.0
        %3228 = vmatprep.subr.mxu0 0.0
        %3229 = vmatpush1.msra.mxu0 0.0
        %3230 = vmatprep.subr.mxu0 0.0
        %3231 = vmatpush1.msra.mxu0 0.0
        %3232 = vmatprep.subr.mxu0 0.0
        %3233 = vmatpush1.msra.mxu0 0.0
        %3234 = vmatprep.subr.mxu0 0.0
        %3235 = vmatpush1.msra.mxu0 0.0
        %3236 = vmatprep.subr.mxu0 0.0
        %3237 = vmatpush1.msra.mxu0 0.0
        %3238 = vmatprep.subr.mxu0 0.0
        %3239 = vmatpush1.msra.mxu0 0.0
        %3240 = vmatprep.subr.mxu0 0.0
        %3241 = vmatpush1.msra.mxu0 0.0
        %3242 = vmatprep.subr.mxu0 0.0
        %3243 = vmatpush1.msra.mxu0 0.0
        %3244 = vmatprep.subr.mxu0 0.0
        %3245 = vmatpush1.msra.mxu0 0.0
        %3246 = vmatprep.subr.mxu0 0.0
        %3247 = vmatpush1.msra.mxu0 0.0
        %3248 = vmatprep.subr.mxu0 0.0
        %3249 = vmatpush1.msra.mxu0 0.0
        %3250 = vmatprep.subr.mxu0 0.0
        %3251 = vmatpush1.msra.mxu0 0.0
        %3252 = vmatprep.subr.mxu0 0.0
        %3253 = vmatpush1.msra.mxu0 0.0
        %3254 = vmatprep.subr.mxu0 0.0
        %3255 = vmatpush1.msra.mxu0 0.0
        %3256 = vmatprep.subr.mxu0 0.0
        %3257 = vmatpush1.msra.mxu0 0.0
        %3258 = vmatprep.subr.mxu0 0.0
        %3259 = vmatpush1.msra.mxu0 0.0
        %3260 = vmatprep.subr.mxu0 0.0
        %3261 = vmatpush1.msra.mxu0 0.0
        %3262 = vmatprep.subr.mxu0 0.0
        %3263 = vmatpush1.msra.mxu0 0.0
        %3264 = vmatprep.subr.mxu0 0.0
        %3265 = vmatpush1.msra.mxu0 0.0
        %3266 = vmatprep.subr.mxu0 0.0
        %3267 = vmatpush1.msra.mxu0 0.0
        %3268 = vmatprep.subr.mxu0 0.0
        %3269 = vmatpush1.msra.mxu0 0.0
        %3270 = vmatprep.subr.mxu0 0.0
        %3271 = vmatpush1.msra.mxu0 0.0
        %3272 = vmatprep.mubr.f32.mxu0 0.0
        %3273 = vmatmul.mubr.f32.gmra.mrb[0].mxu0 %v3203
        %v3274 = vpop.f32.mrb[0].mxu0
        %v3275 = vadd.f32 0.0, %v3274
        %v3276 = vpop.f32.mrb[0].mxu0
        %3277 = vmatprep.mubr.f32.mxu0 0.0
        %3278 = vmatmul.mubr.f32.gmra.mrb[0].mxu0 %v3206
        %v3279 = vpop.f32.mrb[0].mxu0
        %v3280 = vadd.f32 0.0, %v3279
        %v3281 = vpop.f32.mrb[0].mxu0
        %3282 = vdwg.mxu0
        %v3283 = vadd.f32 %v2998, %v3275
        %v3284 = vadd.f32 %v2999, %v3280
        %3285 = vrot.lane.b32.xlu0 %v2270, 104
        %v3286 = vpop.permute.xlu0 %3285
        %3287 = vrot.lane.b32.xlu0 %v2275, 104
        %v3288 = vpop.permute.xlu0 %3287
        %3289 = vrot.lane.b32.xlu0 %v2351, 104
        %v3290 = vpop.permute.xlu0 %3289
        %3291 = vrot.lane.b32.xlu0 %v2356, 104
        %v3292 = vpop.permute.xlu0 %3291
        %v3293 = vsel %vm930, %v3286, 0
        %v3295 = vsel %vm930, %v3288, 0
        %v3297 = vsel %vm930, %v3290, 0
        %v3299 = vsel %vm930, %v3292, 0
        %3301 = vmatprep.subr.mxu0 0.0
        %3302 = vmatpush1.xpose.msra.mxu0 %v3297
        %3303 = vmatprep.subr.mxu0 0.0
        %3304 = vmatpush1.xpose.msra.mxu0 %v3299
        %3305 = vmatprep.subr.mxu0 0.0
        %3306 = vmatpush1.xpose.msra.mxu0 0.0
        %3307 = vmatprep.subr.mxu0 0.0
        %3308 = vmatpush1.xpose.msra.mxu0 0.0
        %3309 = vmatprep.subr.mxu0 0.0
        %3310 = vmatpush1.xpose.msra.mxu0 0.0
        %3311 = vmatprep.subr.mxu0 0.0
        %3312 = vmatpush1.xpose.msra.mxu0 0.0
        %3313 = vmatprep.subr.mxu0 0.0
        %3314 = vmatpush1.xpose.msra.mxu0 0.0
        %3315 = vmatprep.subr.mxu0 0.0
        %3316 = vmatpush1.xpose.msra.mxu0 0.0
        %3317 = vmatprep.subr.mxu0 0.0
        %3318 = vmatpush1.xpose.msra.mxu0 0.0
        %3319 = vmatprep.subr.mxu0 0.0
        %3320 = vmatpush1.xpose.msra.mxu0 0.0
        %3321 = vmatprep.subr.mxu0 0.0
        %3322 = vmatpush1.xpose.msra.mxu0 0.0
        %3323 = vmatprep.subr.mxu0 0.0
        %3324 = vmatpush1.xpose.msra.mxu0 0.0
        %3325 = vmatprep.subr.mxu0 0.0
        %3326 = vmatpush1.xpose.msra.mxu0 0.0
        %3327 = vmatprep.subr.mxu0 0.0
        %3328 = vmatpush1.xpose.msra.mxu0 0.0
        %3329 = vmatprep.subr.mxu0 0.0
        %3330 = vmatpush1.xpose.msra.mxu0 0.0
        %3331 = vmatprep.subr.mxu0 0.0
        %3332 = vmatpush1.xpose.msra.mxu0 0.0
        %3333 = vmatprep.subr.mxu0 0.0
        %3334 = vmatpush1.xpose.msra.mxu0 0.0
        %3335 = vmatprep.subr.mxu0 0.0
        %3336 = vmatpush1.xpose.msra.mxu0 0.0
        %3337 = vmatprep.subr.mxu0 0.0
        %3338 = vmatpush1.xpose.msra.mxu0 0.0
        %3339 = vmatprep.subr.mxu0 0.0
        %3340 = vmatpush1.xpose.msra.mxu0 0.0
        %3341 = vmatprep.subr.mxu0 0.0
        %3342 = vmatpush1.xpose.msra.mxu0 0.0
        %3343 = vmatprep.subr.mxu0 0.0
        %3344 = vmatpush1.xpose.msra.mxu0 0.0
        %3345 = vmatprep.subr.mxu0 0.0
        %3346 = vmatpush1.xpose.msra.mxu0 0.0
        %3347 = vmatprep.subr.mxu0 0.0
        %3348 = vmatpush1.xpose.msra.mxu0 0.0
        %3349 = vmatprep.subr.mxu0 0.0
        %3350 = vmatpush1.xpose.msra.mxu0 0.0
        %3351 = vmatprep.subr.mxu0 0.0
        %3352 = vmatpush1.xpose.msra.mxu0 0.0
        %3353 = vmatprep.subr.mxu0 0.0
        %3354 = vmatpush1.xpose.msra.mxu0 0.0
        %3355 = vmatprep.subr.mxu0 0.0
        %3356 = vmatpush1.xpose.msra.mxu0 0.0
        %3357 = vmatprep.subr.mxu0 0.0
        %3358 = vmatpush1.xpose.msra.mxu0 0.0
        %3359 = vmatprep.subr.mxu0 0.0
        %3360 = vmatpush1.xpose.msra.mxu0 0.0
        %3361 = vmatprep.subr.mxu0 0.0
        %3362 = vmatpush1.xpose.msra.mxu0 0.0
        %3363 = vmatprep.subr.mxu0 0.0
        %3364 = vmatpush1.xpose.msra.mxu0 0.0
        %3365 = vmatprep.mubr.f32.mxu0 0.0
        %3366 = vmatmul.mubr.f32.gmra.mrb[0].mxu0 %v3293
        %v3367 = vpop.f32.mrb[0].mxu0
        %v3368 = vadd.f32 0.0, %v3367
        %v3369 = vpop.f32.mrb[0].mxu0
        %3370 = vmatprep.mubr.f32.mxu0 0.0
        %3371 = vmatmul.mubr.f32.gmra.mrb[0].mxu0 %v3295
        %v3372 = vpop.f32.mrb[0].mxu0
        %v3373 = vadd.f32 0.0, %v3372
        %v3374 = vpop.f32.mrb[0].mxu0
        %3375 = vdwg.mxu0
        %v3376 = vmul.f32 %v3368, 0.35355338
        %v3377 = vmul.f32 %v3373, 0.35355338
        %v3378 = vsel %vm1020, %v3376, -inf
        %3379 = vmax.xlane.f32.xlu0 %v3378
        %v3380 = vpop.xlane.xlu0 %3379
        %v3381 = vsel %vm1020, %v3377, -inf
        %3382 = vmax.xlane.f32.xlu0 %v3381
        %v3383 = vpop.xlane.xlu0 %3382
        %v3384 = vsub.f32 %v3376, %v3380
        %v3385 = vsub.f32 %v3377, %v3383
        %v3386 = vmul.f32 %v3384, 1.442695
        %v3387 = vpow.pop %v3386
        %v3388 = vmul.f32 %v3385, 1.442695
        %v3389 = vpow.pop %v3388
        %3390 = vrot.lane.b32.xlu0 %v2351, 72
        %v3391 = vpop.permute.xlu0 %3390
        %3392 = vrot.lane.b32.xlu0 %v2356, 72
        %v3393 = vpop.permute.xlu0 %3392
        %v3397 = vsel %vm1020, %v3387, 0
        %v3400 = vsel %vm1020, %v3389, 0
        %3402 = vmatprep.subr.mxu0 0.0
        %3403 = vmatpush1.msra.mxu0 %v3391
        %3404 = vmatprep.subr.mxu0 0.0
        %3405 = vmatpush1.msra.mxu0 %v3393
        %3406 = vmatprep.subr.mxu0 0.0
        %3407 = vmatpush1.msra.mxu0 0.0
        %3408 = vmatprep.subr.mxu0 0.0
        %3409 = vmatpush1.msra.mxu0 0.0
        %3410 = vmatprep.subr.mxu0 0.0
        %3411 = vmatpush1.msra.mxu0 0.0
        %3412 = vmatprep.subr.mxu0 0.0
        %3413 = vmatpush1.msra.mxu0 0.0
        %3414 = vmatprep.subr.mxu0 0.0
        %3415 = vmatpush1.msra.mxu0 0.0
        %3416 = vmatprep.subr.mxu0 0.0
        %3417 = vmatpush1.msra.mxu0 0.0
        %3418 = vmatprep.subr.mxu0 0.0
        %3419 = vmatpush1.msra.mxu0 0.0
        %3420 = vmatprep.subr.mxu0 0.0
        %3421 = vmatpush1.msra.mxu0 0.0
        %3422 = vmatprep.subr.mxu0 0.0
        %3423 = vmatpush1.msra.mxu0 0.0
        %3424 = vmatprep.subr.mxu0 0.0
        %3425 = vmatpush1.msra.mxu0 0.0
        %3426 = vmatprep.subr.mxu0 0.0
        %3427 = vmatpush1.msra.mxu0 0.0
        %3428 = vmatprep.subr.mxu0 0.0
        %3429 = vmatpush1.msra.mxu0 0.0
        %3430 = vmatprep.subr.mxu0 0.0
        %3431 = vmatpush1.msra.mxu0 0.0
        %3432 = vmatprep.subr.mxu0 0.0
        %3433 = vmatpush1.msra.mxu0 0.0
        %3434 = vmatprep.subr.mxu0 0.0
        %3435 = vmatpush1.msra.mxu0 0.0
        %3436 = vmatprep.subr.mxu0 0.0
        %3437 = vmatpush1.msra.mxu0 0.0
        %3438 = vmatprep.subr.mxu0 0.0
        %3439 = vmatpush1.msra.mxu0 0.0
        %3440 = vmatprep.subr.mxu0 0.0
        %3441 = vmatpush1.msra.mxu0 0.0
        %3442 = vmatprep.subr.mxu0 0.0
        %3443 = vmatpush1.msra.mxu0 0.0
        %3444 = vmatprep.subr.mxu0 0.0
        %3445 = vmatpush1.msra.mxu0 0.0
        %3446 = vmatprep.subr.mxu0 0.0
        %3447 = vmatpush1.msra.mxu0 0.0
        %3448 = vmatprep.subr.mxu0 0.0
        %3449 = vmatpush1.msra.mxu0 0.0
        %3450 = vmatprep.subr.mxu0 0.0
        %3451 = vmatpush1.msra.mxu0 0.0
        %3452 = vmatprep.subr.mxu0 0.0
        %3453 = vmatpush1.msra.mxu0 0.0
        %3454 = vmatprep.subr.mxu0 0.0
        %3455 = vmatpush1.msra.mxu0 0.0
        %3456 = vmatprep.subr.mxu0 0.0
        %3457 = vmatpush1.msra.mxu0 0.0
        %3458 = vmatprep.subr.mxu0 0.0
        %3459 = vmatpush1.msra.mxu0 0.0
        %3460 = vmatprep.subr.mxu0 0.0
        %3461 = vmatpush1.msra.mxu0 0.0
        %3462 = vmatprep.subr.mxu0 0.0
        %3463 = vmatpush1.msra.mxu0 0.0
        %3464 = vmatprep.subr.mxu0 0.0
        %3465 = vmatpush1.msra.mxu0 0.0
        %3466 = vmatprep.mubr.f32.mxu0 0.0
        %3467 = vmatmul.mubr.f32.gmra.mrb[0].mxu0 %v3397
        %v3468 = vpop.f32.mrb[0].mxu0
        %v3469 = vadd.f32 0.0, %v3468
        %v3470 = vpop.f32.mrb[0].mxu0
        %3471 = vmatprep.mubr.f32.mxu0 0.0
        %3472 = vmatmul.mubr.f32.gmra.mrb[0].mxu0 %v3400
        %v3473 = vpop.f32.mrb[0].mxu0
        %v3474 = vadd.f32 0.0, %v3473
        %v3475 = vpop.f32.mrb[0].mxu0
        %3476 = vdwg.mxu0
        %v3477 = vsel %vm1020, %v3387, 0.0
        %3478 = vadd.xlane.f32.xlu0 %v3477
        %v3479 = vpop.xlane.xlu0 %3478
        %v3480 = vsel %vm1020, %v3389, 0.0
        %3481 = vadd.xlane.f32.xlu0 %v3480
        %v3482 = vpop.xlane.xlu0 %3481
        %v3483 = vrcp.pop %v3479
        %v3484 = vmul.f32 %v3469, %v3483
        %v3485 = vrcp.pop %v3482
        %v3486 = vmul.f32 %v3474, %v3485
        %v3488 = vsel %vm930, %v3484, 0
        %v3491 = vsel %vm930, %v3486, 0
        %3493 = vmatprep.subr.mxu0 0.0
        %3494 = vmatpush1.msra.mxu0 %v663
        %3495 = vmatprep.subr.mxu0 0.0
        %3496 = vmatpush1.msra.mxu0 0.0
        %3497 = vmatprep.subr.mxu0 0.0
        %3498 = vmatpush1.msra.mxu0 0.0
        %3499 = vmatprep.subr.mxu0 0.0
        %3500 = vmatpush1.msra.mxu0 0.0
        %3501 = vmatprep.subr.mxu0 0.0
        %3502 = vmatpush1.msra.mxu0 0.0
        %3503 = vmatprep.subr.mxu0 0.0
        %3504 = vmatpush1.msra.mxu0 0.0
        %3505 = vmatprep.subr.mxu0 0.0
        %3506 = vmatpush1.msra.mxu0 0.0
        %3507 = vmatprep.subr.mxu0 0.0
        %3508 = vmatpush1.msra.mxu0 0.0
        %3509 = vmatprep.subr.mxu0 0.0
        %3510 = vmatpush1.msra.mxu0 0.0
        %3511 = vmatprep.subr.mxu0 0.0
        %3512 = vmatpush1.msra.mxu0 0.0
        %3513 = vmatprep.subr.mxu0 0.0
        %3514 = vmatpush1.msra.mxu0 0.0
        %3515 = vmatprep.subr.mxu0 0.0
        %3516 = vmatpush1.msra.mxu0 0.0
        %3517 = vmatprep.subr.mxu0 0.0
        %3518 = vmatpush1.msra.mxu0 0.0
        %3519 = vmatprep.subr.mxu0 0.0
        %3520 = vmatpush1.msra.mxu0 0.0
        %3521 = vmatprep.subr.mxu0 0.0
        %3522 = vmatpush1.msra.mxu0 0.0
        %3523 = vmatprep.subr.mxu0 0.0
        %3524 = vmatpush1.msra.mxu0 0.0
        %3525 = vmatprep.subr.mxu0 0.0
        %3526 = vmatpush1.msra.mxu0 0.0
        %3527 = vmatprep.subr.mxu0 0.0
        %3528 = vmatpush1.msra.mxu0 0.0
        %3529 = vmatprep.subr.mxu0 0.0
        %3530 = vmatpush1.msra.mxu0 0.0
        %3531 = vmatprep.subr.mxu0 0.0
        %3532 = vmatpush1.msra.mxu0 0.0
        %3533 = vmatprep.subr.mxu0 0.0
        %3534 = vmatpush1.msra.mxu0 0.0
        %3535 = vmatprep.subr.mxu0 0.0
        %3536 = vmatpush1.msra.mxu0 0.0
        %3537 = vmatprep.subr.mxu0 0.0
        %3538 = vmatpush1.msra.mxu0 0.0
        %3539 = vmatprep.subr.mxu0 0.0
        %3540 = vmatpush1.msra.mxu0 0.0
        %3541 = vmatprep.subr.mxu0 0.0
        %3542 = vmatpush1.msra.mxu0 0.0
        %3543 = vmatprep.subr.mxu0 0.0
        %3544 = vmatpush1.msra.mxu0 0.0
        %3545 = vmatprep.subr.mxu0 0.0
        %3546 = vmatpush1.msra.mxu0 0.0
        %3547 = vmatprep.subr.mxu0 0.0
        %3548 = vmatpush1.msra.mxu0 0.0
        %3549 = vmatprep.subr.mxu0 0.0
        %3550 = vmatpush1.msra.mxu0 0.0
        %3551 = vmatprep.subr.mxu0 0.0
        %3552 = vmatpush1.msra.mxu0 0.0
        %3553 = vmatprep.subr.mxu0 0.0
        %3554 = vmatpush1.msra.mxu0 0.0
        %3555 = vmatprep.subr.mxu0 0.0
        %3556 = vmatpush1.msra.mxu0 0.0
        %3557 = vmatprep.mubr.f32.mxu0 0.0
        %3558 = vmatmul.mubr.f32.gmra.mrb[0].mxu0 %v3488
        %v3559 = vpop.f32.mrb[0].mxu0
        %v3560 = vadd.f32 0.0, %v3559
        %v3561 = vpop.f32.mrb[0].mxu0
        %3562 = vmatprep.mubr.f32.mxu0 0.0
        %3563 = vmatmul.mubr.f32.gmra.mrb[0].mxu0 %v3491
        %v3564 = vpop.f32.mrb[0].mxu0
        %v3565 = vadd.f32 0.0, %v3564
        %v3566 = vpop.f32.mrb[0].mxu0
        %3567 = vdwg.mxu0
        %v3568 = vadd.f32 %v3283, %v3560
        %v3569 = vadd.f32 %v3284, %v3565
        %v3570 = vsel %vm2068, %v3568, 0.0
        %v3571 = vsel %vm2068, %v3569, 0.0
        %v3572 = vadd.f32 %v3570, %v3571
        %v3573 = vrot.slane %v3572, 4
        %v3574 = vadd.f32 %v3572, %v3573
        %v3575 = vrot.slane %v3574, 2
        %v3576 = vadd.f32 %v3574, %v3575
        %v3577 = vrot.slane %v3576, 1
        %v3578 = vadd.f32 %v3576, %v3577
        %v3579 = vmul.f32 %v3578, %v2078
        %v3580 = vsub.f32 %v3568, %v3579
        %v3581 = vsub.f32 %v3569, %v3579
        %v3582 = vmul.f32 %v3580, %v3580
        %v3583 = vmul.f32 %v3581, %v3581
        %v3584 = vsel %vm2068, %v3582, 0.0
        %v3585 = vsel %vm2068, %v3583, 0.0
        %v3586 = vadd.f32 %v3584, %v3585
        %v3587 = vrot.slane %v3586, 4
        %v3588 = vadd.f32 %v3586, %v3587
        %v3589 = vrot.slane %v3588, 2
        %v3590 = vadd.f32 %v3588, %v3589
        %v3591 = vrot.slane %v3590, 1
        %v3592 = vadd.f32 %v3590, %v3591
        %v3593 = vmul.f32 %v3592, %v2078
        %v3594 = vadd.f32 %v3593, 1e-05
        %v3595 = vrsqrt.pop %v3594
        %v3596 = vmul.f32 %v3594, %v3595
        %vm3597 = vcmp.eq.f32.partialorder %v3594, inf
        %v3598 = vsel %vm3597, %v3594, %v3596
        %vm3599 = vcmp.eq.f32.partialorder %v3594, 0.0
        %v3600 = vand.u32 %v3594, 2147483648
        %v3601 = vsel %vm3599, %v3600, %v3598
        %v3602 = vrcp.pop %v3601
        %v3603 = vmul.f32 1.0, %v3602
        %v3604 = vmul.f32 %v3580, %v3603
        %v3605 = vmul.f32 %v3581, %v3603
        %v3606 = vmax.f32 %v3604, 0.0
        %v3607 = vmax.f32 %v3605, 0.0
        %v3609 = vsel %vm2068, %v3606, 0
        %v3612 = vsel %vm2068, %v3607, 0
        %3614 = vmatprep.subr.mxu0 0.0
        %3615 = vmatpush1.msra.mxu0 %v665
        %3616 = vmatprep.subr.mxu0 0.0
        %3617 = vmatpush1.msra.mxu0 %v666
        %3618 = vmatprep.subr.mxu0 0.0
        %3619 = vmatpush1.msra.mxu0 %v667
        %3620 = vmatprep.subr.mxu0 0.0
        %3621 = vmatpush1.msra.mxu0 %v668
        %3622 = vmatprep.subr.mxu0 0.0
        %3623 = vmatpush1.msra.mxu0 %v669
        %3624 = vmatprep.subr.mxu0 0.0
        %3625 = vmatpush1.msra.mxu0 %v670
        %3626 = vmatprep.subr.mxu0 0.0
        %3627 = vmatpush1.msra.mxu0 %v671
        %3628 = vmatprep.subr.mxu0 0.0
        %3629 = vmatpush1.msra.mxu0 %v672
        %3630 = vmatprep.subr.mxu0 0.0
        %3631 = vmatpush1.msra.mxu0 0.0
        %3632 = vmatprep.subr.mxu0 0.0
        %3633 = vmatpush1.msra.mxu0 0.0
        %3634 = vmatprep.subr.mxu0 0.0
        %3635 = vmatpush1.msra.mxu0 0.0
        %3636 = vmatprep.subr.mxu0 0.0
        %3637 = vmatpush1.msra.mxu0 0.0
        %3638 = vmatprep.subr.mxu0 0.0
        %3639 = vmatpush1.msra.mxu0 0.0
        %3640 = vmatprep.subr.mxu0 0.0
        %3641 = vmatpush1.msra.mxu0 0.0
        %3642 = vmatprep.subr.mxu0 0.0
        %3643 = vmatpush1.msra.mxu0 0.0
        %3644 = vmatprep.subr.mxu0 0.0
        %3645 = vmatpush1.msra.mxu0 0.0
        %3646 = vmatprep.subr.mxu0 0.0
        %3647 = vmatpush1.msra.mxu0 0.0
        %3648 = vmatprep.subr.mxu0 0.0
        %3649 = vmatpush1.msra.mxu0 0.0
        %3650 = vmatprep.subr.mxu0 0.0
        %3651 = vmatpush1.msra.mxu0 0.0
        %3652 = vmatprep.subr.mxu0 0.0
        %3653 = vmatpush1.msra.mxu0 0.0
        %3654 = vmatprep.subr.mxu0 0.0
        %3655 = vmatpush1.msra.mxu0 0.0
        %3656 = vmatprep.subr.mxu0 0.0
        %3657 = vmatpush1.msra.mxu0 0.0
        %3658 = vmatprep.subr.mxu0 0.0
        %3659 = vmatpush1.msra.mxu0 0.0
        %3660 = vmatprep.subr.mxu0 0.0
        %3661 = vmatpush1.msra.mxu0 0.0
        %3662 = vmatprep.subr.mxu0 0.0
        %3663 = vmatpush1.msra.mxu0 0.0
        %3664 = vmatprep.subr.mxu0 0.0
        %3665 = vmatpush1.msra.mxu0 0.0
        %3666 = vmatprep.subr.mxu0 0.0
        %3667 = vmatpush1.msra.mxu0 0.0
        %3668 = vmatprep.subr.mxu0 0.0
        %3669 = vmatpush1.msra.mxu0 0.0
        %3670 = vmatprep.subr.mxu0 0.0
        %3671 = vmatpush1.msra.mxu0 0.0
        %3672 = vmatprep.subr.mxu0 0.0
        %3673 = vmatpush1.msra.mxu0 0.0
        %3674 = vmatprep.subr.mxu0 0.0
        %3675 = vmatpush1.msra.mxu0 0.0
        %3676 = vmatprep.subr.mxu0 0.0
        %3677 = vmatpush1.msra.mxu0 0.0
        %3678 = vmatprep.mubr.f32.mxu0 0.0
        %3679 = vmatmul.mubr.f32.gmra.mrb[0].mxu0 %v3609
        %v3680 = vpop.f32.mrb[0].mxu0
        %v3681 = vadd.f32 %v2112, %v3680
        %v3682 = vpop.f32.mrb[0].mxu0
        %3683 = vmatprep.mubr.f32.mxu0 0.0
        %3684 = vmatmul.mubr.f32.gmra.mrb[0].mxu0 %v3612
        %v3685 = vpop.f32.mrb[0].mxu0
        %v3686 = vadd.f32 %v2112, %v3685
        %v3687 = vpop.f32.mrb[0].mxu0
        %3688 = vdwg.mxu0
        %v3689 = vadd.f32 %v627, %v3681
        %v3690 = vadd.f32 %v628, %v3686
        %3691 = vst.msk [vmem:[%s611] sm:$0xff] %vm680, %v2195
        %3692 = vst.msk [vmem:[%s611 + $0x8] sm:$0xff] %vm680, %v2196
        %s3693 = scalar_lea.vmem %s611, 16
        %3694 = vst.msk [vmem:[%s3693] sm:$0xff] %vm680, %v3689
        %3695 = vst.msk [vmem:[%s3693 + $0x8] sm:$0xff] %vm680, %v3690
        %p3696 = scmp.lt.s32.totalorder %s41, 1
        %s3697 = scalar_select %p3696, %s41, 1
        %s3698 = smul.addr %s3697, 4
        %s3699 = smul.addr %s3698, 8
        %s3700 = scalar_lea.vmem %s11, %s3699
        // Predicated region
        $region81: #{_lambda_.1} parent=59 // pred_check
          %p3701 = pneg %p327
        $region82: #{_lambda_.1} parent=59 // pred_check_branch
          %3703 = sbr.rel (%p3701) target = $region84
        $region83: #{_lambda_.1} parent=59 // pred_region
          _
        $region84: #{_lambda_.1} parent=59 // pred_fallthru
          _
      $region60: #{_lambda_.1} parent=5 // pred_fallthru
        _
      %p3704 = scmp.le.s32.totalorder 2, %s32
      // Predicated region
      $region85: #{_lambda_.1} parent=5 // pred_check
        %p3705 = pneg %p3704
      $region86: #{_lambda_.1} parent=5 // pred_check_branch
        %3707 = sbr.rel (%p3705) target = $region88
      $region87: #{_lambda_.1} parent=5 // pred_region
        %s3708 = ssub.s32 %s32, 2
        // Predicated region
        $region89: #{_lambda_.1} parent=87 // pred_check
          %p3709 = pneg %p333
        $region90: #{_lambda_.1} parent=87 // pred_check_branch
          %3711 = sbr.rel (%p3709) target = $region92
        $region91: #{_lambda_.1} parent=87 // pred_region
          %p3712 = scmp.lt.s32.totalorder %s43, 1
          %s3713 = scalar_select %p3712, %s43, 1
          %s3714 = smul.addr %s3713, 4
          %s3715 = smul.addr %s3714, 8
          %s3716 = scalar_lea.vmem %s11, %s3715
        $region92: #{_lambda_.1} parent=87 // pred_fallthru
          _
      $region88: #{_lambda_.1} parent=5 // pred_fallthru
        _
    $region6: #{_lambda_.1} parent=1 // loop_footer
      %s36 = sadd.s32 1, %s32
    $region7: #{_lambda_.1} parent=1 // loop_footer_branch
      %31 = sbr.rel target = $region3
    $region8: #{_lambda_.1} parent=1 // loop_exit
      _
    %3717 = vsyncpa [#allocation5], 1
    %s3718 = scalar_lea.sflag [#allocation5], 1
    %3719 = vsyncpa %s3718, 1
    %3720 = vsyncpa [#allocation7], 1
    %s3721 = scalar_lea.sflag [#allocation7], 1
    %3722 = vsyncpa %s3721, 1
    %3723 = vsyncpa [#allocation10], 1
    %s3724 = scalar_lea.sflag [#allocation10], 1
    %3725 = vsyncpa %s3724, 1

</llo_original>
